<compile_context>
chip_gen: v6e
topology: v6e:2x2x1
jax: 0.10.0
libtpu: 0.0.40
codegen_flags: <defaults>
</compile_context>

<pallas_src>
import numpy as np
import jax
import jax.numpy as jnp
from jax import lax
from jax.experimental import pallas as pl
from jax.experimental.pallas import tpu as pltpu


# ----------------------------- fused Pallas kernel ----------------------------- #

def _make_encoder_kernel(layer_dims):
    """layer_dims: tuple of 10 (cin, cout) pairs (2 conv layers per block, 5 blocks)."""
    n_layers = len(layer_dims)

    def kernel(*refs):
        x_ref = refs[0]                                    # (Cin0, L0) channels-first
        w_refs = refs[1:1 + n_layers]                      # (3, Cout, Cin) per-tap, BN-folded
        shift_ref = refs[1 + n_layers]                     # (C_max, n_layers) packed shifts
        o_refs = refs[2 + n_layers:]                       # x1..x5 blocks (Cout_i, L_i)

        def conv_bn_relu(x, w_ref, li, mask_first, mask_last):
            # x: (Cin, L) channels-first activation for one batch element.
            cin, cout = layer_dims[li]
            Lc = x.shape[1]
            # padding=1 shifted taps via XLU lane rolls + edge masking (no pad copy).
            x_prev = jnp.where(mask_first, 0.0, pltpu.roll(x, 1, axis=1))       # x[:, l-1]
            x_next = jnp.where(mask_last, 0.0, pltpu.roll(x, Lc - 1, axis=1))   # x[:, l+1]
            if cin == 1:
                # Degenerate K=1 contraction: VPU broadcast multiply-add (skip MXU).
                y = w_ref[0] * x_prev + w_ref[1] * x + w_ref[2] * x_next        # (Cout, L)
            else:
                # Three per-tap MXU matmuls accumulated in f32 (no lane-concat im2col).
                y = jnp.dot(w_ref[1], x, preferred_element_type=jnp.float32)
                y = y + jnp.dot(w_ref[0], x_prev, preferred_element_type=jnp.float32)
                y = y + jnp.dot(w_ref[2], x_next, preferred_element_type=jnp.float32)
            shift = shift_ref[0:cout, li:li + 1]           # (Cout, 1) bias + BN shift
            return jnp.maximum(y + shift, 0.0)             # ReLU

        x = x_ref[...]                                     # (Cin0, L0)
        li = 0
        for blk in range(5):
            Lc = x.shape[1]
            # Edge masks hoisted once per block (shared by both conv layers).
            col = lax.broadcasted_iota(jnp.int32, (1, Lc), 1)
            mask_first = col == 0
            mask_last = col == (Lc - 1)
            for _ in range(2):
                x = conv_bn_relu(x, w_refs[li], li, mask_first, mask_last)
                li += 1
            o_refs[blk][...] = x                           # lane-dense store of x{blk+1}
            if blk < 4:
                # Fused MaxPool1d(k=2,s=2) from the LIVE value (no output-ref re-read):
                # pairwise max via lane roll, then exact even-lane compaction matmul.
                rows = lax.broadcasted_iota(jnp.int32, (Lc, Lc // 2), 0)
                cols = lax.broadcasted_iota(jnp.int32, (Lc, Lc // 2), 1)
                sel = jnp.where(rows == 2 * cols, 1.0, 0.0)          # (L, L//2) 0/1 selector
                m = jnp.maximum(x, pltpu.roll(x, Lc - 1, axis=1))    # max(x[l], x[l+1])
                x = jnp.dot(m, sel, preferred_element_type=jnp.float32)  # (Cout, L//2)

    return kernel


# ------------------------------- JAX wrapper ----------------------------------- #

def _fold_layer(p, eps=1e-5):
    """Fold conv bias + eval-mode BN into per-tap weights (3, Cout, Cin) and a shift (Cout,)."""
    scale = p['gamma'] / jnp.sqrt(p['var'] + eps)                       # (Cout,)
    w_taps = jnp.transpose(p['w'] * scale[:, None, None], (2, 0, 1))    # (3, Cout, Cin)
    shift = p['beta'] + (p['b'] - p['mean']) * scale                    # (Cout,)
    return w_taps, shift


def encoder_forward(blocks, x_ncl, eps=1e-5):
    """Full fused encoder. x_ncl: (N, C, L) PyTorch layout. Returns (x1..x5) in NCL."""
    N, cin0, L = x_ncl.shape
    assert L % 16 == 0, "L must be divisible by 16 (four MaxPool(k=2,s=2) stages)"

    layers = [p for blk in blocks for p in blk]                         # 10 conv layers
    layer_dims = tuple((p['w'].shape[1], p['w'].shape[0]) for p in layers)
    n_layers = len(layers)
    folded = [_fold_layer(p, eps) for p in layers]
    w_list = [f[0] for f in folded]

    # Pack all 10 folded shifts into one (C_max, n_layers) table.
    c_max = max(d[1] for d in layer_dims)
    shifts = jnp.zeros((c_max, n_layers), jnp.float32)
    for li, (_, s) in enumerate(folded):
        shifts = shifts.at[:s.shape[0], li].set(s)

    Ls = [L, L // 2, L // 4, L // 8, L // 16]
    Couts = [blocks[i][1]['w'].shape[0] for i in range(5)]

    out_shape = tuple(jax.ShapeDtypeStruct((N, Couts[i], Ls[i]), jnp.float32)
                      for i in range(5))
    in_specs = [pl.BlockSpec((None, cin0, L), lambda n: (n, 0, 0))]
    in_specs += [pl.BlockSpec(w.shape, lambda n: (0, 0, 0)) for w in w_list]
    in_specs += [pl.BlockSpec(shifts.shape, lambda n: (0, 0))]
    out_specs = tuple(pl.BlockSpec((None, Couts[i], Ls[i]), lambda n: (n, 0, 0))
                      for i in range(5))

    outs = pl.pallas_call(
        _make_encoder_kernel(layer_dims),
        grid=(N,),
        out_shape=out_shape,
        in_specs=in_specs,
        out_specs=out_specs,
        compiler_params=pltpu.CompilerParams(dimension_semantics=("parallel",)),
    )(x_ncl, *w_list, shifts)

    return outs                                                         # already NCL


# --------------------------- parameter utilities ------------------------------- #

def init_conv_block(key, ch_in, ch_out):
    """Two (Conv1d k=3 + BN + ReLU) layers; BN in eval mode with PyTorch defaults."""
    params = []
    cin = ch_in
    for _ in range(2):
        key, kw, kb = jax.random.split(key, 3)
        fan_in = cin * 3
        bound = 1.0 / np.sqrt(fan_in)
        w = jax.random.uniform(kw, (ch_out, cin, 3), jnp.float32, -bound, bound)
        b = jax.random.uniform(kb, (ch_out,), jnp.float32, -bound, bound)
        params.append(dict(
            w=w, b=b,
            gamma=jnp.ones((ch_out,), jnp.float32),
            beta=jnp.zeros((ch_out,), jnp.float32),
            mean=jnp.zeros((ch_out,), jnp.float32),
            var=jnp.ones((ch_out,), jnp.float32),
        ))
        cin = ch_out
    return params


def init_encoder(key, filters, n_channels=1):
    chs = [n_channels] + list(filters)
    blocks = []
    for i in range(5):
        key, sub = jax.random.split(key)
        blocks.append(init_conv_block(sub, chs[i], chs[i + 1]))
    return blocks


# ------------------------- pure-JAX reference model ---------------------------- #

def _ref_conv_bn_relu(x_ncl, w, b, gamma, beta, mean, var, eps=1e-5):
    y = lax.conv_general_dilated(
        x_ncl, w, window_strides=(1,), padding=((1, 1),),
        dimension_numbers=('NCH', 'OIH', 'NCH'),
        precision=lax.Precision.HIGHEST)
    y = y + b[None, :, None]
    y = (y - mean[None, :, None]) / jnp.sqrt(var[None, :, None] + eps)
    y = y * gamma[None, :, None] + beta[None, :, None]
    return jnp.maximum(y, 0.0)


def _ref_maxpool(x_ncl):
    N, C, L = x_ncl.shape
    return x_ncl.reshape(N, C, L // 2, 2).max(axis=-1)


def ref_encoder_forward(blocks, x_ncl):
    def blk(params, x):
        for p in params:
            x = _ref_conv_bn_relu(x, p['w'], p['b'], p['gamma'], p['beta'],
                                  p['mean'], p['var'])
        return x
    x1 = blk(blocks[0], x_ncl)
    x2 = blk(blocks[1], _ref_maxpool(x1))
    x3 = blk(blocks[2], _ref_maxpool(x2))
    x4 = blk(blocks[3], _ref_maxpool(x3))
    x5 = blk(blocks[4], _ref_maxpool(x4))
    return (x1, x2, x3, x4, x5)


# ------------------------------------ main -------------------------------------- #

if __name__ == "__main__":
    key = jax.random.PRNGKey(0)
    kparams, kx = jax.random.split(key)

    filters = [8, 16, 32, 32, 64]
    n_channels = 1
    N, L = 2, 64                                   # L divisible by 2**4 for 4 maxpools

    blocks = init_encoder(kparams, filters, n_channels)
    x = jax.random.normal(kx, (N, n_channels, L), jnp.float32)   # PyTorch NCL input

    fwd = jax.jit(encoder_forward)
    outs = jax.block_until_ready(fwd(blocks, x))

    refs = jax.block_until_ready(ref_encoder_forward(blocks, x))
    for o, r in zip(outs, refs):
        assert o.shape == r.shape, (o.shape, r.shape)
        np.testing.assert_allclose(np.asarray(o), np.asarray(r), rtol=5e-3, atol=5e-3)

    print("KERNEL_OK")
</pallas_src>

<mosaic_0001>
module attributes {stable_mosaic.version = 11 : i64} {
  func.func @kernel(%arg0: i32, %arg1: memref<1x1x64xf32, #tpu.memory_space<vmem>>, %arg2: memref<3x8x1xf32, #tpu.memory_space<vmem>>, %arg3: memref<3x8x8xf32, #tpu.memory_space<vmem>>, %arg4: memref<3x16x8xf32, #tpu.memory_space<vmem>>, %arg5: memref<3x16x16xf32, #tpu.memory_space<vmem>>, %arg6: memref<3x32x16xf32, #tpu.memory_space<vmem>>, %arg7: memref<3x32x32xf32, #tpu.memory_space<vmem>>, %arg8: memref<3x32x32xf32, #tpu.memory_space<vmem>>, %arg9: memref<3x32x32xf32, #tpu.memory_space<vmem>>, %arg10: memref<3x64x32xf32, #tpu.memory_space<vmem>>, %arg11: memref<3x64x64xf32, #tpu.memory_space<vmem>>, %arg12: memref<64x10xf32, #tpu.memory_space<vmem>>, %arg13: memref<1x8x64xf32, #tpu.memory_space<vmem>>, %arg14: memref<1x16x32xf32, #tpu.memory_space<vmem>>, %arg15: memref<1x32x16xf32, #tpu.memory_space<vmem>>, %arg16: memref<1x32x8xf32, #tpu.memory_space<vmem>>, %arg17: memref<1x64x4xf32, #tpu.memory_space<vmem>>) attributes {dimension_semantics = [#tpu.dimension_semantics<parallel>], iteration_bounds = array<i64: 2>, scalar_prefetch = 0 : i64, scratch_operands = 0 : i64, tpu.core_type = #tpu.core_type<tc>, window_params = [{transform_indices = @transform_0, window_bounds = array<i64: 1, 1, 64>}, {pipeline_mode = #tpu.pipeline_mode<synchronous>, transform_indices = @transform_1, window_bounds = array<i64: 3, 8, 1>}, {pipeline_mode = #tpu.pipeline_mode<synchronous>, transform_indices = @transform_2, window_bounds = array<i64: 3, 8, 8>}, {pipeline_mode = #tpu.pipeline_mode<synchronous>, transform_indices = @transform_3, window_bounds = array<i64: 3, 16, 8>}, {pipeline_mode = #tpu.pipeline_mode<synchronous>, transform_indices = @transform_4, window_bounds = array<i64: 3, 16, 16>}, {pipeline_mode = #tpu.pipeline_mode<synchronous>, transform_indices = @transform_5, window_bounds = array<i64: 3, 32, 16>}, {pipeline_mode = #tpu.pipeline_mode<synchronous>, transform_indices = @transform_6, window_bounds = array<i64: 3, 32, 32>}, {pipeline_mode = #tpu.pipeline_mode<synchronous>, transform_indices = @transform_7, window_bounds = array<i64: 3, 32, 32>}, {pipeline_mode = #tpu.pipeline_mode<synchronous>, transform_indices = @transform_8, window_bounds = array<i64: 3, 32, 32>}, {pipeline_mode = #tpu.pipeline_mode<synchronous>, transform_indices = @transform_9, window_bounds = array<i64: 3, 64, 32>}, {pipeline_mode = #tpu.pipeline_mode<synchronous>, transform_indices = @transform_10, window_bounds = array<i64: 3, 64, 64>}, {pipeline_mode = #tpu.pipeline_mode<synchronous>, transform_indices = @transform_11, window_bounds = array<i64: 64, 10>}, {transform_indices = @transform_12, window_bounds = array<i64: 1, 8, 64>}, {transform_indices = @transform_13, window_bounds = array<i64: 1, 16, 32>}, {transform_indices = @transform_14, window_bounds = array<i64: 1, 32, 16>}, {transform_indices = @transform_15, window_bounds = array<i64: 1, 32, 8>}, {transform_indices = @transform_16, window_bounds = array<i64: 1, 64, 4>}]} {
    %c0 = arith.constant 0 : index
    %c0_0 = arith.constant 0 : index
    %c0_1 = arith.constant 0 : index
    %0 = vector.load %arg1[%c0, %c0_0, %c0_1] : memref<1x1x64xf32, #tpu.memory_space<vmem>>, vector<1x1x64xf32>
    %1 = vector.shape_cast %0 : vector<1x1x64xf32> to vector<1x64xf32>
    %2 = tpu.iota {dimensions = array<i32: 1>} : vector<1x64xi32>
    %c0_i32 = arith.constant 0 : i32
    %3 = vector.broadcast %c0_i32 : i32 to vector<1x64xi32>
    %4 = arith.cmpi eq, %2, %3 : vector<1x64xi32>
    %c63_i32 = arith.constant 63 : i32
    %5 = vector.broadcast %c63_i32 : i32 to vector<1x64xi32>
    %6 = arith.cmpi eq, %2, %5 : vector<1x64xi32>
    %c1_i32 = arith.constant 1 : i32
    %7 = tpu.dynamic_rotate %1 by %c1_i32 dim 1 : vector<1x64xf32>, i32 -> vector<1x64xf32>
    %cst = arith.constant 0.000000e+00 : f32
    %8 = vector.broadcast %cst : f32 to vector<1x64xf32>
    %9 = arith.select %4, %8, %7 : vector<1x64xi1>, vector<1x64xf32>
    %c63_i32_2 = arith.constant 63 : i32
    %10 = tpu.dynamic_rotate %1 by %c63_i32_2 dim 1 : vector<1x64xf32>, i32 -> vector<1x64xf32>
    %cst_3 = arith.constant 0.000000e+00 : f32
    %11 = vector.broadcast %cst_3 : f32 to vector<1x64xf32>
    %12 = arith.select %6, %11, %10 : vector<1x64xi1>, vector<1x64xf32>
    %c0_4 = arith.constant 0 : index
    %c0_5 = arith.constant 0 : index
    %c0_6 = arith.constant 0 : index
    %13 = vector.load %arg2[%c0_4, %c0_5, %c0_6] : memref<3x8x1xf32, #tpu.memory_space<vmem>>, vector<1x8x1xf32>
    %14 = vector.shape_cast %13 : vector<1x8x1xf32> to vector<8x1xf32>
    %15 = vector.broadcast %14 : vector<8x1xf32> to vector<8x64xf32>
    %16 = vector.broadcast %9 : vector<1x64xf32> to vector<8x64xf32>
    %17 = arith.mulf %15, %16 : vector<8x64xf32>
    %c1 = arith.constant 1 : index
    %c0_7 = arith.constant 0 : index
    %c0_8 = arith.constant 0 : index
    %18 = vector.load %arg2[%c1, %c0_7, %c0_8] : memref<3x8x1xf32, #tpu.memory_space<vmem>>, vector<1x8x1xf32>
    %19 = vector.shape_cast %18 : vector<1x8x1xf32> to vector<8x1xf32>
    %20 = vector.broadcast %19 : vector<8x1xf32> to vector<8x64xf32>
    %21 = vector.broadcast %1 : vector<1x64xf32> to vector<8x64xf32>
    %22 = arith.mulf %20, %21 : vector<8x64xf32>
    %23 = arith.addf %17, %22 : vector<8x64xf32>
    %c2 = arith.constant 2 : index
    %c0_9 = arith.constant 0 : index
    %c0_10 = arith.constant 0 : index
    %24 = vector.load %arg2[%c2, %c0_9, %c0_10] : memref<3x8x1xf32, #tpu.memory_space<vmem>>, vector<1x8x1xf32>
    %25 = vector.shape_cast %24 : vector<1x8x1xf32> to vector<8x1xf32>
    %26 = vector.broadcast %25 : vector<8x1xf32> to vector<8x64xf32>
    %27 = vector.broadcast %12 : vector<1x64xf32> to vector<8x64xf32>
    %28 = arith.mulf %26, %27 : vector<8x64xf32>
    %29 = arith.addf %23, %28 : vector<8x64xf32>
    %c0_11 = arith.constant 0 : index
    %c0_12 = arith.constant 0 : index
    %30 = vector.load %arg12[%c0_11, %c0_12] : memref<64x10xf32, #tpu.memory_space<vmem>>, vector<8x1xf32>
    %31 = vector.broadcast %30 : vector<8x1xf32> to vector<8x64xf32>
    %32 = arith.addf %29, %31 : vector<8x64xf32>
    %cst_13 = arith.constant 0.000000e+00 : f32
    %33 = vector.broadcast %cst_13 : f32 to vector<8x64xf32>
    %34 = arith.maximumf %32, %33 : vector<8x64xf32>
    %c1_i32_14 = arith.constant 1 : i32
    %35 = tpu.dynamic_rotate %34 by %c1_i32_14 dim 1 : vector<8x64xf32>, i32 -> vector<8x64xf32>
    %cst_15 = arith.constant 0.000000e+00 : f32
    %36 = vector.shape_cast %4 : vector<1x64xi1> to vector<1x64xi1>
    %37 = vector.broadcast %36 : vector<1x64xi1> to vector<8x64xi1>
    %38 = vector.broadcast %cst_15 : f32 to vector<8x64xf32>
    %39 = arith.select %37, %38, %35 : vector<8x64xi1>, vector<8x64xf32>
    %c63_i32_16 = arith.constant 63 : i32
    %40 = tpu.dynamic_rotate %34 by %c63_i32_16 dim 1 : vector<8x64xf32>, i32 -> vector<8x64xf32>
    %cst_17 = arith.constant 0.000000e+00 : f32
    %41 = vector.shape_cast %6 : vector<1x64xi1> to vector<1x64xi1>
    %42 = vector.broadcast %41 : vector<1x64xi1> to vector<8x64xi1>
    %43 = vector.broadcast %cst_17 : f32 to vector<8x64xf32>
    %44 = arith.select %42, %43, %40 : vector<8x64xi1>, vector<8x64xf32>
    %c1_18 = arith.constant 1 : index
    %c0_19 = arith.constant 0 : index
    %c0_20 = arith.constant 0 : index
    %45 = vector.load %arg3[%c1_18, %c0_19, %c0_20] : memref<3x8x8xf32, #tpu.memory_space<vmem>>, vector<1x8x8xf32>
    %46 = vector.shape_cast %45 : vector<1x8x8xf32> to vector<8x8xf32>
    %cst_21 = arith.constant dense<0.000000e+00> : vector<8x64xf32>
    %47 = tpu.matmul %46, %34, %cst_21 {dimension_numbers = #tpu.dot_dimension_numbers<[1], [0], [0], [1], [0, 0, 1, 1], [], []>} : vector<8x8xf32>, vector<8x64xf32>, vector<8x64xf32> -> vector<8x64xf32>
    %c0_22 = arith.constant 0 : index
    %c0_23 = arith.constant 0 : index
    %c0_24 = arith.constant 0 : index
    %48 = vector.load %arg3[%c0_22, %c0_23, %c0_24] : memref<3x8x8xf32, #tpu.memory_space<vmem>>, vector<1x8x8xf32>
    %49 = vector.shape_cast %48 : vector<1x8x8xf32> to vector<8x8xf32>
    %cst_25 = arith.constant dense<0.000000e+00> : vector<8x64xf32>
    %50 = tpu.matmul %49, %39, %cst_25 {dimension_numbers = #tpu.dot_dimension_numbers<[1], [0], [0], [1], [0, 0, 1, 1], [], []>} : vector<8x8xf32>, vector<8x64xf32>, vector<8x64xf32> -> vector<8x64xf32>
    %51 = arith.addf %47, %50 : vector<8x64xf32>
    %c2_26 = arith.constant 2 : index
    %c0_27 = arith.constant 0 : index
    %c0_28 = arith.constant 0 : index
    %52 = vector.load %arg3[%c2_26, %c0_27, %c0_28] : memref<3x8x8xf32, #tpu.memory_space<vmem>>, vector<1x8x8xf32>
    %53 = vector.shape_cast %52 : vector<1x8x8xf32> to vector<8x8xf32>
    %cst_29 = arith.constant dense<0.000000e+00> : vector<8x64xf32>
    %54 = tpu.matmul %53, %44, %cst_29 {dimension_numbers = #tpu.dot_dimension_numbers<[1], [0], [0], [1], [0, 0, 1, 1], [], []>} : vector<8x8xf32>, vector<8x64xf32>, vector<8x64xf32> -> vector<8x64xf32>
    %55 = arith.addf %51, %54 : vector<8x64xf32>
    %c0_30 = arith.constant 0 : index
    %c1_31 = arith.constant 1 : index
    %56 = vector.load %arg12[%c0_30, %c1_31] : memref<64x10xf32, #tpu.memory_space<vmem>>, vector<8x1xf32>
    %57 = vector.broadcast %56 : vector<8x1xf32> to vector<8x64xf32>
    %58 = arith.addf %55, %57 : vector<8x64xf32>
    %cst_32 = arith.constant 0.000000e+00 : f32
    %59 = vector.broadcast %cst_32 : f32 to vector<8x64xf32>
    %60 = arith.maximumf %58, %59 : vector<8x64xf32>
    %c0_33 = arith.constant 0 : index
    %c0_34 = arith.constant 0 : index
    %c0_35 = arith.constant 0 : index
    %61 = vector.load %arg13[%c0_33, %c0_34, %c0_35] : memref<1x8x64xf32, #tpu.memory_space<vmem>>, vector<1x8x64xf32>
    %62 = vector.shape_cast %61 : vector<1x8x64xf32> to vector<8x64xf32>
    %63 = vector.shape_cast %60 : vector<8x64xf32> to vector<1x8x64xf32>
    tpu.vector_store %arg13[%c0_33, %c0_34, %c0_35], %63 {strides = array<i32>} : memref<1x8x64xf32, #tpu.memory_space<vmem>>, vector<1x8x64xf32>,
    %64 = tpu.iota {dimensions = array<i32: 0>} : vector<64x32xi32>
    %65 = tpu.iota {dimensions = array<i32: 1>} : vector<64x32xi32>
    %c2_i32 = arith.constant 2 : i32
    %66 = vector.broadcast %c2_i32 : i32 to vector<64x32xi32>
    %67 = arith.muli %66, %65 : vector<64x32xi32>
    %68 = arith.cmpi eq, %64, %67 : vector<64x32xi32>
    %cst_36 = arith.constant 1.000000e+00 : f32
    %cst_37 = arith.constant 0.000000e+00 : f32
    %69 = vector.broadcast %cst_36 : f32 to vector<64x32xf32>
    %70 = vector.broadcast %cst_37 : f32 to vector<64x32xf32>
    %71 = arith.select %68, %69, %70 : vector<64x32xi1>, vector<64x32xf32>
    %c63_i32_38 = arith.constant 63 : i32
    %72 = tpu.dynamic_rotate %60 by %c63_i32_38 dim 1 : vector<8x64xf32>, i32 -> vector<8x64xf32>
    %73 = arith.maximumf %60, %72 : vector<8x64xf32>
    %cst_39 = arith.constant dense<0.000000e+00> : vector<8x32xf32>
    %74 = tpu.matmul %73, %71, %cst_39 {dimension_numbers = #tpu.dot_dimension_numbers<[1], [0], [0], [1], [0, 0, 1, 1], [], []>} : vector<8x64xf32>, vector<64x32xf32>, vector<8x32xf32> -> vector<8x32xf32>
    %75 = tpu.iota {dimensions = array<i32: 1>} : vector<1x32xi32>
    %c0_i32_40 = arith.constant 0 : i32
    %76 = vector.broadcast %c0_i32_40 : i32 to vector<1x32xi32>
    %77 = arith.cmpi eq, %75, %76 : vector<1x32xi32>
    %c31_i32 = arith.constant 31 : i32
    %78 = vector.broadcast %c31_i32 : i32 to vector<1x32xi32>
    %79 = arith.cmpi eq, %75, %78 : vector<1x32xi32>
    %c1_i32_41 = arith.constant 1 : i32
    %80 = tpu.dynamic_rotate %74 by %c1_i32_41 dim 1 : vector<8x32xf32>, i32 -> vector<8x32xf32>
    %cst_42 = arith.constant 0.000000e+00 : f32
    %81 = vector.shape_cast %77 : vector<1x32xi1> to vector<1x32xi1>
    %82 = vector.broadcast %81 : vector<1x32xi1> to vector<8x32xi1>
    %83 = vector.broadcast %cst_42 : f32 to vector<8x32xf32>
    %84 = arith.select %82, %83, %80 : vector<8x32xi1>, vector<8x32xf32>
    %c31_i32_43 = arith.constant 31 : i32
    %85 = tpu.dynamic_rotate %74 by %c31_i32_43 dim 1 : vector<8x32xf32>, i32 -> vector<8x32xf32>
    %cst_44 = arith.constant 0.000000e+00 : f32
    %86 = vector.shape_cast %79 : vector<1x32xi1> to vector<1x32xi1>
    %87 = vector.broadcast %86 : vector<1x32xi1> to vector<8x32xi1>
    %88 = vector.broadcast %cst_44 : f32 to vector<8x32xf32>
    %89 = arith.select %87, %88, %85 : vector<8x32xi1>, vector<8x32xf32>
    %c1_45 = arith.constant 1 : index
    %c0_46 = arith.constant 0 : index
    %c0_47 = arith.constant 0 : index
    %90 = vector.load %arg4[%c1_45, %c0_46, %c0_47] : memref<3x16x8xf32, #tpu.memory_space<vmem>>, vector<1x16x8xf32>
    %91 = vector.shape_cast %90 : vector<1x16x8xf32> to vector<16x8xf32>
    %cst_48 = arith.constant dense<0.000000e+00> : vector<16x32xf32>
    %92 = tpu.matmul %91, %74, %cst_48 {dimension_numbers = #tpu.dot_dimension_numbers<[1], [0], [0], [1], [0, 0, 1, 1], [], []>} : vector<16x8xf32>, vector<8x32xf32>, vector<16x32xf32> -> vector<16x32xf32>
    %c0_49 = arith.constant 0 : index
    %c0_50 = arith.constant 0 : index
    %c0_51 = arith.constant 0 : index
    %93 = vector.load %arg4[%c0_49, %c0_50, %c0_51] : memref<3x16x8xf32, #tpu.memory_space<vmem>>, vector<1x16x8xf32>
    %94 = vector.shape_cast %93 : vector<1x16x8xf32> to vector<16x8xf32>
    %cst_52 = arith.constant dense<0.000000e+00> : vector<16x32xf32>
    %95 = tpu.matmul %94, %84, %cst_52 {dimension_numbers = #tpu.dot_dimension_numbers<[1], [0], [0], [1], [0, 0, 1, 1], [], []>} : vector<16x8xf32>, vector<8x32xf32>, vector<16x32xf32> -> vector<16x32xf32>
    %96 = arith.addf %92, %95 : vector<16x32xf32>
    %c2_53 = arith.constant 2 : index
    %c0_54 = arith.constant 0 : index
    %c0_55 = arith.constant 0 : index
    %97 = vector.load %arg4[%c2_53, %c0_54, %c0_55] : memref<3x16x8xf32, #tpu.memory_space<vmem>>, vector<1x16x8xf32>
    %98 = vector.shape_cast %97 : vector<1x16x8xf32> to vector<16x8xf32>
    %cst_56 = arith.constant dense<0.000000e+00> : vector<16x32xf32>
    %99 = tpu.matmul %98, %89, %cst_56 {dimension_numbers = #tpu.dot_dimension_numbers<[1], [0], [0], [1], [0, 0, 1, 1], [], []>} : vector<16x8xf32>, vector<8x32xf32>, vector<16x32xf32> -> vector<16x32xf32>
    %100 = arith.addf %96, %99 : vector<16x32xf32>
    %c0_57 = arith.constant 0 : index
    %c2_58 = arith.constant 2 : index
    %101 = vector.load %arg12[%c0_57, %c2_58] : memref<64x10xf32, #tpu.memory_space<vmem>>, vector<16x1xf32>
    %102 = vector.broadcast %101 : vector<16x1xf32> to vector<16x32xf32>
    %103 = arith.addf %100, %102 : vector<16x32xf32>
    %cst_59 = arith.constant 0.000000e+00 : f32
    %104 = vector.broadcast %cst_59 : f32 to vector<16x32xf32>
    %105 = arith.maximumf %103, %104 : vector<16x32xf32>
    %c1_i32_60 = arith.constant 1 : i32
    %106 = tpu.dynamic_rotate %105 by %c1_i32_60 dim 1 : vector<16x32xf32>, i32 -> vector<16x32xf32>
    %cst_61 = arith.constant 0.000000e+00 : f32
    %107 = vector.shape_cast %77 : vector<1x32xi1> to vector<1x32xi1>
    %108 = vector.broadcast %107 : vector<1x32xi1> to vector<16x32xi1>
    %109 = vector.broadcast %cst_61 : f32 to vector<16x32xf32>
    %110 = arith.select %108, %109, %106 : vector<16x32xi1>, vector<16x32xf32>
    %c31_i32_62 = arith.constant 31 : i32
    %111 = tpu.dynamic_rotate %105 by %c31_i32_62 dim 1 : vector<16x32xf32>, i32 -> vector<16x32xf32>
    %cst_63 = arith.constant 0.000000e+00 : f32
    %112 = vector.shape_cast %79 : vector<1x32xi1> to vector<1x32xi1>
    %113 = vector.broadcast %112 : vector<1x32xi1> to vector<16x32xi1>
    %114 = vector.broadcast %cst_63 : f32 to vector<16x32xf32>
    %115 = arith.select %113, %114, %111 : vector<16x32xi1>, vector<16x32xf32>
    %c1_64 = arith.constant 1 : index
    %c0_65 = arith.constant 0 : index
    %c0_66 = arith.constant 0 : index
    %116 = vector.load %arg5[%c1_64, %c0_65, %c0_66] : memref<3x16x16xf32, #tpu.memory_space<vmem>>, vector<1x16x16xf32>
    %117 = vector.shape_cast %116 : vector<1x16x16xf32> to vector<16x16xf32>
    %cst_67 = arith.constant dense<0.000000e+00> : vector<16x32xf32>
    %118 = tpu.matmul %117, %105, %cst_67 {dimension_numbers = #tpu.dot_dimension_numbers<[1], [0], [0], [1], [0, 0, 1, 1], [], []>} : vector<16x16xf32>, vector<16x32xf32>, vector<16x32xf32> -> vector<16x32xf32>
    %c0_68 = arith.constant 0 : index
    %c0_69 = arith.constant 0 : index
    %c0_70 = arith.constant 0 : index
    %119 = vector.load %arg5[%c0_68, %c0_69, %c0_70] : memref<3x16x16xf32, #tpu.memory_space<vmem>>, vector<1x16x16xf32>
    %120 = vector.shape_cast %119 : vector<1x16x16xf32> to vector<16x16xf32>
    %cst_71 = arith.constant dense<0.000000e+00> : vector<16x32xf32>
    %121 = tpu.matmul %120, %110, %cst_71 {dimension_numbers = #tpu.dot_dimension_numbers<[1], [0], [0], [1], [0, 0, 1, 1], [], []>} : vector<16x16xf32>, vector<16x32xf32>, vector<16x32xf32> -> vector<16x32xf32>
    %122 = arith.addf %118, %121 : vector<16x32xf32>
    %c2_72 = arith.constant 2 : index
    %c0_73 = arith.constant 0 : index
    %c0_74 = arith.constant 0 : index
    %123 = vector.load %arg5[%c2_72, %c0_73, %c0_74] : memref<3x16x16xf32, #tpu.memory_space<vmem>>, vector<1x16x16xf32>
    %124 = vector.shape_cast %123 : vector<1x16x16xf32> to vector<16x16xf32>
    %cst_75 = arith.constant dense<0.000000e+00> : vector<16x32xf32>
    %125 = tpu.matmul %124, %115, %cst_75 {dimension_numbers = #tpu.dot_dimension_numbers<[1], [0], [0], [1], [0, 0, 1, 1], [], []>} : vector<16x16xf32>, vector<16x32xf32>, vector<16x32xf32> -> vector<16x32xf32>
    %126 = arith.addf %122, %125 : vector<16x32xf32>
    %c0_76 = arith.constant 0 : index
    %c3 = arith.constant 3 : index
    %127 = vector.load %arg12[%c0_76, %c3] : memref<64x10xf32, #tpu.memory_space<vmem>>, vector<16x1xf32>
    %128 = vector.broadcast %127 : vector<16x1xf32> to vector<16x32xf32>
    %129 = arith.addf %126, %128 : vector<16x32xf32>
    %cst_77 = arith.constant 0.000000e+00 : f32
    %130 = vector.broadcast %cst_77 : f32 to vector<16x32xf32>
    %131 = arith.maximumf %129, %130 : vector<16x32xf32>
    %c0_78 = arith.constant 0 : index
    %c0_79 = arith.constant 0 : index
    %c0_80 = arith.constant 0 : index
    %132 = vector.load %arg14[%c0_78, %c0_79, %c0_80] : memref<1x16x32xf32, #tpu.memory_space<vmem>>, vector<1x16x32xf32>
    %133 = vector.shape_cast %132 : vector<1x16x32xf32> to vector<16x32xf32>
    %134 = vector.shape_cast %131 : vector<16x32xf32> to vector<1x16x32xf32>
    tpu.vector_store %arg14[%c0_78, %c0_79, %c0_80], %134 {strides = array<i32>} : memref<1x16x32xf32, #tpu.memory_space<vmem>>, vector<1x16x32xf32>,
    %135 = tpu.iota {dimensions = array<i32: 0>} : vector<32x16xi32>
    %136 = tpu.iota {dimensions = array<i32: 1>} : vector<32x16xi32>
    %c2_i32_81 = arith.constant 2 : i32
    %137 = vector.broadcast %c2_i32_81 : i32 to vector<32x16xi32>
    %138 = arith.muli %137, %136 : vector<32x16xi32>
    %139 = arith.cmpi eq, %135, %138 : vector<32x16xi32>
    %cst_82 = arith.constant 1.000000e+00 : f32
    %cst_83 = arith.constant 0.000000e+00 : f32
    %140 = vector.broadcast %cst_82 : f32 to vector<32x16xf32>
    %141 = vector.broadcast %cst_83 : f32 to vector<32x16xf32>
    %142 = arith.select %139, %140, %141 : vector<32x16xi1>, vector<32x16xf32>
    %c31_i32_84 = arith.constant 31 : i32
    %143 = tpu.dynamic_rotate %131 by %c31_i32_84 dim 1 : vector<16x32xf32>, i32 -> vector<16x32xf32>
    %144 = arith.maximumf %131, %143 : vector<16x32xf32>
    %cst_85 = arith.constant dense<0.000000e+00> : vector<16x16xf32>
    %145 = tpu.matmul %144, %142, %cst_85 {dimension_numbers = #tpu.dot_dimension_numbers<[1], [0], [0], [1], [0, 0, 1, 1], [], []>} : vector<16x32xf32>, vector<32x16xf32>, vector<16x16xf32> -> vector<16x16xf32>
    %146 = tpu.iota {dimensions = array<i32: 1>} : vector<1x16xi32>
    %c0_i32_86 = arith.constant 0 : i32
    %147 = vector.broadcast %c0_i32_86 : i32 to vector<1x16xi32>
    %148 = arith.cmpi eq, %146, %147 : vector<1x16xi32>
    %c15_i32 = arith.constant 15 : i32
    %149 = vector.broadcast %c15_i32 : i32 to vector<1x16xi32>
    %150 = arith.cmpi eq, %146, %149 : vector<1x16xi32>
    %c1_i32_87 = arith.constant 1 : i32
    %151 = tpu.dynamic_rotate %145 by %c1_i32_87 dim 1 : vector<16x16xf32>, i32 -> vector<16x16xf32>
    %cst_88 = arith.constant 0.000000e+00 : f32
    %152 = vector.shape_cast %148 : vector<1x16xi1> to vector<1x16xi1>
    %153 = vector.broadcast %152 : vector<1x16xi1> to vector<16x16xi1>
    %154 = vector.broadcast %cst_88 : f32 to vector<16x16xf32>
    %155 = arith.select %153, %154, %151 : vector<16x16xi1>, vector<16x16xf32>
    %c15_i32_89 = arith.constant 15 : i32
    %156 = tpu.dynamic_rotate %145 by %c15_i32_89 dim 1 : vector<16x16xf32>, i32 -> vector<16x16xf32>
    %cst_90 = arith.constant 0.000000e+00 : f32
    %157 = vector.shape_cast %150 : vector<1x16xi1> to vector<1x16xi1>
    %158 = vector.broadcast %157 : vector<1x16xi1> to vector<16x16xi1>
    %159 = vector.broadcast %cst_90 : f32 to vector<16x16xf32>
    %160 = arith.select %158, %159, %156 : vector<16x16xi1>, vector<16x16xf32>
    %c1_91 = arith.constant 1 : index
    %c0_92 = arith.constant 0 : index
    %c0_93 = arith.constant 0 : index
    %161 = vector.load %arg6[%c1_91, %c0_92, %c0_93] : memref<3x32x16xf32, #tpu.memory_space<vmem>>, vector<1x32x16xf32>
    %162 = vector.shape_cast %161 : vector<1x32x16xf32> to vector<32x16xf32>
    %cst_94 = arith.constant dense<0.000000e+00> : vector<32x16xf32>
    %163 = tpu.matmul %162, %145, %cst_94 {dimension_numbers = #tpu.dot_dimension_numbers<[1], [0], [0], [1], [0, 0, 1, 1], [], []>} : vector<32x16xf32>, vector<16x16xf32>, vector<32x16xf32> -> vector<32x16xf32>
    %c0_95 = arith.constant 0 : index
    %c0_96 = arith.constant 0 : index
    %c0_97 = arith.constant 0 : index
    %164 = vector.load %arg6[%c0_95, %c0_96, %c0_97] : memref<3x32x16xf32, #tpu.memory_space<vmem>>, vector<1x32x16xf32>
    %165 = vector.shape_cast %164 : vector<1x32x16xf32> to vector<32x16xf32>
    %cst_98 = arith.constant dense<0.000000e+00> : vector<32x16xf32>
    %166 = tpu.matmul %165, %155, %cst_98 {dimension_numbers = #tpu.dot_dimension_numbers<[1], [0], [0], [1], [0, 0, 1, 1], [], []>} : vector<32x16xf32>, vector<16x16xf32>, vector<32x16xf32> -> vector<32x16xf32>
    %167 = arith.addf %163, %166 : vector<32x16xf32>
    %c2_99 = arith.constant 2 : index
    %c0_100 = arith.constant 0 : index
    %c0_101 = arith.constant 0 : index
    %168 = vector.load %arg6[%c2_99, %c0_100, %c0_101] : memref<3x32x16xf32, #tpu.memory_space<vmem>>, vector<1x32x16xf32>
    %169 = vector.shape_cast %168 : vector<1x32x16xf32> to vector<32x16xf32>
    %cst_102 = arith.constant dense<0.000000e+00> : vector<32x16xf32>
    %170 = tpu.matmul %169, %160, %cst_102 {dimension_numbers = #tpu.dot_dimension_numbers<[1], [0], [0], [1], [0, 0, 1, 1], [], []>} : vector<32x16xf32>, vector<16x16xf32>, vector<32x16xf32> -> vector<32x16xf32>
    %171 = arith.addf %167, %170 : vector<32x16xf32>
    %c0_103 = arith.constant 0 : index
    %c4 = arith.constant 4 : index
    %172 = vector.load %arg12[%c0_103, %c4] : memref<64x10xf32, #tpu.memory_space<vmem>>, vector<32x1xf32>
    %173 = vector.broadcast %172 : vector<32x1xf32> to vector<32x16xf32>
    %174 = arith.addf %171, %173 : vector<32x16xf32>
    %cst_104 = arith.constant 0.000000e+00 : f32
    %175 = vector.broadcast %cst_104 : f32 to vector<32x16xf32>
    %176 = arith.maximumf %174, %175 : vector<32x16xf32>
    %c1_i32_105 = arith.constant 1 : i32
    %177 = tpu.dynamic_rotate %176 by %c1_i32_105 dim 1 : vector<32x16xf32>, i32 -> vector<32x16xf32>
    %cst_106 = arith.constant 0.000000e+00 : f32
    %178 = vector.shape_cast %148 : vector<1x16xi1> to vector<1x16xi1>
    %179 = vector.broadcast %178 : vector<1x16xi1> to vector<32x16xi1>
    %180 = vector.broadcast %cst_106 : f32 to vector<32x16xf32>
    %181 = arith.select %179, %180, %177 : vector<32x16xi1>, vector<32x16xf32>
    %c15_i32_107 = arith.constant 15 : i32
    %182 = tpu.dynamic_rotate %176 by %c15_i32_107 dim 1 : vector<32x16xf32>, i32 -> vector<32x16xf32>
    %cst_108 = arith.constant 0.000000e+00 : f32
    %183 = vector.shape_cast %150 : vector<1x16xi1> to vector<1x16xi1>
    %184 = vector.broadcast %183 : vector<1x16xi1> to vector<32x16xi1>
    %185 = vector.broadcast %cst_108 : f32 to vector<32x16xf32>
    %186 = arith.select %184, %185, %182 : vector<32x16xi1>, vector<32x16xf32>
    %c1_109 = arith.constant 1 : index
    %c0_110 = arith.constant 0 : index
    %c0_111 = arith.constant 0 : index
    %187 = vector.load %arg7[%c1_109, %c0_110, %c0_111] : memref<3x32x32xf32, #tpu.memory_space<vmem>>, vector<1x32x32xf32>
    %188 = vector.shape_cast %187 : vector<1x32x32xf32> to vector<32x32xf32>
    %cst_112 = arith.constant dense<0.000000e+00> : vector<32x16xf32>
    %189 = tpu.matmul %188, %176, %cst_112 {dimension_numbers = #tpu.dot_dimension_numbers<[1], [0], [0], [1], [0, 0, 1, 1], [], []>} : vector<32x32xf32>, vector<32x16xf32>, vector<32x16xf32> -> vector<32x16xf32>
    %c0_113 = arith.constant 0 : index
    %c0_114 = arith.constant 0 : index
    %c0_115 = arith.constant 0 : index
    %190 = vector.load %arg7[%c0_113, %c0_114, %c0_115] : memref<3x32x32xf32, #tpu.memory_space<vmem>>, vector<1x32x32xf32>
    %191 = vector.shape_cast %190 : vector<1x32x32xf32> to vector<32x32xf32>
    %cst_116 = arith.constant dense<0.000000e+00> : vector<32x16xf32>
    %192 = tpu.matmul %191, %181, %cst_116 {dimension_numbers = #tpu.dot_dimension_numbers<[1], [0], [0], [1], [0, 0, 1, 1], [], []>} : vector<32x32xf32>, vector<32x16xf32>, vector<32x16xf32> -> vector<32x16xf32>
    %193 = arith.addf %189, %192 : vector<32x16xf32>
    %c2_117 = arith.constant 2 : index
    %c0_118 = arith.constant 0 : index
    %c0_119 = arith.constant 0 : index
    %194 = vector.load %arg7[%c2_117, %c0_118, %c0_119] : memref<3x32x32xf32, #tpu.memory_space<vmem>>, vector<1x32x32xf32>
    %195 = vector.shape_cast %194 : vector<1x32x32xf32> to vector<32x32xf32>
    %cst_120 = arith.constant dense<0.000000e+00> : vector<32x16xf32>
    %196 = tpu.matmul %195, %186, %cst_120 {dimension_numbers = #tpu.dot_dimension_numbers<[1], [0], [0], [1], [0, 0, 1, 1], [], []>} : vector<32x32xf32>, vector<32x16xf32>, vector<32x16xf32> -> vector<32x16xf32>
    %197 = arith.addf %193, %196 : vector<32x16xf32>
    %c0_121 = arith.constant 0 : index
    %c5 = arith.constant 5 : index
    %198 = vector.load %arg12[%c0_121, %c5] : memref<64x10xf32, #tpu.memory_space<vmem>>, vector<32x1xf32>
    %199 = vector.broadcast %198 : vector<32x1xf32> to vector<32x16xf32>
    %200 = arith.addf %197, %199 : vector<32x16xf32>
    %cst_122 = arith.constant 0.000000e+00 : f32
    %201 = vector.broadcast %cst_122 : f32 to vector<32x16xf32>
    %202 = arith.maximumf %200, %201 : vector<32x16xf32>
    %c0_123 = arith.constant 0 : index
    %c0_124 = arith.constant 0 : index
    %c0_125 = arith.constant 0 : index
    %203 = vector.load %arg15[%c0_123, %c0_124, %c0_125] : memref<1x32x16xf32, #tpu.memory_space<vmem>>, vector<1x32x16xf32>
    %204 = vector.shape_cast %203 : vector<1x32x16xf32> to vector<32x16xf32>
    %205 = vector.shape_cast %202 : vector<32x16xf32> to vector<1x32x16xf32>
    tpu.vector_store %arg15[%c0_123, %c0_124, %c0_125], %205 {strides = array<i32>} : memref<1x32x16xf32, #tpu.memory_space<vmem>>, vector<1x32x16xf32>,
    %206 = tpu.iota {dimensions = array<i32: 0>} : vector<16x8xi32>
    %207 = tpu.iota {dimensions = array<i32: 1>} : vector<16x8xi32>
    %c2_i32_126 = arith.constant 2 : i32
    %208 = vector.broadcast %c2_i32_126 : i32 to vector<16x8xi32>
    %209 = arith.muli %208, %207 : vector<16x8xi32>
    %210 = arith.cmpi eq, %206, %209 : vector<16x8xi32>
    %cst_127 = arith.constant 1.000000e+00 : f32
    %cst_128 = arith.constant 0.000000e+00 : f32
    %211 = vector.broadcast %cst_127 : f32 to vector<16x8xf32>
    %212 = vector.broadcast %cst_128 : f32 to vector<16x8xf32>
    %213 = arith.select %210, %211, %212 : vector<16x8xi1>, vector<16x8xf32>
    %c15_i32_129 = arith.constant 15 : i32
    %214 = tpu.dynamic_rotate %202 by %c15_i32_129 dim 1 : vector<32x16xf32>, i32 -> vector<32x16xf32>
    %215 = arith.maximumf %202, %214 : vector<32x16xf32>
    %cst_130 = arith.constant dense<0.000000e+00> : vector<32x8xf32>
    %216 = tpu.matmul %215, %213, %cst_130 {dimension_numbers = #tpu.dot_dimension_numbers<[1], [0], [0], [1], [0, 0, 1, 1], [], []>} : vector<32x16xf32>, vector<16x8xf32>, vector<32x8xf32> -> vector<32x8xf32>
    %217 = tpu.iota {dimensions = array<i32: 1>} : vector<1x8xi32>
    %c0_i32_131 = arith.constant 0 : i32
    %218 = vector.broadcast %c0_i32_131 : i32 to vector<1x8xi32>
    %219 = arith.cmpi eq, %217, %218 : vector<1x8xi32>
    %c7_i32 = arith.constant 7 : i32
    %220 = vector.broadcast %c7_i32 : i32 to vector<1x8xi32>
    %221 = arith.cmpi eq, %217, %220 : vector<1x8xi32>
    %c1_i32_132 = arith.constant 1 : i32
    %222 = tpu.dynamic_rotate %216 by %c1_i32_132 dim 1 : vector<32x8xf32>, i32 -> vector<32x8xf32>
    %cst_133 = arith.constant 0.000000e+00 : f32
    %223 = vector.shape_cast %219 : vector<1x8xi1> to vector<1x8xi1>
    %224 = vector.broadcast %223 : vector<1x8xi1> to vector<32x8xi1>
    %225 = vector.broadcast %cst_133 : f32 to vector<32x8xf32>
    %226 = arith.select %224, %225, %222 : vector<32x8xi1>, vector<32x8xf32>
    %c7_i32_134 = arith.constant 7 : i32
    %227 = tpu.dynamic_rotate %216 by %c7_i32_134 dim 1 : vector<32x8xf32>, i32 -> vector<32x8xf32>
    %cst_135 = arith.constant 0.000000e+00 : f32
    %228 = vector.shape_cast %221 : vector<1x8xi1> to vector<1x8xi1>
    %229 = vector.broadcast %228 : vector<1x8xi1> to vector<32x8xi1>
    %230 = vector.broadcast %cst_135 : f32 to vector<32x8xf32>
    %231 = arith.select %229, %230, %227 : vector<32x8xi1>, vector<32x8xf32>
    %c1_136 = arith.constant 1 : index
    %c0_137 = arith.constant 0 : index
    %c0_138 = arith.constant 0 : index
    %232 = vector.load %arg8[%c1_136, %c0_137, %c0_138] : memref<3x32x32xf32, #tpu.memory_space<vmem>>, vector<1x32x32xf32>
    %233 = vector.shape_cast %232 : vector<1x32x32xf32> to vector<32x32xf32>
    %cst_139 = arith.constant dense<0.000000e+00> : vector<32x8xf32>
    %234 = tpu.matmul %233, %216, %cst_139 {dimension_numbers = #tpu.dot_dimension_numbers<[1], [0], [0], [1], [0, 0, 1, 1], [], []>} : vector<32x32xf32>, vector<32x8xf32>, vector<32x8xf32> -> vector<32x8xf32>
    %c0_140 = arith.constant 0 : index
    %c0_141 = arith.constant 0 : index
    %c0_142 = arith.constant 0 : index
    %235 = vector.load %arg8[%c0_140, %c0_141, %c0_142] : memref<3x32x32xf32, #tpu.memory_space<vmem>>, vector<1x32x32xf32>
    %236 = vector.shape_cast %235 : vector<1x32x32xf32> to vector<32x32xf32>
    %cst_143 = arith.constant dense<0.000000e+00> : vector<32x8xf32>
    %237 = tpu.matmul %236, %226, %cst_143 {dimension_numbers = #tpu.dot_dimension_numbers<[1], [0], [0], [1], [0, 0, 1, 1], [], []>} : vector<32x32xf32>, vector<32x8xf32>, vector<32x8xf32> -> vector<32x8xf32>
    %238 = arith.addf %234, %237 : vector<32x8xf32>
    %c2_144 = arith.constant 2 : index
    %c0_145 = arith.constant 0 : index
    %c0_146 = arith.constant 0 : index
    %239 = vector.load %arg8[%c2_144, %c0_145, %c0_146] : memref<3x32x32xf32, #tpu.memory_space<vmem>>, vector<1x32x32xf32>
    %240 = vector.shape_cast %239 : vector<1x32x32xf32> to vector<32x32xf32>
    %cst_147 = arith.constant dense<0.000000e+00> : vector<32x8xf32>
    %241 = tpu.matmul %240, %231, %cst_147 {dimension_numbers = #tpu.dot_dimension_numbers<[1], [0], [0], [1], [0, 0, 1, 1], [], []>} : vector<32x32xf32>, vector<32x8xf32>, vector<32x8xf32> -> vector<32x8xf32>
    %242 = arith.addf %238, %241 : vector<32x8xf32>
    %c0_148 = arith.constant 0 : index
    %c6 = arith.constant 6 : index
    %243 = vector.load %arg12[%c0_148, %c6] : memref<64x10xf32, #tpu.memory_space<vmem>>, vector<32x1xf32>
    %244 = vector.broadcast %243 : vector<32x1xf32> to vector<32x8xf32>
    %245 = arith.addf %242, %244 : vector<32x8xf32>
    %cst_149 = arith.constant 0.000000e+00 : f32
    %246 = vector.broadcast %cst_149 : f32 to vector<32x8xf32>
    %247 = arith.maximumf %245, %246 : vector<32x8xf32>
    %c1_i32_150 = arith.constant 1 : i32
    %248 = tpu.dynamic_rotate %247 by %c1_i32_150 dim 1 : vector<32x8xf32>, i32 -> vector<32x8xf32>
    %cst_151 = arith.constant 0.000000e+00 : f32
    %249 = vector.shape_cast %219 : vector<1x8xi1> to vector<1x8xi1>
    %250 = vector.broadcast %249 : vector<1x8xi1> to vector<32x8xi1>
    %251 = vector.broadcast %cst_151 : f32 to vector<32x8xf32>
    %252 = arith.select %250, %251, %248 : vector<32x8xi1>, vector<32x8xf32>
    %c7_i32_152 = arith.constant 7 : i32
    %253 = tpu.dynamic_rotate %247 by %c7_i32_152 dim 1 : vector<32x8xf32>, i32 -> vector<32x8xf32>
    %cst_153 = arith.constant 0.000000e+00 : f32
    %254 = vector.shape_cast %221 : vector<1x8xi1> to vector<1x8xi1>
    %255 = vector.broadcast %254 : vector<1x8xi1> to vector<32x8xi1>
    %256 = vector.broadcast %cst_153 : f32 to vector<32x8xf32>
    %257 = arith.select %255, %256, %253 : vector<32x8xi1>, vector<32x8xf32>
    %c1_154 = arith.constant 1 : index
    %c0_155 = arith.constant 0 : index
    %c0_156 = arith.constant 0 : index
    %258 = vector.load %arg9[%c1_154, %c0_155, %c0_156] : memref<3x32x32xf32, #tpu.memory_space<vmem>>, vector<1x32x32xf32>
    %259 = vector.shape_cast %258 : vector<1x32x32xf32> to vector<32x32xf32>
    %cst_157 = arith.constant dense<0.000000e+00> : vector<32x8xf32>
    %260 = tpu.matmul %259, %247, %cst_157 {dimension_numbers = #tpu.dot_dimension_numbers<[1], [0], [0], [1], [0, 0, 1, 1], [], []>} : vector<32x32xf32>, vector<32x8xf32>, vector<32x8xf32> -> vector<32x8xf32>
    %c0_158 = arith.constant 0 : index
    %c0_159 = arith.constant 0 : index
    %c0_160 = arith.constant 0 : index
    %261 = vector.load %arg9[%c0_158, %c0_159, %c0_160] : memref<3x32x32xf32, #tpu.memory_space<vmem>>, vector<1x32x32xf32>
    %262 = vector.shape_cast %261 : vector<1x32x32xf32> to vector<32x32xf32>
    %cst_161 = arith.constant dense<0.000000e+00> : vector<32x8xf32>
    %263 = tpu.matmul %262, %252, %cst_161 {dimension_numbers = #tpu.dot_dimension_numbers<[1], [0], [0], [1], [0, 0, 1, 1], [], []>} : vector<32x32xf32>, vector<32x8xf32>, vector<32x8xf32> -> vector<32x8xf32>
    %264 = arith.addf %260, %263 : vector<32x8xf32>
    %c2_162 = arith.constant 2 : index
    %c0_163 = arith.constant 0 : index
    %c0_164 = arith.constant 0 : index
    %265 = vector.load %arg9[%c2_162, %c0_163, %c0_164] : memref<3x32x32xf32, #tpu.memory_space<vmem>>, vector<1x32x32xf32>
    %266 = vector.shape_cast %265 : vector<1x32x32xf32> to vector<32x32xf32>
    %cst_165 = arith.constant dense<0.000000e+00> : vector<32x8xf32>
    %267 = tpu.matmul %266, %257, %cst_165 {dimension_numbers = #tpu.dot_dimension_numbers<[1], [0], [0], [1], [0, 0, 1, 1], [], []>} : vector<32x32xf32>, vector<32x8xf32>, vector<32x8xf32> -> vector<32x8xf32>
    %268 = arith.addf %264, %267 : vector<32x8xf32>
    %c0_166 = arith.constant 0 : index
    %c7 = arith.constant 7 : index
    %269 = vector.load %arg12[%c0_166, %c7] : memref<64x10xf32, #tpu.memory_space<vmem>>, vector<32x1xf32>
    %270 = vector.broadcast %269 : vector<32x1xf32> to vector<32x8xf32>
    %271 = arith.addf %268, %270 : vector<32x8xf32>
    %cst_167 = arith.constant 0.000000e+00 : f32
    %272 = vector.broadcast %cst_167 : f32 to vector<32x8xf32>
    %273 = arith.maximumf %271, %272 : vector<32x8xf32>
    %c0_168 = arith.constant 0 : index
    %c0_169 = arith.constant 0 : index
    %c0_170 = arith.constant 0 : index
    %274 = vector.load %arg16[%c0_168, %c0_169, %c0_170] : memref<1x32x8xf32, #tpu.memory_space<vmem>>, vector<1x32x8xf32>
    %275 = vector.shape_cast %274 : vector<1x32x8xf32> to vector<32x8xf32>
    %276 = vector.shape_cast %273 : vector<32x8xf32> to vector<1x32x8xf32>
    tpu.vector_store %arg16[%c0_168, %c0_169, %c0_170], %276 {strides = array<i32>} : memref<1x32x8xf32, #tpu.memory_space<vmem>>, vector<1x32x8xf32>,
    %277 = tpu.iota {dimensions = array<i32: 0>} : vector<8x4xi32>
    %278 = tpu.iota {dimensions = array<i32: 1>} : vector<8x4xi32>
    %c2_i32_171 = arith.constant 2 : i32
    %279 = vector.broadcast %c2_i32_171 : i32 to vector<8x4xi32>
    %280 = arith.muli %279, %278 : vector<8x4xi32>
    %281 = arith.cmpi eq, %277, %280 : vector<8x4xi32>
    %cst_172 = arith.constant 1.000000e+00 : f32
    %cst_173 = arith.constant 0.000000e+00 : f32
    %282 = vector.broadcast %cst_172 : f32 to vector<8x4xf32>
    %283 = vector.broadcast %cst_173 : f32 to vector<8x4xf32>
    %284 = arith.select %281, %282, %283 : vector<8x4xi1>, vector<8x4xf32>
    %c7_i32_174 = arith.constant 7 : i32
    %285 = tpu.dynamic_rotate %273 by %c7_i32_174 dim 1 : vector<32x8xf32>, i32 -> vector<32x8xf32>
    %286 = arith.maximumf %273, %285 : vector<32x8xf32>
    %cst_175 = arith.constant dense<0.000000e+00> : vector<32x4xf32>
    %287 = tpu.matmul %286, %284, %cst_175 {dimension_numbers = #tpu.dot_dimension_numbers<[1], [0], [0], [1], [0, 0, 1, 1], [], []>} : vector<32x8xf32>, vector<8x4xf32>, vector<32x4xf32> -> vector<32x4xf32>
    %288 = tpu.iota {dimensions = array<i32: 1>} : vector<1x4xi32>
    %c0_i32_176 = arith.constant 0 : i32
    %289 = vector.broadcast %c0_i32_176 : i32 to vector<1x4xi32>
    %290 = arith.cmpi eq, %288, %289 : vector<1x4xi32>
    %c3_i32 = arith.constant 3 : i32
    %291 = vector.broadcast %c3_i32 : i32 to vector<1x4xi32>
    %292 = arith.cmpi eq, %288, %291 : vector<1x4xi32>
    %c1_i32_177 = arith.constant 1 : i32
    %293 = tpu.dynamic_rotate %287 by %c1_i32_177 dim 1 : vector<32x4xf32>, i32 -> vector<32x4xf32>
    %cst_178 = arith.constant 0.000000e+00 : f32
    %294 = vector.shape_cast %290 : vector<1x4xi1> to vector<1x4xi1>
    %295 = vector.broadcast %294 : vector<1x4xi1> to vector<32x4xi1>
    %296 = vector.broadcast %cst_178 : f32 to vector<32x4xf32>
    %297 = arith.select %295, %296, %293 : vector<32x4xi1>, vector<32x4xf32>
    %c3_i32_179 = arith.constant 3 : i32
    %298 = tpu.dynamic_rotate %287 by %c3_i32_179 dim 1 : vector<32x4xf32>, i32 -> vector<32x4xf32>
    %cst_180 = arith.constant 0.000000e+00 : f32
    %299 = vector.shape_cast %292 : vector<1x4xi1> to vector<1x4xi1>
    %300 = vector.broadcast %299 : vector<1x4xi1> to vector<32x4xi1>
    %301 = vector.broadcast %cst_180 : f32 to vector<32x4xf32>
    %302 = arith.select %300, %301, %298 : vector<32x4xi1>, vector<32x4xf32>
    %c1_181 = arith.constant 1 : index
    %c0_182 = arith.constant 0 : index
    %c0_183 = arith.constant 0 : index
    %303 = vector.load %arg10[%c1_181, %c0_182, %c0_183] : memref<3x64x32xf32, #tpu.memory_space<vmem>>, vector<1x64x32xf32>
    %304 = vector.shape_cast %303 : vector<1x64x32xf32> to vector<64x32xf32>
    %cst_184 = arith.constant dense<0.000000e+00> : vector<64x4xf32>
    %305 = tpu.matmul %304, %287, %cst_184 {dimension_numbers = #tpu.dot_dimension_numbers<[1], [0], [0], [1], [0, 0, 1, 1], [], []>} : vector<64x32xf32>, vector<32x4xf32>, vector<64x4xf32> -> vector<64x4xf32>
    %c0_185 = arith.constant 0 : index
    %c0_186 = arith.constant 0 : index
    %c0_187 = arith.constant 0 : index
    %306 = vector.load %arg10[%c0_185, %c0_186, %c0_187] : memref<3x64x32xf32, #tpu.memory_space<vmem>>, vector<1x64x32xf32>
    %307 = vector.shape_cast %306 : vector<1x64x32xf32> to vector<64x32xf32>
    %cst_188 = arith.constant dense<0.000000e+00> : vector<64x4xf32>
    %308 = tpu.matmul %307, %297, %cst_188 {dimension_numbers = #tpu.dot_dimension_numbers<[1], [0], [0], [1], [0, 0, 1, 1], [], []>} : vector<64x32xf32>, vector<32x4xf32>, vector<64x4xf32> -> vector<64x4xf32>
    %309 = arith.addf %305, %308 : vector<64x4xf32>
    %c2_189 = arith.constant 2 : index
    %c0_190 = arith.constant 0 : index
    %c0_191 = arith.constant 0 : index
    %310 = vector.load %arg10[%c2_189, %c0_190, %c0_191] : memref<3x64x32xf32, #tpu.memory_space<vmem>>, vector<1x64x32xf32>
    %311 = vector.shape_cast %310 : vector<1x64x32xf32> to vector<64x32xf32>
    %cst_192 = arith.constant dense<0.000000e+00> : vector<64x4xf32>
    %312 = tpu.matmul %311, %302, %cst_192 {dimension_numbers = #tpu.dot_dimension_numbers<[1], [0], [0], [1], [0, 0, 1, 1], [], []>} : vector<64x32xf32>, vector<32x4xf32>, vector<64x4xf32> -> vector<64x4xf32>
    %313 = arith.addf %309, %312 : vector<64x4xf32>
    %c0_193 = arith.constant 0 : index
    %c8 = arith.constant 8 : index
    %314 = vector.load %arg12[%c0_193, %c8] : memref<64x10xf32, #tpu.memory_space<vmem>>, vector<64x1xf32>
    %315 = vector.broadcast %314 : vector<64x1xf32> to vector<64x4xf32>
    %316 = arith.addf %313, %315 : vector<64x4xf32>
    %cst_194 = arith.constant 0.000000e+00 : f32
    %317 = vector.broadcast %cst_194 : f32 to vector<64x4xf32>
    %318 = arith.maximumf %316, %317 : vector<64x4xf32>
    %c1_i32_195 = arith.constant 1 : i32
    %319 = tpu.dynamic_rotate %318 by %c1_i32_195 dim 1 : vector<64x4xf32>, i32 -> vector<64x4xf32>
    %cst_196 = arith.constant 0.000000e+00 : f32
    %320 = vector.shape_cast %290 : vector<1x4xi1> to vector<1x4xi1>
    %321 = vector.broadcast %320 : vector<1x4xi1> to vector<64x4xi1>
    %322 = vector.broadcast %cst_196 : f32 to vector<64x4xf32>
    %323 = arith.select %321, %322, %319 : vector<64x4xi1>, vector<64x4xf32>
    %c3_i32_197 = arith.constant 3 : i32
    %324 = tpu.dynamic_rotate %318 by %c3_i32_197 dim 1 : vector<64x4xf32>, i32 -> vector<64x4xf32>
    %cst_198 = arith.constant 0.000000e+00 : f32
    %325 = vector.shape_cast %292 : vector<1x4xi1> to vector<1x4xi1>
    %326 = vector.broadcast %325 : vector<1x4xi1> to vector<64x4xi1>
    %327 = vector.broadcast %cst_198 : f32 to vector<64x4xf32>
    %328 = arith.select %326, %327, %324 : vector<64x4xi1>, vector<64x4xf32>
    %c1_199 = arith.constant 1 : index
    %c0_200 = arith.constant 0 : index
    %c0_201 = arith.constant 0 : index
    %329 = vector.load %arg11[%c1_199, %c0_200, %c0_201] : memref<3x64x64xf32, #tpu.memory_space<vmem>>, vector<1x64x64xf32>
    %330 = vector.shape_cast %329 : vector<1x64x64xf32> to vector<64x64xf32>
    %cst_202 = arith.constant dense<0.000000e+00> : vector<64x4xf32>
    %331 = tpu.matmul %330, %318, %cst_202 {dimension_numbers = #tpu.dot_dimension_numbers<[1], [0], [0], [1], [0, 0, 1, 1], [], []>} : vector<64x64xf32>, vector<64x4xf32>, vector<64x4xf32> -> vector<64x4xf32>
    %c0_203 = arith.constant 0 : index
    %c0_204 = arith.constant 0 : index
    %c0_205 = arith.constant 0 : index
    %332 = vector.load %arg11[%c0_203, %c0_204, %c0_205] : memref<3x64x64xf32, #tpu.memory_space<vmem>>, vector<1x64x64xf32>
    %333 = vector.shape_cast %332 : vector<1x64x64xf32> to vector<64x64xf32>
    %cst_206 = arith.constant dense<0.000000e+00> : vector<64x4xf32>
    %334 = tpu.matmul %333, %323, %cst_206 {dimension_numbers = #tpu.dot_dimension_numbers<[1], [0], [0], [1], [0, 0, 1, 1], [], []>} : vector<64x64xf32>, vector<64x4xf32>, vector<64x4xf32> -> vector<64x4xf32>
    %335 = arith.addf %331, %334 : vector<64x4xf32>
    %c2_207 = arith.constant 2 : index
    %c0_208 = arith.constant 0 : index
    %c0_209 = arith.constant 0 : index
    %336 = vector.load %arg11[%c2_207, %c0_208, %c0_209] : memref<3x64x64xf32, #tpu.memory_space<vmem>>, vector<1x64x64xf32>
    %337 = vector.shape_cast %336 : vector<1x64x64xf32> to vector<64x64xf32>
    %cst_210 = arith.constant dense<0.000000e+00> : vector<64x4xf32>
    %338 = tpu.matmul %337, %328, %cst_210 {dimension_numbers = #tpu.dot_dimension_numbers<[1], [0], [0], [1], [0, 0, 1, 1], [], []>} : vector<64x64xf32>, vector<64x4xf32>, vector<64x4xf32> -> vector<64x4xf32>
    %339 = arith.addf %335, %338 : vector<64x4xf32>
    %c0_211 = arith.constant 0 : index
    %c9 = arith.constant 9 : index
    %340 = vector.load %arg12[%c0_211, %c9] : memref<64x10xf32, #tpu.memory_space<vmem>>, vector<64x1xf32>
    %341 = vector.broadcast %340 : vector<64x1xf32> to vector<64x4xf32>
    %342 = arith.addf %339, %341 : vector<64x4xf32>
    %cst_212 = arith.constant 0.000000e+00 : f32
    %343 = vector.broadcast %cst_212 : f32 to vector<64x4xf32>
    %344 = arith.maximumf %342, %343 : vector<64x4xf32>
    %c0_213 = arith.constant 0 : index
    %c0_214 = arith.constant 0 : index
    %c0_215 = arith.constant 0 : index
    %345 = vector.load %arg17[%c0_213, %c0_214, %c0_215] : memref<1x64x4xf32, #tpu.memory_space<vmem>>, vector<1x64x4xf32>
    %346 = vector.shape_cast %345 : vector<1x64x4xf32> to vector<64x4xf32>
    %347 = vector.shape_cast %344 : vector<64x4xf32> to vector<1x64x4xf32>
    tpu.vector_store %arg17[%c0_213, %c0_214, %c0_215], %347 {strides = array<i32>} : memref<1x64x4xf32, #tpu.memory_space<vmem>>, vector<1x64x4xf32>,
    return
  }
  func.func @transform_0(%arg0: i32) -> (i32, i32, i32) {
    %c0_i32 = arith.constant 0 : i32
    %c0_i32_0 = arith.constant 0 : i32
    %c0_i32_1 = arith.constant 0 : i32
    return %arg0, %c0_i32, %c0_i32_0 : i32, i32, i32
  }
  func.func @transform_1(%arg0: i32) -> (i32, i32, i32) {
    %c0_i32 = arith.constant 0 : i32
    %c0_i32_0 = arith.constant 0 : i32
    %c0_i32_1 = arith.constant 0 : i32
    %c0_i32_2 = arith.constant 0 : i32
    return %c0_i32, %c0_i32_0, %c0_i32_1 : i32, i32, i32
  }
  func.func @transform_2(%arg0: i32) -> (i32, i32, i32) {
    %c0_i32 = arith.constant 0 : i32
    %c0_i32_0 = arith.constant 0 : i32
    %c0_i32_1 = arith.constant 0 : i32
    %c0_i32_2 = arith.constant 0 : i32
    return %c0_i32, %c0_i32_0, %c0_i32_1 : i32, i32, i32
  }
  func.func @transform_3(%arg0: i32) -> (i32, i32, i32) {
    %c0_i32 = arith.constant 0 : i32
    %c0_i32_0 = arith.constant 0 : i32
    %c0_i32_1 = arith.constant 0 : i32
    %c0_i32_2 = arith.constant 0 : i32
    return %c0_i32, %c0_i32_0, %c0_i32_1 : i32, i32, i32
  }
  func.func @transform_4(%arg0: i32) -> (i32, i32, i32) {
    %c0_i32 = arith.constant 0 : i32
    %c0_i32_0 = arith.constant 0 : i32
    %c0_i32_1 = arith.constant 0 : i32
    %c0_i32_2 = arith.constant 0 : i32
    return %c0_i32, %c0_i32_0, %c0_i32_1 : i32, i32, i32
  }
  func.func @transform_5(%arg0: i32) -> (i32, i32, i32) {
    %c0_i32 = arith.constant 0 : i32
    %c0_i32_0 = arith.constant 0 : i32
    %c0_i32_1 = arith.constant 0 : i32
    %c0_i32_2 = arith.constant 0 : i32
    return %c0_i32, %c0_i32_0, %c0_i32_1 : i32, i32, i32
  }
  func.func @transform_6(%arg0: i32) -> (i32, i32, i32) {
    %c0_i32 = arith.constant 0 : i32
    %c0_i32_0 = arith.constant 0 : i32
    %c0_i32_1 = arith.constant 0 : i32
    %c0_i32_2 = arith.constant 0 : i32
    return %c0_i32, %c0_i32_0, %c0_i32_1 : i32, i32, i32
  }
  func.func @transform_7(%arg0: i32) -> (i32, i32, i32) {
    %c0_i32 = arith.constant 0 : i32
    %c0_i32_0 = arith.constant 0 : i32
    %c0_i32_1 = arith.constant 0 : i32
    %c0_i32_2 = arith.constant 0 : i32
    return %c0_i32, %c0_i32_0, %c0_i32_1 : i32, i32, i32
  }
  func.func @transform_8(%arg0: i32) -> (i32, i32, i32) {
    %c0_i32 = arith.constant 0 : i32
    %c0_i32_0 = arith.constant 0 : i32
    %c0_i32_1 = arith.constant 0 : i32
    %c0_i32_2 = arith.constant 0 : i32
    return %c0_i32, %c0_i32_0, %c0_i32_1 : i32, i32, i32
  }
  func.func @transform_9(%arg0: i32) -> (i32, i32, i32) {
    %c0_i32 = arith.constant 0 : i32
    %c0_i32_0 = arith.constant 0 : i32
    %c0_i32_1 = arith.constant 0 : i32
    %c0_i32_2 = arith.constant 0 : i32
    return %c0_i32, %c0_i32_0, %c0_i32_1 : i32, i32, i32
  }
  func.func @transform_10(%arg0: i32) -> (i32, i32, i32) {
    %c0_i32 = arith.constant 0 : i32
    %c0_i32_0 = arith.constant 0 : i32
    %c0_i32_1 = arith.constant 0 : i32
    %c0_i32_2 = arith.constant 0 : i32
    return %c0_i32, %c0_i32_0, %c0_i32_1 : i32, i32, i32
  }
  func.func @transform_11(%arg0: i32) -> (i32, i32) {
    %c0_i32 = arith.constant 0 : i32
    %c0_i32_0 = arith.constant 0 : i32
    %c0_i32_1 = arith.constant 0 : i32
    return %c0_i32, %c0_i32_0 : i32, i32
  }
  func.func @transform_12(%arg0: i32) -> (i32, i32, i32) {
    %c0_i32 = arith.constant 0 : i32
    %c0_i32_0 = arith.constant 0 : i32
    %c0_i32_1 = arith.constant 0 : i32
    return %arg0, %c0_i32, %c0_i32_0 : i32, i32, i32
  }
  func.func @transform_13(%arg0: i32) -> (i32, i32, i32) {
    %c0_i32 = arith.constant 0 : i32
    %c0_i32_0 = arith.constant 0 : i32
    %c0_i32_1 = arith.constant 0 : i32
    return %arg0, %c0_i32, %c0_i32_0 : i32, i32, i32
  }
  func.func @transform_14(%arg0: i32) -> (i32, i32, i32) {
    %c0_i32 = arith.constant 0 : i32
    %c0_i32_0 = arith.constant 0 : i32
    %c0_i32_1 = arith.constant 0 : i32
    return %arg0, %c0_i32, %c0_i32_0 : i32, i32, i32
  }
  func.func @transform_15(%arg0: i32) -> (i32, i32, i32) {
    %c0_i32 = arith.constant 0 : i32
    %c0_i32_0 = arith.constant 0 : i32
    %c0_i32_1 = arith.constant 0 : i32
    return %arg0, %c0_i32, %c0_i32_0 : i32, i32, i32
  }
  func.func @transform_16(%arg0: i32) -> (i32, i32, i32) {
    %c0_i32 = arith.constant 0 : i32
    %c0_i32_0 = arith.constant 0 : i32
    %c0_i32_1 = arith.constant 0 : i32
    return %arg0, %c0_i32, %c0_i32_0 : i32, i32, i32
  }
}

</mosaic_0001>

<llo_original>
// kernel: encoder_forward.1
$region0: #{encoder_forward.1}
  #allocation0 [shape = 'u32[]', space=smem, size = 0x4, offset = 0x4, fixed_abs, tag = 'smem constant byte address 0x4 - core index']
  #allocation1 [shape = 'u32[144,128]{1,0:T(1,128)}', space=vmem, size = 0x12000, scoped, tag = 'internal scratch']
  %s0 = inlined_call_operand.vmem [shape: f32[2,1,64], index: 0, kind: input, shape index: {}]
  %s1 = inlined_call_operand.vmem [shape: f32[3,8,1], index: 1, kind: input, shape index: {}]
  %s2 = inlined_call_operand.vmem [shape: f32[3,8,8], index: 2, kind: input, shape index: {}]
  %s3 = inlined_call_operand.vmem [shape: f32[3,16,8], index: 3, kind: input, shape index: {}]
  %s4 = inlined_call_operand.vmem [shape: f32[3,16,16], index: 4, kind: input, shape index: {}]
  %s5 = inlined_call_operand.vmem [shape: f32[3,32,16], index: 5, kind: input, shape index: {}]
  %s6 = inlined_call_operand.vmem [shape: f32[3,32,32], index: 6, kind: input, shape index: {}]
  %s7 = inlined_call_operand.vmem [shape: f32[3,32,32], index: 7, kind: input, shape index: {}]
  %s8 = inlined_call_operand.vmem [shape: f32[3,32,32], index: 8, kind: input, shape index: {}]
  %s9 = inlined_call_operand.vmem [shape: f32[3,64,32], index: 9, kind: input, shape index: {}]
  %s10 = inlined_call_operand.vmem [shape: f32[3,64,64], index: 10, kind: input, shape index: {}]
  %s11 = inlined_call_operand.vmem [shape: f32[64,10], index: 11, kind: input, shape index: {}]
  %s12 = inlined_call_operand.hbm [shape: f32[2,8,64], index: 12, kind: output, shape index: {0}]
  %s13 = inlined_call_operand.hbm [shape: f32[2,16,32], index: 13, kind: output, shape index: {1}]
  %s14 = inlined_call_operand.vmem [shape: f32[2,32,16], index: 14, kind: output, shape index: {2}]
  %s15 = inlined_call_operand.vmem [shape: f32[2,32,8], index: 15, kind: output, shape index: {3}]
  %s16 = inlined_call_operand.vmem [shape: f32[2,64,4], index: 16, kind: output, shape index: {4}]
  %17 = xla_tuple %s12, %s13, %s14, %s15, %s16
  %s18 = sld [smem:[#allocation0]]
  $region113: #{encoder_forward.1} parent=0
    _
  %s20 = ssub.s32 1, %s18
  %s21 = scalar_select 0, %s20, %s18
  $region1: #{encoder_forward.1} parent=0
    #allocation2 [shape = 'u8[8192]{0}', space=vmem, size = 0x2000, scoped, tag = 'output window, operand 0']
    #allocation3 [shape = 's32[2]{0}', space=sflag, size = 0x8, scoped, tag = 'scoped memory for encoder_forward.1']
    #allocation4 [shape = 'u8[16384]{0}', space=vmem, size = 0x4000, scoped, tag = 'output window, operand 1']
    #allocation5 [shape = 's32[2]{0}', space=sflag, size = 0x8, scoped, tag = 'scoped memory for encoder_forward.1']
    %22 = vsyncpa [#allocation3], 0
    %s23 = scalar_lea.sflag [#allocation3], 1
    %24 = vsyncpa %s23, 0
    %25 = vsyncpa [#allocation5], 0
    %s26 = scalar_lea.sflag [#allocation5], 1
    %27 = vsyncpa %s26, 0
    loop: start=0, step=1, limit=4
    $region2: #{encoder_forward.1} parent=1 // loop_pre_header
      _
    $region3: #{encoder_forward.1} parent=1 // loop_header
      %s29 = sphi 0, %s33
      %p30 = scmp.ge.s32.totalorder %s29, 4
      %s39 = sphi 0, %s41
      %s42 = sphi 0, %s39
      %s43 = sphi 0, %s42
      %s59 = sphi 0, %s43
      %s63 = sphi 0, %s63
      %s65 = sphi 0, %s63
      %s66 = sphi 0, %s65
      %s80 = sphi 0, %s66
      %s84 = sphi 0, %s84
      %s86 = sphi 0, %s84
      %s87 = sphi 0, %s86
      %s101 = sphi 0, %s87
      %s105 = sphi 0, %s105
      %s107 = sphi 0, %s105
      %s108 = sphi 0, %s107
      %s122 = sphi 0, %s108
      %s126 = sphi 0, %s126
      %s128 = sphi 0, %s126
      %s129 = sphi 0, %s128
      %s143 = sphi 0, %s129
      %s147 = sphi 0, %s147
      %s149 = sphi 0, %s147
      %s150 = sphi 0, %s149
      %s164 = sphi 0, %s150
      %s168 = sphi 0, %s168
      %s170 = sphi 0, %s168
      %s171 = sphi 0, %s170
      %s185 = sphi 0, %s171
      %s189 = sphi 0, %s189
      %s191 = sphi 0, %s189
      %s192 = sphi 0, %s191
      %s206 = sphi 0, %s192
      %s210 = sphi 0, %s210
      %s212 = sphi 0, %s210
      %s213 = sphi 0, %s212
      %s227 = sphi 0, %s213
      %s231 = sphi 0, %s231
      %s233 = sphi 0, %s231
      %s234 = sphi 0, %s233
      %s248 = sphi 0, %s234
      %s252 = sphi 0, %s252
      %s254 = sphi 0, %s252
      %s255 = sphi 0, %s254
      %s269 = sphi 0, %s255
      %s273 = sphi 0, %s273
      %s275 = sphi 0, %s273
      %s276 = sphi 0, %s275
      %s290 = sphi 0, %s276
      %s296 = sphi 0, %s298
      %s299 = sphi 0, %s296
      %s300 = sphi 0, %s299
      %s316 = sphi 0, %s300
      %s322 = sphi 0, %s324
      %s325 = sphi 0, %s322
      %s326 = sphi 0, %s325
      %s342 = sphi 0, %s326
      %s348 = sphi 0, %s350
      %s351 = sphi 0, %s348
      %s352 = sphi 0, %s351
      %s368 = sphi 0, %s352
      %s374 = sphi 0, %s376
      %s377 = sphi 0, %s374
      %s378 = sphi 0, %s377
      %s394 = sphi 0, %s378
      %s400 = sphi 0, %s402
      %s403 = sphi 0, %s400
      %s404 = sphi 0, %s403
      %s420 = sphi 0, %s404
    $region4: #{encoder_forward.1} parent=1 // loop_header_branch
      %32 = sbr.rel (%p30) target = $region8
    $region5: #{encoder_forward.1} parent=1 // loop_body
      %s34 = ssub.s32 %s29, 1
      %s35 = ssub.s32 %s29, 2
      %s36 = sadd.s32 %s29, 1
      %s37 = ssub.s32 %s29, %s36
      %p38 = scmp.eq.s32.totalorder %s37, 0
      %s40 = sadd.s32 %s39, 1
      %s41 = scalar_select %p38, %s39, %s40
      %p44 = pneg %p38
      %p45 = scmp.eq.s32.totalorder %s29, 1
      %p46 = por %p44, %p45
      %p47 = scmp.ne.s32.totalorder %s39, %s42
      %p48 = scmp.eq.s32.totalorder %s29, 0
      %p49 = por %p47, %p48
      %p50 = scmp.ne.s32.totalorder %s39, %s42
      %p51 = scmp.eq.s32.totalorder %s34, 1
      %p52 = por %p50, %p51
      %p53 = scmp.ne.s32.totalorder %s42, %s43
      %p54 = scmp.eq.s32.totalorder %s34, 0
      %p55 = por %p53, %p54
      %p56 = scmp.ne.s32.totalorder %s42, %s43
      %p57 = scmp.eq.s32.totalorder %s35, 1
      %p58 = por %p56, %p57
      %p60 = scmp.ne.s32.totalorder %s43, %s59
      %p61 = scmp.eq.s32.totalorder %s35, 0
      %p62 = por %p60, %p61
      %s64 = sadd.s32 %s63, 1
      %p67 = scmp.eq.s32.totalorder %s29, 1
      %p68 = scmp.ne.s32.totalorder %s63, %s65
      %p69 = scmp.eq.s32.totalorder %s29, 0
      %p70 = por %p68, %p69
      %p71 = scmp.ne.s32.totalorder %s63, %s65
      %p72 = scmp.eq.s32.totalorder %s34, 1
      %p73 = por %p71, %p72
      %p74 = scmp.ne.s32.totalorder %s65, %s66
      %p75 = scmp.eq.s32.totalorder %s34, 0
      %p76 = por %p74, %p75
      %p77 = scmp.ne.s32.totalorder %s65, %s66
      %p78 = scmp.eq.s32.totalorder %s35, 1
      %p79 = por %p77, %p78
      %p81 = scmp.ne.s32.totalorder %s66, %s80
      %p82 = scmp.eq.s32.totalorder %s35, 0
      %p83 = por %p81, %p82
      %s85 = sadd.s32 %s84, 1
      %p88 = scmp.eq.s32.totalorder %s29, 1
      %p89 = scmp.ne.s32.totalorder %s84, %s86
      %p90 = scmp.eq.s32.totalorder %s29, 0
      %p91 = por %p89, %p90
      %p92 = scmp.ne.s32.totalorder %s84, %s86
      %p93 = scmp.eq.s32.totalorder %s34, 1
      %p94 = por %p92, %p93
      %p95 = scmp.ne.s32.totalorder %s86, %s87
      %p96 = scmp.eq.s32.totalorder %s34, 0
      %p97 = por %p95, %p96
      %p98 = scmp.ne.s32.totalorder %s86, %s87
      %p99 = scmp.eq.s32.totalorder %s35, 1
      %p100 = por %p98, %p99
      %p102 = scmp.ne.s32.totalorder %s87, %s101
      %p103 = scmp.eq.s32.totalorder %s35, 0
      %p104 = por %p102, %p103
      %s106 = sadd.s32 %s105, 1
      %p109 = scmp.eq.s32.totalorder %s29, 1
      %p110 = scmp.ne.s32.totalorder %s105, %s107
      %p111 = scmp.eq.s32.totalorder %s29, 0
      %p112 = por %p110, %p111
      %p113 = scmp.ne.s32.totalorder %s105, %s107
      %p114 = scmp.eq.s32.totalorder %s34, 1
      %p115 = por %p113, %p114
      %p116 = scmp.ne.s32.totalorder %s107, %s108
      %p117 = scmp.eq.s32.totalorder %s34, 0
      %p118 = por %p116, %p117
      %p119 = scmp.ne.s32.totalorder %s107, %s108
      %p120 = scmp.eq.s32.totalorder %s35, 1
      %p121 = por %p119, %p120
      %p123 = scmp.ne.s32.totalorder %s108, %s122
      %p124 = scmp.eq.s32.totalorder %s35, 0
      %p125 = por %p123, %p124
      %s127 = sadd.s32 %s126, 1
      %p130 = scmp.eq.s32.totalorder %s29, 1
      %p131 = scmp.ne.s32.totalorder %s126, %s128
      %p132 = scmp.eq.s32.totalorder %s29, 0
      %p133 = por %p131, %p132
      %p134 = scmp.ne.s32.totalorder %s126, %s128
      %p135 = scmp.eq.s32.totalorder %s34, 1
      %p136 = por %p134, %p135
      %p137 = scmp.ne.s32.totalorder %s128, %s129
      %p138 = scmp.eq.s32.totalorder %s34, 0
      %p139 = por %p137, %p138
      %p140 = scmp.ne.s32.totalorder %s128, %s129
      %p141 = scmp.eq.s32.totalorder %s35, 1
      %p142 = por %p140, %p141
      %p144 = scmp.ne.s32.totalorder %s129, %s143
      %p145 = scmp.eq.s32.totalorder %s35, 0
      %p146 = por %p144, %p145
      %s148 = sadd.s32 %s147, 1
      %p151 = scmp.eq.s32.totalorder %s29, 1
      %p152 = scmp.ne.s32.totalorder %s147, %s149
      %p153 = scmp.eq.s32.totalorder %s29, 0
      %p154 = por %p152, %p153
      %p155 = scmp.ne.s32.totalorder %s147, %s149
      %p156 = scmp.eq.s32.totalorder %s34, 1
      %p157 = por %p155, %p156
      %p158 = scmp.ne.s32.totalorder %s149, %s150
      %p159 = scmp.eq.s32.totalorder %s34, 0
      %p160 = por %p158, %p159
      %p161 = scmp.ne.s32.totalorder %s149, %s150
      %p162 = scmp.eq.s32.totalorder %s35, 1
      %p163 = por %p161, %p162
      %p165 = scmp.ne.s32.totalorder %s150, %s164
      %p166 = scmp.eq.s32.totalorder %s35, 0
      %p167 = por %p165, %p166
      %s169 = sadd.s32 %s168, 1
      %p172 = scmp.eq.s32.totalorder %s29, 1
      %p173 = scmp.ne.s32.totalorder %s168, %s170
      %p174 = scmp.eq.s32.totalorder %s29, 0
      %p175 = por %p173, %p174
      %p176 = scmp.ne.s32.totalorder %s168, %s170
      %p177 = scmp.eq.s32.totalorder %s34, 1
      %p178 = por %p176, %p177
      %p179 = scmp.ne.s32.totalorder %s170, %s171
      %p180 = scmp.eq.s32.totalorder %s34, 0
      %p181 = por %p179, %p180
      %p182 = scmp.ne.s32.totalorder %s170, %s171
      %p183 = scmp.eq.s32.totalorder %s35, 1
      %p184 = por %p182, %p183
      %p186 = scmp.ne.s32.totalorder %s171, %s185
      %p187 = scmp.eq.s32.totalorder %s35, 0
      %p188 = por %p186, %p187
      %s190 = sadd.s32 %s189, 1
      %p193 = scmp.eq.s32.totalorder %s29, 1
      %p194 = scmp.ne.s32.totalorder %s189, %s191
      %p195 = scmp.eq.s32.totalorder %s29, 0
      %p196 = por %p194, %p195
      %p197 = scmp.ne.s32.totalorder %s189, %s191
      %p198 = scmp.eq.s32.totalorder %s34, 1
      %p199 = por %p197, %p198
      %p200 = scmp.ne.s32.totalorder %s191, %s192
      %p201 = scmp.eq.s32.totalorder %s34, 0
      %p202 = por %p200, %p201
      %p203 = scmp.ne.s32.totalorder %s191, %s192
      %p204 = scmp.eq.s32.totalorder %s35, 1
      %p205 = por %p203, %p204
      %p207 = scmp.ne.s32.totalorder %s192, %s206
      %p208 = scmp.eq.s32.totalorder %s35, 0
      %p209 = por %p207, %p208
      %s211 = sadd.s32 %s210, 1
      %p214 = scmp.eq.s32.totalorder %s29, 1
      %p215 = scmp.ne.s32.totalorder %s210, %s212
      %p216 = scmp.eq.s32.totalorder %s29, 0
      %p217 = por %p215, %p216
      %p218 = scmp.ne.s32.totalorder %s210, %s212
      %p219 = scmp.eq.s32.totalorder %s34, 1
      %p220 = por %p218, %p219
      %p221 = scmp.ne.s32.totalorder %s212, %s213
      %p222 = scmp.eq.s32.totalorder %s34, 0
      %p223 = por %p221, %p222
      %p224 = scmp.ne.s32.totalorder %s212, %s213
      %p225 = scmp.eq.s32.totalorder %s35, 1
      %p226 = por %p224, %p225
      %p228 = scmp.ne.s32.totalorder %s213, %s227
      %p229 = scmp.eq.s32.totalorder %s35, 0
      %p230 = por %p228, %p229
      %s232 = sadd.s32 %s231, 1
      %p235 = scmp.eq.s32.totalorder %s29, 1
      %p236 = scmp.ne.s32.totalorder %s231, %s233
      %p237 = scmp.eq.s32.totalorder %s29, 0
      %p238 = por %p236, %p237
      %p239 = scmp.ne.s32.totalorder %s231, %s233
      %p240 = scmp.eq.s32.totalorder %s34, 1
      %p241 = por %p239, %p240
      %p242 = scmp.ne.s32.totalorder %s233, %s234
      %p243 = scmp.eq.s32.totalorder %s34, 0
      %p244 = por %p242, %p243
      %p245 = scmp.ne.s32.totalorder %s233, %s234
      %p246 = scmp.eq.s32.totalorder %s35, 1
      %p247 = por %p245, %p246
      %p249 = scmp.ne.s32.totalorder %s234, %s248
      %p250 = scmp.eq.s32.totalorder %s35, 0
      %p251 = por %p249, %p250
      %s253 = sadd.s32 %s252, 1
      %p256 = scmp.eq.s32.totalorder %s29, 1
      %p257 = scmp.ne.s32.totalorder %s252, %s254
      %p258 = scmp.eq.s32.totalorder %s29, 0
      %p259 = por %p257, %p258
      %p260 = scmp.ne.s32.totalorder %s252, %s254
      %p261 = scmp.eq.s32.totalorder %s34, 1
      %p262 = por %p260, %p261
      %p263 = scmp.ne.s32.totalorder %s254, %s255
      %p264 = scmp.eq.s32.totalorder %s34, 0
      %p265 = por %p263, %p264
      %p266 = scmp.ne.s32.totalorder %s254, %s255
      %p267 = scmp.eq.s32.totalorder %s35, 1
      %p268 = por %p266, %p267
      %p270 = scmp.ne.s32.totalorder %s255, %s269
      %p271 = scmp.eq.s32.totalorder %s35, 0
      %p272 = por %p270, %p271
      %s274 = sadd.s32 %s273, 1
      %p277 = scmp.eq.s32.totalorder %s29, 1
      %p278 = scmp.ne.s32.totalorder %s273, %s275
      %p279 = scmp.eq.s32.totalorder %s29, 0
      %p280 = por %p278, %p279
      %p281 = scmp.ne.s32.totalorder %s273, %s275
      %p282 = scmp.eq.s32.totalorder %s34, 1
      %p283 = por %p281, %p282
      %p284 = scmp.ne.s32.totalorder %s275, %s276
      %p285 = scmp.eq.s32.totalorder %s34, 0
      %p286 = por %p284, %p285
      %p287 = scmp.ne.s32.totalorder %s275, %s276
      %p288 = scmp.eq.s32.totalorder %s35, 1
      %p289 = por %p287, %p288
      %p291 = scmp.ne.s32.totalorder %s276, %s290
      %p292 = scmp.eq.s32.totalorder %s35, 0
      %p293 = por %p291, %p292
      %s294 = ssub.s32 %s29, %s36
      %p295 = scmp.eq.s32.totalorder %s294, 0
      %s297 = sadd.s32 %s296, 1
      %s298 = scalar_select %p295, %s296, %s297
      %p301 = pneg %p295
      %p302 = scmp.eq.s32.totalorder %s29, 1
      %p303 = por %p301, %p302
      %p304 = scmp.ne.s32.totalorder %s296, %s299
      %p305 = scmp.eq.s32.totalorder %s29, 0
      %p306 = por %p304, %p305
      %p307 = scmp.ne.s32.totalorder %s296, %s299
      %p308 = scmp.eq.s32.totalorder %s34, 1
      %p309 = por %p307, %p308
      %p310 = scmp.ne.s32.totalorder %s299, %s300
      %p311 = scmp.eq.s32.totalorder %s34, 0
      %p312 = por %p310, %p311
      %p313 = scmp.ne.s32.totalorder %s299, %s300
      %p314 = scmp.eq.s32.totalorder %s35, 1
      %p315 = por %p313, %p314
      %p317 = scmp.ne.s32.totalorder %s300, %s316
      %p318 = scmp.eq.s32.totalorder %s35, 0
      %p319 = por %p317, %p318
      %s320 = ssub.s32 %s29, %s36
      %p321 = scmp.eq.s32.totalorder %s320, 0
      %s323 = sadd.s32 %s322, 1
      %s324 = scalar_select %p321, %s322, %s323
      %p327 = pneg %p321
      %p328 = scmp.eq.s32.totalorder %s29, 1
      %p329 = por %p327, %p328
      %p330 = scmp.ne.s32.totalorder %s322, %s325
      %p331 = scmp.eq.s32.totalorder %s29, 0
      %p332 = por %p330, %p331
      %p333 = scmp.ne.s32.totalorder %s322, %s325
      %p334 = scmp.eq.s32.totalorder %s34, 1
      %p335 = por %p333, %p334
      %p336 = scmp.ne.s32.totalorder %s325, %s326
      %p337 = scmp.eq.s32.totalorder %s34, 0
      %p338 = por %p336, %p337
      %p339 = scmp.ne.s32.totalorder %s325, %s326
      %p340 = scmp.eq.s32.totalorder %s35, 1
      %p341 = por %p339, %p340
      %p343 = scmp.ne.s32.totalorder %s326, %s342
      %p344 = scmp.eq.s32.totalorder %s35, 0
      %p345 = por %p343, %p344
      %s346 = ssub.s32 %s29, %s36
      %p347 = scmp.eq.s32.totalorder %s346, 0
      %s349 = sadd.s32 %s348, 1
      %s350 = scalar_select %p347, %s348, %s349
      %p353 = pneg %p347
      %p354 = scmp.eq.s32.totalorder %s29, 1
      %p355 = por %p353, %p354
      %p356 = scmp.ne.s32.totalorder %s348, %s351
      %p357 = scmp.eq.s32.totalorder %s29, 0
      %p358 = por %p356, %p357
      %p359 = scmp.ne.s32.totalorder %s348, %s351
      %p360 = scmp.eq.s32.totalorder %s34, 1
      %p361 = por %p359, %p360
      %p362 = scmp.ne.s32.totalorder %s351, %s352
      %p363 = scmp.eq.s32.totalorder %s34, 0
      %p364 = por %p362, %p363
      %p365 = scmp.ne.s32.totalorder %s351, %s352
      %p366 = scmp.eq.s32.totalorder %s35, 1
      %p367 = por %p365, %p366
      %p369 = scmp.ne.s32.totalorder %s352, %s368
      %p370 = scmp.eq.s32.totalorder %s35, 0
      %p371 = por %p369, %p370
      %s372 = ssub.s32 %s29, %s36
      %p373 = scmp.eq.s32.totalorder %s372, 0
      %s375 = sadd.s32 %s374, 1
      %s376 = scalar_select %p373, %s374, %s375
      %p379 = pneg %p373
      %p380 = scmp.eq.s32.totalorder %s29, 1
      %p381 = por %p379, %p380
      %p382 = scmp.ne.s32.totalorder %s374, %s377
      %p383 = scmp.eq.s32.totalorder %s29, 0
      %p384 = por %p382, %p383
      %p385 = scmp.ne.s32.totalorder %s374, %s377
      %p386 = scmp.eq.s32.totalorder %s34, 1
      %p387 = por %p385, %p386
      %p388 = scmp.ne.s32.totalorder %s377, %s378
      %p389 = scmp.eq.s32.totalorder %s34, 0
      %p390 = por %p388, %p389
      %p391 = scmp.ne.s32.totalorder %s377, %s378
      %p392 = scmp.eq.s32.totalorder %s35, 1
      %p393 = por %p391, %p392
      %p395 = scmp.ne.s32.totalorder %s378, %s394
      %p396 = scmp.eq.s32.totalorder %s35, 0
      %p397 = por %p395, %p396
      %s398 = ssub.s32 %s29, %s36
      %p399 = scmp.eq.s32.totalorder %s398, 0
      %s401 = sadd.s32 %s400, 1
      %s402 = scalar_select %p399, %s400, %s401
      %p405 = pneg %p399
      %p406 = scmp.eq.s32.totalorder %s29, 1
      %p407 = por %p405, %p406
      %p408 = scmp.ne.s32.totalorder %s400, %s403
      %p409 = scmp.eq.s32.totalorder %s29, 0
      %p410 = por %p408, %p409
      %p411 = scmp.ne.s32.totalorder %s400, %s403
      %p412 = scmp.eq.s32.totalorder %s34, 1
      %p413 = por %p411, %p412
      %p414 = scmp.ne.s32.totalorder %s403, %s404
      %p415 = scmp.eq.s32.totalorder %s34, 0
      %p416 = por %p414, %p415
      %p417 = scmp.ne.s32.totalorder %s403, %s404
      %p418 = scmp.eq.s32.totalorder %s35, 1
      %p419 = por %p417, %p418
      %p421 = scmp.ne.s32.totalorder %s404, %s420
      %p422 = scmp.eq.s32.totalorder %s35, 0
      %p423 = por %p421, %p422
      %p424 = scmp.le.s32.totalorder 1, %s29
      %p425 = scmp.lt.s32.totalorder %s29, 3
      %p426 = pnand %p424, %p425
      %p427 = pneg %p426
      // Predicated region
      $region9: #{encoder_forward.1} parent=5 // pred_check
        _
      $region10: #{encoder_forward.1} parent=5 // pred_check_branch
        %429 = sbr.rel (%p426) target = $region12
      $region11: #{encoder_forward.1} parent=5 // pred_region
        %s430 = ssub.s32 %s29, 1
        // Predicated region
        $region13: #{encoder_forward.1} parent=11 // pred_check
          %p431 = pneg %p76
        $region14: #{encoder_forward.1} parent=11 // pred_check_branch
          %433 = sbr.rel (%p431) target = $region16
        $region15: #{encoder_forward.1} parent=11 // pred_region
          _
        $region16: #{encoder_forward.1} parent=11 // pred_fallthru
          _
        // Predicated region
        $region17: #{encoder_forward.1} parent=11 // pred_check
          %p434 = pneg %p97
        $region18: #{encoder_forward.1} parent=11 // pred_check_branch
          %436 = sbr.rel (%p434) target = $region20
        $region19: #{encoder_forward.1} parent=11 // pred_region
          _
        $region20: #{encoder_forward.1} parent=11 // pred_fallthru
          _
        // Predicated region
        $region21: #{encoder_forward.1} parent=11 // pred_check
          %p437 = pneg %p118
        $region22: #{encoder_forward.1} parent=11 // pred_check_branch
          %439 = sbr.rel (%p437) target = $region24
        $region23: #{encoder_forward.1} parent=11 // pred_region
          _
        $region24: #{encoder_forward.1} parent=11 // pred_fallthru
          _
        // Predicated region
        $region25: #{encoder_forward.1} parent=11 // pred_check
          %p440 = pneg %p139
        $region26: #{encoder_forward.1} parent=11 // pred_check_branch
          %442 = sbr.rel (%p440) target = $region28
        $region27: #{encoder_forward.1} parent=11 // pred_region
          _
        $region28: #{encoder_forward.1} parent=11 // pred_fallthru
          _
        // Predicated region
        $region29: #{encoder_forward.1} parent=11 // pred_check
          %p443 = pneg %p160
        $region30: #{encoder_forward.1} parent=11 // pred_check_branch
          %445 = sbr.rel (%p443) target = $region32
        $region31: #{encoder_forward.1} parent=11 // pred_region
          _
        $region32: #{encoder_forward.1} parent=11 // pred_fallthru
          _
        // Predicated region
        $region33: #{encoder_forward.1} parent=11 // pred_check
          %p446 = pneg %p181
        $region34: #{encoder_forward.1} parent=11 // pred_check_branch
          %448 = sbr.rel (%p446) target = $region36
        $region35: #{encoder_forward.1} parent=11 // pred_region
          _
        $region36: #{encoder_forward.1} parent=11 // pred_fallthru
          _
        // Predicated region
        $region37: #{encoder_forward.1} parent=11 // pred_check
          %p449 = pneg %p202
        $region38: #{encoder_forward.1} parent=11 // pred_check_branch
          %451 = sbr.rel (%p449) target = $region40
        $region39: #{encoder_forward.1} parent=11 // pred_region
          _
        $region40: #{encoder_forward.1} parent=11 // pred_fallthru
          _
        // Predicated region
        $region41: #{encoder_forward.1} parent=11 // pred_check
          %p452 = pneg %p223
        $region42: #{encoder_forward.1} parent=11 // pred_check_branch
          %454 = sbr.rel (%p452) target = $region44
        $region43: #{encoder_forward.1} parent=11 // pred_region
          _
        $region44: #{encoder_forward.1} parent=11 // pred_fallthru
          _
        // Predicated region
        $region45: #{encoder_forward.1} parent=11 // pred_check
          %p455 = pneg %p244
        $region46: #{encoder_forward.1} parent=11 // pred_check_branch
          %457 = sbr.rel (%p455) target = $region48
        $region47: #{encoder_forward.1} parent=11 // pred_region
          _
        $region48: #{encoder_forward.1} parent=11 // pred_fallthru
          _
        // Predicated region
        $region49: #{encoder_forward.1} parent=11 // pred_check
          %p458 = pneg %p265
        $region50: #{encoder_forward.1} parent=11 // pred_check_branch
          %460 = sbr.rel (%p458) target = $region52
        $region51: #{encoder_forward.1} parent=11 // pred_region
          _
        $region52: #{encoder_forward.1} parent=11 // pred_fallthru
          _
        // Predicated region
        $region53: #{encoder_forward.1} parent=11 // pred_check
          %p461 = pneg %p286
        $region54: #{encoder_forward.1} parent=11 // pred_check_branch
          %463 = sbr.rel (%p461) target = $region56
        $region55: #{encoder_forward.1} parent=11 // pred_region
          _
        $region56: #{encoder_forward.1} parent=11 // pred_fallthru
          _
      $region12: #{encoder_forward.1} parent=5 // pred_fallthru
        _
      %p464 = scmp.lt.s32.totalorder %s29, 2
      // Predicated region
      $region57: #{encoder_forward.1} parent=5 // pred_check
        %p465 = pneg %p464
      $region58: #{encoder_forward.1} parent=5 // pred_check_branch
        %467 = sbr.rel (%p465) target = $region60
      $region59: #{encoder_forward.1} parent=5 // pred_region
        // Predicated region
        $region61: #{encoder_forward.1} parent=59 // pred_check
          %p468 = pneg %p49
        $region62: #{encoder_forward.1} parent=59 // pred_check_branch
          %470 = sbr.rel (%p468) target = $region64
        $region63: #{encoder_forward.1} parent=59 // pred_region
          %p471 = scmp.lt.s32.totalorder %s29, 1
          %s472 = scalar_select %p471, %s29, 1
          %s473 = scalar_lea.vmem %s0, %s472
        $region64: #{encoder_forward.1} parent=59 // pred_fallthru
          _
      $region60: #{encoder_forward.1} parent=5 // pred_fallthru
        _
      %p474 = scmp.le.s32.totalorder 1, %s29
      %p475 = scmp.lt.s32.totalorder %s29, 3
      %p476 = pnand %p474, %p475
      %p477 = pneg %p476
      // Predicated region
      $region65: #{encoder_forward.1} parent=5 // pred_check
        _
      $region66: #{encoder_forward.1} parent=5 // pred_check_branch
        %479 = sbr.rel (%p476) target = $region68
      $region67: #{encoder_forward.1} parent=5 // pred_region
        %s480 = ssub.s32 %s29, 1
        %p481 = scmp.lt.s32.totalorder %s34, 1
        %s482 = scalar_select %p481, %s34, 1
        %s483 = scalar_lea.vmem %s0, %s482
        %p484 = pneg %p55
        %p485 = pneg %p52
        %p486 = pneg %p76
        %p487 = pneg %p73
        %p488 = pneg %p97
        %p489 = pneg %p94
        %p490 = pneg %p118
        %p491 = pneg %p115
        %p492 = pneg %p139
        %p493 = pneg %p136
        %p494 = pneg %p160
        %p495 = pneg %p157
        %p496 = pneg %p181
        %p497 = pneg %p178
        %p498 = pneg %p202
        %p499 = pneg %p199
        %p500 = pneg %p223
        %p501 = pneg %p220
        %p502 = pneg %p244
        %p503 = pneg %p241
        %p504 = pneg %p265
        %p505 = pneg %p262
        %p506 = pneg %p286
        %p507 = pneg %p283
        %p508 = pneg %p312
        %p509 = pneg %p309
        %s510 = sand.u32 %s299, 1
        %s511 = scalar_lea.sflag [#allocation3], %s510
        %s512 = sand.u32 %s299, 1
        %s513 = smul.addr %s512, 8
        %s514 = scalar_lea.vmem [#allocation2], %s513
        %p515 = pneg %p338
        %p516 = pneg %p335
        %s517 = sand.u32 %s325, 1
        %s518 = scalar_lea.sflag [#allocation5], %s517
        %s519 = sand.u32 %s325, 1
        %s520 = smul.addr %s519, 16
        %s521 = scalar_lea.vmem [#allocation4], %s520
        %p522 = pneg %p364
        %p523 = pneg %p361
        %p524 = scmp.lt.s32.totalorder %s34, 1
        %s525 = scalar_select %p524, %s34, 1
        %s526 = smul.addr %s525, 4
        %s527 = smul.addr %s526, 8
        %s528 = scalar_lea.vmem %s14, %s527
        %p529 = pneg %p390
        %p530 = pneg %p387
        %p531 = scmp.lt.s32.totalorder %s34, 1
        %s532 = scalar_select %p531, %s34, 1
        %s533 = smul.addr %s532, 4
        %s534 = smul.addr %s533, 8
        %s535 = scalar_lea.vmem %s15, %s534
        %p536 = pneg %p416
        %p537 = pneg %p413
        %p538 = scmp.lt.s32.totalorder %s34, 1
        %s539 = scalar_select %p538, %s34, 1
        %s540 = smul.addr %s539, 8
        %s541 = smul.addr %s540, 8
        %s542 = scalar_lea.vmem %s16, %s541
        %p543 = scmp.lt.s32.totalorder %s34, 1
        %s544 = scalar_select %p543, %s34, 1
        %s545 = scalar_lea.vmem %s0, %s544
        %p546 = scmp.lt.s32.totalorder %s34, 1
        %s547 = scalar_select %p546, %s34, 1
        %s548 = smul.addr %s547, 4
        %s549 = smul.addr %s548, 8
        %s550 = scalar_lea.vmem %s14, %s549
        %p551 = scmp.lt.s32.totalorder %s34, 1
        %s552 = scalar_select %p551, %s34, 1
        %s553 = smul.addr %s552, 4
        %s554 = smul.addr %s553, 8
        %s555 = scalar_lea.vmem %s15, %s554
        %p556 = scmp.lt.s32.totalorder %s34, 1
        %s557 = scalar_select %p556, %s34, 1
        %s558 = smul.addr %s557, 8
        %s559 = smul.addr %s558, 8
        %s560 = scalar_lea.vmem %s16, %s559
        %v561 = vld [vmem:[%s545] sm:$0x1]
        %v562 = vlaneseq
        %v563 = vand.u32 %v562, 127
        %vm564 = vcmp.eq.s32.totalorder %v563, 0
        %vm565 = vcmp.eq.s32.totalorder %v563, 63
        %vm566 = vcmask 1048064
        %567 = vrot.lane.b32.xlu0 %v561, 64
        %v568 = vpop.permute.xlu0 %567
        %v569 = vsel %vm566, %v568, %v561
        %570 = vrot.lane.b32.xlu0 %v569, 64
        %v571 = vpop.permute.xlu0 %570
        %v572 = vsel %vm566, %v571, %v561
        %574 = vrot.lane.b32.xlu0 %v572, 65
        %v575 = vpop.permute.xlu0 %574
        %v577 = vsel %vm564, 0.0, %v575
        %578 = vrot.lane.b32.xlu0 %v572, 127
        %v579 = vpop.permute.xlu0 %578
        %v581 = vsel %vm565, 0.0, %v579
        %v582 = vld [vmem:[%s1] sm:$0xff]
        %584 = vset.pattern.permute.xlu0 0
        %585 = vperm.xlu0 %584, %v582
        %v586 = vpop.permute.xlu0 %585
        %v588 = vlaneseq
        %v589 = vshrl.u32 %v588, 7
        %v590 = vsub.s32 0, %v589
        %v591 = vrot.slane %v577, %v590
        %v592 = vmul.f32 %v586, %v591
        %s593 = scalar_lea.vmem %s1, 8
        %v594 = vld [vmem:[%s593] sm:$0xff]
        %596 = vset.pattern.permute.xlu0 0
        %597 = vperm.xlu0 %596, %v594
        %v598 = vpop.permute.xlu0 %597
        %v601 = vlaneseq
        %v602 = vshrl.u32 %v601, 7
        %v603 = vsub.s32 0, %v602
        %v604 = vrot.slane %v561, %v603
        %v606 = vmul.f32 %v598, %v604
        %v607 = vadd.f32 %v592, %v606
        %s608 = scalar_lea.vmem %s1, 16
        %v609 = vld [vmem:[%s608] sm:$0xff]
        %611 = vset.pattern.permute.xlu0 0
        %612 = vperm.xlu0 %611, %v609
        %v613 = vpop.permute.xlu0 %612
        %v615 = vlaneseq
        %v616 = vshrl.u32 %v615, 7
        %v617 = vsub.s32 0, %v616
        %v618 = vrot.slane %v581, %v617
        %v619 = vmul.f32 %v613, %v618
        %v620 = vadd.f32 %v607, %v619
        %v621 = vld [vmem:[%s11] sm:$0xff]
        %623 = vset.pattern.permute.xlu0 0
        %624 = vperm.xlu0 %623, %v621
        %v625 = vpop.permute.xlu0 %624
        %v627 = vadd.f32 %v620, %v625
        %v628 = vmax.f32 %v627, 0.0
        %629 = vrot.lane.b32.xlu0 %v628, 64
        %v630 = vpop.permute.xlu0 %629
        %v631 = vsel %vm566, %v630, %v628
        %632 = vrot.lane.b32.xlu0 %v631, 64
        %v633 = vpop.permute.xlu0 %632
        %v634 = vsel %vm566, %v633, %v628
        %v635 = vsel %vm564, 1, 0
        %vm636 = vcmp.eq.s32.totalorder %v635, 1
        %638 = vrot.lane.b32.xlu0 %v634, 65
        %v639 = vpop.permute.xlu0 %638
        %v641 = vsel %vm636, 0.0, %v639
        %v642 = vsel %vm565, 1, 0
        %vm643 = vcmp.eq.s32.totalorder %v642, 1
        %644 = vrot.lane.b32.xlu0 %v634, 127
        %v645 = vpop.permute.xlu0 %644
        %v647 = vsel %vm643, 0.0, %v645
        %s648 = scalar_lea.vmem %s2, 8
        %v649 = vld [vmem:[%s648] sm:$0xff]
        %v650 = vld [vmem:[%s2] sm:$0xff]
        %vm651 = vcmask 64512
        %v653 = vsel %vm651, %v650, 0
        %655 = vmatprep.subr.mxu0 0.0
        %656 = vmatpush1.msra.mxu0 0.0
        %657 = vmatprep.subr.mxu0 0.0
        %658 = vmatpush1.msra.mxu0 0.0
        %659 = vmatprep.subr.mxu0 0.0
        %660 = vmatpush1.msra.mxu0 0.0
        %661 = vmatprep.subr.mxu0 0.0
        %662 = vmatpush1.msra.mxu0 0.0
        %663 = vmatprep.subr.mxu0 0.0
        %664 = vmatpush1.msra.mxu0 0.0
        %665 = vmatprep.subr.mxu0 0.0
        %666 = vmatpush1.msra.mxu0 0.0
        %667 = vmatprep.subr.mxu0 0.0
        %668 = vmatpush1.msra.mxu0 0.0
        %669 = vmatprep.subr.mxu0 0.0
        %670 = vmatpush1.msra.mxu0 0.0
        %671 = vmatprep.subr.mxu0 0.0
        %672 = vmatpush1.msra.mxu0 0.0
        %673 = vmatprep.subr.mxu0 0.0
        %674 = vmatpush1.msra.mxu0 0.0
        %675 = vmatprep.subr.mxu0 0.0
        %676 = vmatpush1.msra.mxu0 0.0
        %677 = vmatprep.subr.mxu0 0.0
        %678 = vmatpush1.msra.mxu0 0.0
        %679 = vmatprep.subr.mxu0 0.0
        %680 = vmatpush1.msra.mxu0 0.0
        %681 = vmatprep.subr.mxu0 0.0
        %682 = vmatpush1.msra.mxu0 0.0
        %683 = vmatprep.subr.mxu0 0.0
        %684 = vmatpush1.msra.mxu0 0.0
        %685 = vmatprep.subr.mxu0 0.0
        %686 = vmatpush1.msra.mxu0 %v641
        %687 = vmatprep.subr.mxu0 0.0
        %688 = vmatpush2.msra.mxu0 0.0
        %689 = vmatprep.subr.mxu0 0.0
        %690 = vmatpush2.msra.mxu0 0.0
        %691 = vmatprep.subr.mxu0 0.0
        %692 = vmatpush2.msra.mxu0 0.0
        %693 = vmatprep.subr.mxu0 0.0
        %694 = vmatpush2.msra.mxu0 0.0
        %695 = vmatprep.subr.mxu0 0.0
        %696 = vmatpush2.msra.mxu0 0.0
        %697 = vmatprep.subr.mxu0 0.0
        %698 = vmatpush2.msra.mxu0 0.0
        %699 = vmatprep.subr.mxu0 0.0
        %700 = vmatpush2.msra.mxu0 0.0
        %701 = vmatprep.subr.mxu0 0.0
        %702 = vmatpush2.msra.mxu0 0.0
        %703 = vmatprep.subr.mxu0 0.0
        %704 = vmatpush2.msra.mxu0 0.0
        %705 = vmatprep.subr.mxu0 0.0
        %706 = vmatpush2.msra.mxu0 0.0
        %707 = vmatprep.subr.mxu0 0.0
        %708 = vmatpush2.msra.mxu0 0.0
        %709 = vmatprep.subr.mxu0 0.0
        %710 = vmatpush2.msra.mxu0 0.0
        %711 = vmatprep.subr.mxu0 0.0
        %712 = vmatpush2.msra.mxu0 0.0
        %713 = vmatprep.subr.mxu0 0.0
        %714 = vmatpush2.msra.mxu0 0.0
        %715 = vmatprep.subr.mxu0 0.0
        %716 = vmatpush2.msra.mxu0 0.0
        %717 = vmatprep.subr.mxu0 0.0
        %718 = vmatpush2.msra.mxu0 0.0
        %719 = vmatprep.mubr.f32.mxu0 0.0
        %720 = vmatmul.mubr.f32.gmra.mxu0 %v653
        %v721 = vpop.f32.mrf.mxu0
        %v722 = vadd.f32 0.0, %v721
        %v723 = vpop.f32.mrf.mxu0
        %724 = vdwg.mxu0
        %v726 = vsel %vm651, %v649, 0
        %728 = vmatprep.subr.mxu0 0.0
        %729 = vmatpush1.msra.mxu0 0.0
        %730 = vmatprep.subr.mxu0 0.0
        %731 = vmatpush1.msra.mxu0 0.0
        %732 = vmatprep.subr.mxu0 0.0
        %733 = vmatpush1.msra.mxu0 0.0
        %734 = vmatprep.subr.mxu0 0.0
        %735 = vmatpush1.msra.mxu0 0.0
        %736 = vmatprep.subr.mxu0 0.0
        %737 = vmatpush1.msra.mxu0 0.0
        %738 = vmatprep.subr.mxu0 0.0
        %739 = vmatpush1.msra.mxu0 0.0
        %740 = vmatprep.subr.mxu0 0.0
        %741 = vmatpush1.msra.mxu0 0.0
        %742 = vmatprep.subr.mxu0 0.0
        %743 = vmatpush1.msra.mxu0 0.0
        %744 = vmatprep.subr.mxu0 0.0
        %745 = vmatpush1.msra.mxu0 0.0
        %746 = vmatprep.subr.mxu0 0.0
        %747 = vmatpush1.msra.mxu0 0.0
        %748 = vmatprep.subr.mxu0 0.0
        %749 = vmatpush1.msra.mxu0 0.0
        %750 = vmatprep.subr.mxu0 0.0
        %751 = vmatpush1.msra.mxu0 0.0
        %752 = vmatprep.subr.mxu0 0.0
        %753 = vmatpush1.msra.mxu0 0.0
        %754 = vmatprep.subr.mxu0 0.0
        %755 = vmatpush1.msra.mxu0 0.0
        %756 = vmatprep.subr.mxu0 0.0
        %757 = vmatpush1.msra.mxu0 0.0
        %758 = vmatprep.subr.mxu0 0.0
        %759 = vmatpush1.msra.mxu0 %v628
        %760 = vmatprep.subr.mxu0 0.0
        %761 = vmatpush2.msra.mxu0 0.0
        %762 = vmatprep.subr.mxu0 0.0
        %763 = vmatpush2.msra.mxu0 0.0
        %764 = vmatprep.subr.mxu0 0.0
        %765 = vmatpush2.msra.mxu0 0.0
        %766 = vmatprep.subr.mxu0 0.0
        %767 = vmatpush2.msra.mxu0 0.0
        %768 = vmatprep.subr.mxu0 0.0
        %769 = vmatpush2.msra.mxu0 0.0
        %770 = vmatprep.subr.mxu0 0.0
        %771 = vmatpush2.msra.mxu0 0.0
        %772 = vmatprep.subr.mxu0 0.0
        %773 = vmatpush2.msra.mxu0 0.0
        %774 = vmatprep.subr.mxu0 0.0
        %775 = vmatpush2.msra.mxu0 0.0
        %776 = vmatprep.subr.mxu0 0.0
        %777 = vmatpush2.msra.mxu0 0.0
        %778 = vmatprep.subr.mxu0 0.0
        %779 = vmatpush2.msra.mxu0 0.0
        %780 = vmatprep.subr.mxu0 0.0
        %781 = vmatpush2.msra.mxu0 0.0
        %782 = vmatprep.subr.mxu0 0.0
        %783 = vmatpush2.msra.mxu0 0.0
        %784 = vmatprep.subr.mxu0 0.0
        %785 = vmatpush2.msra.mxu0 0.0
        %786 = vmatprep.subr.mxu0 0.0
        %787 = vmatpush2.msra.mxu0 0.0
        %788 = vmatprep.subr.mxu0 0.0
        %789 = vmatpush2.msra.mxu0 0.0
        %790 = vmatprep.subr.mxu0 0.0
        %791 = vmatpush2.msra.mxu0 0.0
        %792 = vmatprep.mubr.f32.mxu0 0.0
        %793 = vmatmul.mubr.f32.gmra.mxu0 %v726
        %v794 = vpop.f32.mrf.mxu0
        %v795 = vadd.f32 %v722, %v794
        %v796 = vpop.f32.mrf.mxu0
        %797 = vdwg.mxu0
        %s798 = scalar_lea.vmem %s2, 16
        %v799 = vld [vmem:[%s798] sm:$0xff]
        %v801 = vsel %vm651, %v799, 0
        %803 = vmatprep.subr.mxu0 0.0
        %804 = vmatpush1.msra.mxu0 0.0
        %805 = vmatprep.subr.mxu0 0.0
        %806 = vmatpush1.msra.mxu0 0.0
        %807 = vmatprep.subr.mxu0 0.0
        %808 = vmatpush1.msra.mxu0 0.0
        %809 = vmatprep.subr.mxu0 0.0
        %810 = vmatpush1.msra.mxu0 0.0
        %811 = vmatprep.subr.mxu0 0.0
        %812 = vmatpush1.msra.mxu0 0.0
        %813 = vmatprep.subr.mxu0 0.0
        %814 = vmatpush1.msra.mxu0 0.0
        %815 = vmatprep.subr.mxu0 0.0
        %816 = vmatpush1.msra.mxu0 0.0
        %817 = vmatprep.subr.mxu0 0.0
        %818 = vmatpush1.msra.mxu0 0.0
        %819 = vmatprep.subr.mxu0 0.0
        %820 = vmatpush1.msra.mxu0 0.0
        %821 = vmatprep.subr.mxu0 0.0
        %822 = vmatpush1.msra.mxu0 0.0
        %823 = vmatprep.subr.mxu0 0.0
        %824 = vmatpush1.msra.mxu0 0.0
        %825 = vmatprep.subr.mxu0 0.0
        %826 = vmatpush1.msra.mxu0 0.0
        %827 = vmatprep.subr.mxu0 0.0
        %828 = vmatpush1.msra.mxu0 0.0
        %829 = vmatprep.subr.mxu0 0.0
        %830 = vmatpush1.msra.mxu0 0.0
        %831 = vmatprep.subr.mxu0 0.0
        %832 = vmatpush1.msra.mxu0 0.0
        %833 = vmatprep.subr.mxu0 0.0
        %834 = vmatpush1.msra.mxu0 %v647
        %835 = vmatprep.subr.mxu0 0.0
        %836 = vmatpush2.msra.mxu0 0.0
        %837 = vmatprep.subr.mxu0 0.0
        %838 = vmatpush2.msra.mxu0 0.0
        %839 = vmatprep.subr.mxu0 0.0
        %840 = vmatpush2.msra.mxu0 0.0
        %841 = vmatprep.subr.mxu0 0.0
        %842 = vmatpush2.msra.mxu0 0.0
        %843 = vmatprep.subr.mxu0 0.0
        %844 = vmatpush2.msra.mxu0 0.0
        %845 = vmatprep.subr.mxu0 0.0
        %846 = vmatpush2.msra.mxu0 0.0
        %847 = vmatprep.subr.mxu0 0.0
        %848 = vmatpush2.msra.mxu0 0.0
        %849 = vmatprep.subr.mxu0 0.0
        %850 = vmatpush2.msra.mxu0 0.0
        %851 = vmatprep.subr.mxu0 0.0
        %852 = vmatpush2.msra.mxu0 0.0
        %853 = vmatprep.subr.mxu0 0.0
        %854 = vmatpush2.msra.mxu0 0.0
        %855 = vmatprep.subr.mxu0 0.0
        %856 = vmatpush2.msra.mxu0 0.0
        %857 = vmatprep.subr.mxu0 0.0
        %858 = vmatpush2.msra.mxu0 0.0
        %859 = vmatprep.subr.mxu0 0.0
        %860 = vmatpush2.msra.mxu0 0.0
        %861 = vmatprep.subr.mxu0 0.0
        %862 = vmatpush2.msra.mxu0 0.0
        %863 = vmatprep.subr.mxu0 0.0
        %864 = vmatpush2.msra.mxu0 0.0
        %865 = vmatprep.subr.mxu0 0.0
        %866 = vmatpush2.msra.mxu0 0.0
        %867 = vmatprep.mubr.f32.mxu0 0.0
        %868 = vmatmul.mubr.f32.gmra.mxu0 %v801
        %v869 = vpop.f32.mrf.mxu0
        %v870 = vadd.f32 0.0, %v869
        %v871 = vpop.f32.mrf.mxu0
        %872 = vdwg.mxu0
        %v873 = vadd.f32 %v795, %v870
        %874 = vset.pattern.permute.xlu0 1
        %875 = vperm.xlu0 %874, %v621
        %v876 = vpop.permute.xlu0 %875
        %v878 = vadd.f32 %v873, %v876
        %v879 = vmax.f32 %v878, 0.0
        %vm880 = vcmask 523264
        %881 = vst.msk [vmem:[%s514] sm:$0xff] %vm880, %v879
        %v882 = vlaneseq
        %v883 = vshrl.u32 %v882, 7
        %v884 = vadd.s32 %v883, 8
        %v885 = vadd.s32 %v883, 16
        %v886 = vadd.s32 %v883, 24
        %v887 = vadd.s32 %v883, 32
        %v888 = vadd.s32 %v883, 40
        %v889 = vadd.s32 %v883, 48
        %v890 = vadd.s32 %v883, 56
        %v891 = vmul.u32 %v563, 2
        %vm892 = vcmp.eq.s32.totalorder %v883, %v891
        %vm893 = vcmp.eq.s32.totalorder %v884, %v891
        %vm894 = vcmp.eq.s32.totalorder %v885, %v891
        %vm895 = vcmp.eq.s32.totalorder %v886, %v891
        %vm896 = vcmp.eq.s32.totalorder %v887, %v891
        %vm897 = vcmp.eq.s32.totalorder %v888, %v891
        %vm898 = vcmp.eq.s32.totalorder %v889, %v891
        %vm899 = vcmp.eq.s32.totalorder %v890, %v891
        %v900 = vsel %vm892, 1.0, 0.0
        %v901 = vsel %vm893, 1.0, 0.0
        %v902 = vsel %vm894, 1.0, 0.0
        %v903 = vsel %vm895, 1.0, 0.0
        %v904 = vsel %vm896, 1.0, 0.0
        %v905 = vsel %vm897, 1.0, 0.0
        %v906 = vsel %vm898, 1.0, 0.0
        %v907 = vsel %vm899, 1.0, 0.0
        %908 = vrot.lane.b32.xlu0 %v879, 64
        %v909 = vpop.permute.xlu0 %908
        %v910 = vsel %vm566, %v909, %v879
        %911 = vrot.lane.b32.xlu0 %v910, 64
        %v912 = vpop.permute.xlu0 %911
        %v913 = vsel %vm566, %v912, %v879
        %915 = vrot.lane.b32.xlu0 %v913, 127
        %v916 = vpop.permute.xlu0 %915
        %v918 = vmax.f32 %v879, %v916
        %v920 = vsel %vm880, %v918, 0
        %922 = vmatprep.subr.mxu0 0.0
        %923 = vmatpush1.msra.mxu0 0.0
        %924 = vmatprep.subr.mxu0 0.0
        %925 = vmatpush1.msra.mxu0 0.0
        %926 = vmatprep.subr.mxu0 0.0
        %927 = vmatpush1.msra.mxu0 0.0
        %928 = vmatprep.subr.mxu0 0.0
        %929 = vmatpush1.msra.mxu0 0.0
        %930 = vmatprep.subr.mxu0 0.0
        %931 = vmatpush1.msra.mxu0 0.0
        %932 = vmatprep.subr.mxu0 0.0
        %933 = vmatpush1.msra.mxu0 0.0
        %934 = vmatprep.subr.mxu0 0.0
        %935 = vmatpush1.msra.mxu0 0.0
        %936 = vmatprep.subr.mxu0 0.0
        %937 = vmatpush1.msra.mxu0 0.0
        %938 = vmatprep.subr.mxu0 0.0
        %939 = vmatpush1.msra.mxu0 %v907
        %940 = vmatprep.subr.mxu0 0.0
        %941 = vmatpush1.msra.mxu0 %v906
        %942 = vmatprep.subr.mxu0 0.0
        %943 = vmatpush1.msra.mxu0 %v905
        %944 = vmatprep.subr.mxu0 0.0
        %945 = vmatpush1.msra.mxu0 %v904
        %946 = vmatprep.subr.mxu0 0.0
        %947 = vmatpush1.msra.mxu0 %v903
        %948 = vmatprep.subr.mxu0 0.0
        %949 = vmatpush1.msra.mxu0 %v902
        %950 = vmatprep.subr.mxu0 0.0
        %951 = vmatpush1.msra.mxu0 %v901
        %952 = vmatprep.subr.mxu0 0.0
        %953 = vmatpush1.msra.mxu0 %v900
        %954 = vmatprep.subr.mxu0 0.0
        %955 = vmatpush2.msra.mxu0 0.0
        %956 = vmatprep.subr.mxu0 0.0
        %957 = vmatpush2.msra.mxu0 0.0
        %958 = vmatprep.subr.mxu0 0.0
        %959 = vmatpush2.msra.mxu0 0.0
        %960 = vmatprep.subr.mxu0 0.0
        %961 = vmatpush2.msra.mxu0 0.0
        %962 = vmatprep.subr.mxu0 0.0
        %963 = vmatpush2.msra.mxu0 0.0
        %964 = vmatprep.subr.mxu0 0.0
        %965 = vmatpush2.msra.mxu0 0.0
        %966 = vmatprep.subr.mxu0 0.0
        %967 = vmatpush2.msra.mxu0 0.0
        %968 = vmatprep.subr.mxu0 0.0
        %969 = vmatpush2.msra.mxu0 0.0
        %970 = vmatprep.subr.mxu0 0.0
        %971 = vmatpush2.msra.mxu0 0.0
        %972 = vmatprep.subr.mxu0 0.0
        %973 = vmatpush2.msra.mxu0 0.0
        %974 = vmatprep.subr.mxu0 0.0
        %975 = vmatpush2.msra.mxu0 0.0
        %976 = vmatprep.subr.mxu0 0.0
        %977 = vmatpush2.msra.mxu0 0.0
        %978 = vmatprep.subr.mxu0 0.0
        %979 = vmatpush2.msra.mxu0 0.0
        %980 = vmatprep.subr.mxu0 0.0
        %981 = vmatpush2.msra.mxu0 0.0
        %982 = vmatprep.subr.mxu0 0.0
        %983 = vmatpush2.msra.mxu0 0.0
        %984 = vmatprep.subr.mxu0 0.0
        %985 = vmatpush2.msra.mxu0 0.0
        %986 = vmatprep.mubr.f32.mxu0 0.0
        %987 = vmatmul.mubr.f32.gmra.mxu0 %v920
        %v988 = vpop.f32.mrf.mxu0
        %v989 = vadd.f32 0.0, %v988
        %v990 = vpop.f32.mrf.mxu0
        %991 = vdwg.mxu0
        %vm992 = vcmp.eq.s32.totalorder %v563, 31
        %vm993 = vcmask 1047808
        %994 = vrot.lane.b32.xlu0 %v989, 32
        %v995 = vpop.permute.xlu0 %994
        %v996 = vsel %vm993, %v995, %v989
        %997 = vrot.lane.b32.xlu0 %v996, 32
        %v998 = vpop.permute.xlu0 %997
        %v999 = vsel %vm993, %v998, %v989
        %1001 = vrot.lane.b32.xlu0 %v999, 97
        %v1002 = vpop.permute.xlu0 %1001
        %v1004 = vsel %vm636, 0.0, %v1002
        %v1005 = vsel %vm992, 1, 0
        %vm1006 = vcmp.eq.s32.totalorder %v1005, 1
        %1007 = vrot.lane.b32.xlu0 %v999, 127
        %v1008 = vpop.permute.xlu0 %1007
        %v1010 = vsel %vm1006, 0.0, %v1008
        %s1011 = scalar_lea.vmem %s3, 16
        %v1012 = vld [vmem:[%s1011] sm:$0xff]
        %v1013 = vld [vmem:[%s1011 + $0x8] sm:$0xff]
        %v1014 = vld [vmem:[%s3] sm:$0xff]
        %v1015 = vld [vmem:[%s3 + $0x8] sm:$0xff]
        %v1017 = vsel %vm651, %v1014, 0
        %v1020 = vsel %vm651, %v1015, 0
        %1022 = vmatprep.subr.mxu0 0.0
        %1023 = vmatpush1.msra.mxu0 0.0
        %1024 = vmatprep.subr.mxu0 0.0
        %1025 = vmatpush1.msra.mxu0 0.0
        %1026 = vmatprep.subr.mxu0 0.0
        %1027 = vmatpush1.msra.mxu0 0.0
        %1028 = vmatprep.subr.mxu0 0.0
        %1029 = vmatpush1.msra.mxu0 0.0
        %1030 = vmatprep.subr.mxu0 0.0
        %1031 = vmatpush1.msra.mxu0 0.0
        %1032 = vmatprep.subr.mxu0 0.0
        %1033 = vmatpush1.msra.mxu0 0.0
        %1034 = vmatprep.subr.mxu0 0.0
        %1035 = vmatpush1.msra.mxu0 0.0
        %1036 = vmatprep.subr.mxu0 0.0
        %1037 = vmatpush1.msra.mxu0 0.0
        %1038 = vmatprep.subr.mxu0 0.0
        %1039 = vmatpush1.msra.mxu0 0.0
        %1040 = vmatprep.subr.mxu0 0.0
        %1041 = vmatpush1.msra.mxu0 0.0
        %1042 = vmatprep.subr.mxu0 0.0
        %1043 = vmatpush1.msra.mxu0 0.0
        %1044 = vmatprep.subr.mxu0 0.0
        %1045 = vmatpush1.msra.mxu0 0.0
        %1046 = vmatprep.subr.mxu0 0.0
        %1047 = vmatpush1.msra.mxu0 0.0
        %1048 = vmatprep.subr.mxu0 0.0
        %1049 = vmatpush1.msra.mxu0 0.0
        %1050 = vmatprep.subr.mxu0 0.0
        %1051 = vmatpush1.msra.mxu0 0.0
        %1052 = vmatprep.subr.mxu0 0.0
        %1053 = vmatpush1.msra.mxu0 %v1004
        %1054 = vmatprep.subr.mxu0 0.0
        %1055 = vmatpush2.msra.mxu0 0.0
        %1056 = vmatprep.subr.mxu0 0.0
        %1057 = vmatpush2.msra.mxu0 0.0
        %1058 = vmatprep.subr.mxu0 0.0
        %1059 = vmatpush2.msra.mxu0 0.0
        %1060 = vmatprep.subr.mxu0 0.0
        %1061 = vmatpush2.msra.mxu0 0.0
        %1062 = vmatprep.subr.mxu0 0.0
        %1063 = vmatpush2.msra.mxu0 0.0
        %1064 = vmatprep.subr.mxu0 0.0
        %1065 = vmatpush2.msra.mxu0 0.0
        %1066 = vmatprep.subr.mxu0 0.0
        %1067 = vmatpush2.msra.mxu0 0.0
        %1068 = vmatprep.subr.mxu0 0.0
        %1069 = vmatpush2.msra.mxu0 0.0
        %1070 = vmatprep.subr.mxu0 0.0
        %1071 = vmatpush2.msra.mxu0 0.0
        %1072 = vmatprep.subr.mxu0 0.0
        %1073 = vmatpush2.msra.mxu0 0.0
        %1074 = vmatprep.subr.mxu0 0.0
        %1075 = vmatpush2.msra.mxu0 0.0
        %1076 = vmatprep.subr.mxu0 0.0
        %1077 = vmatpush2.msra.mxu0 0.0
        %1078 = vmatprep.subr.mxu0 0.0
        %1079 = vmatpush2.msra.mxu0 0.0
        %1080 = vmatprep.subr.mxu0 0.0
        %1081 = vmatpush2.msra.mxu0 0.0
        %1082 = vmatprep.subr.mxu0 0.0
        %1083 = vmatpush2.msra.mxu0 0.0
        %1084 = vmatprep.subr.mxu0 0.0
        %1085 = vmatpush2.msra.mxu0 0.0
        %1086 = vmatprep.mubr.f32.mxu0 0.0
        %1087 = vmatmul.mubr.f32.gmra.mxu0 %v1017
        %v1088 = vpop.f32.mrf.mxu0
        %v1089 = vadd.f32 0.0, %v1088
        %v1090 = vpop.f32.mrf.mxu0
        %1091 = vmatprep.mubr.f32.mxu0 0.0
        %1092 = vmatmul.mubr.f32.gmra.mxu0 %v1020
        %v1093 = vpop.f32.mrf.mxu0
        %v1094 = vadd.f32 0.0, %v1093
        %v1095 = vpop.f32.mrf.mxu0
        %1096 = vdwg.mxu0
        %v1098 = vsel %vm651, %v1012, 0
        %v1101 = vsel %vm651, %v1013, 0
        %1103 = vmatprep.subr.mxu0 0.0
        %1104 = vmatpush1.msra.mxu0 0.0
        %1105 = vmatprep.subr.mxu0 0.0
        %1106 = vmatpush1.msra.mxu0 0.0
        %1107 = vmatprep.subr.mxu0 0.0
        %1108 = vmatpush1.msra.mxu0 0.0
        %1109 = vmatprep.subr.mxu0 0.0
        %1110 = vmatpush1.msra.mxu0 0.0
        %1111 = vmatprep.subr.mxu0 0.0
        %1112 = vmatpush1.msra.mxu0 0.0
        %1113 = vmatprep.subr.mxu0 0.0
        %1114 = vmatpush1.msra.mxu0 0.0
        %1115 = vmatprep.subr.mxu0 0.0
        %1116 = vmatpush1.msra.mxu0 0.0
        %1117 = vmatprep.subr.mxu0 0.0
        %1118 = vmatpush1.msra.mxu0 0.0
        %1119 = vmatprep.subr.mxu0 0.0
        %1120 = vmatpush1.msra.mxu0 0.0
        %1121 = vmatprep.subr.mxu0 0.0
        %1122 = vmatpush1.msra.mxu0 0.0
        %1123 = vmatprep.subr.mxu0 0.0
        %1124 = vmatpush1.msra.mxu0 0.0
        %1125 = vmatprep.subr.mxu0 0.0
        %1126 = vmatpush1.msra.mxu0 0.0
        %1127 = vmatprep.subr.mxu0 0.0
        %1128 = vmatpush1.msra.mxu0 0.0
        %1129 = vmatprep.subr.mxu0 0.0
        %1130 = vmatpush1.msra.mxu0 0.0
        %1131 = vmatprep.subr.mxu0 0.0
        %1132 = vmatpush1.msra.mxu0 0.0
        %1133 = vmatprep.subr.mxu0 0.0
        %1134 = vmatpush1.msra.mxu0 %v989
        %1135 = vmatprep.subr.mxu0 0.0
        %1136 = vmatpush2.msra.mxu0 0.0
        %1137 = vmatprep.subr.mxu0 0.0
        %1138 = vmatpush2.msra.mxu0 0.0
        %1139 = vmatprep.subr.mxu0 0.0
        %1140 = vmatpush2.msra.mxu0 0.0
        %1141 = vmatprep.subr.mxu0 0.0
        %1142 = vmatpush2.msra.mxu0 0.0
        %1143 = vmatprep.subr.mxu0 0.0
        %1144 = vmatpush2.msra.mxu0 0.0
        %1145 = vmatprep.subr.mxu0 0.0
        %1146 = vmatpush2.msra.mxu0 0.0
        %1147 = vmatprep.subr.mxu0 0.0
        %1148 = vmatpush2.msra.mxu0 0.0
        %1149 = vmatprep.subr.mxu0 0.0
        %1150 = vmatpush2.msra.mxu0 0.0
        %1151 = vmatprep.subr.mxu0 0.0
        %1152 = vmatpush2.msra.mxu0 0.0
        %1153 = vmatprep.subr.mxu0 0.0
        %1154 = vmatpush2.msra.mxu0 0.0
        %1155 = vmatprep.subr.mxu0 0.0
        %1156 = vmatpush2.msra.mxu0 0.0
        %1157 = vmatprep.subr.mxu0 0.0
        %1158 = vmatpush2.msra.mxu0 0.0
        %1159 = vmatprep.subr.mxu0 0.0
        %1160 = vmatpush2.msra.mxu0 0.0
        %1161 = vmatprep.subr.mxu0 0.0
        %1162 = vmatpush2.msra.mxu0 0.0
        %1163 = vmatprep.subr.mxu0 0.0
        %1164 = vmatpush2.msra.mxu0 0.0
        %1165 = vmatprep.subr.mxu0 0.0
        %1166 = vmatpush2.msra.mxu0 0.0
        %1167 = vmatprep.mubr.f32.mxu0 0.0
        %1168 = vmatmul.mubr.f32.gmra.mxu0 %v1098
        %v1169 = vpop.f32.mrf.mxu0
        %v1170 = vadd.f32 %v1089, %v1169
        %v1171 = vpop.f32.mrf.mxu0
        %1172 = vmatprep.mubr.f32.mxu0 0.0
        %1173 = vmatmul.mubr.f32.gmra.mxu0 %v1101
        %v1174 = vpop.f32.mrf.mxu0
        %v1175 = vadd.f32 %v1094, %v1174
        %v1176 = vpop.f32.mrf.mxu0
        %1177 = vdwg.mxu0
        %s1178 = scalar_lea.vmem %s3, 32
        %v1179 = vld [vmem:[%s1178] sm:$0xff]
        %v1180 = vld [vmem:[%s1178 + $0x8] sm:$0xff]
        %v1182 = vsel %vm651, %v1179, 0
        %v1185 = vsel %vm651, %v1180, 0
        %1187 = vmatprep.subr.mxu0 0.0
        %1188 = vmatpush1.msra.mxu0 0.0
        %1189 = vmatprep.subr.mxu0 0.0
        %1190 = vmatpush1.msra.mxu0 0.0
        %1191 = vmatprep.subr.mxu0 0.0
        %1192 = vmatpush1.msra.mxu0 0.0
        %1193 = vmatprep.subr.mxu0 0.0
        %1194 = vmatpush1.msra.mxu0 0.0
        %1195 = vmatprep.subr.mxu0 0.0
        %1196 = vmatpush1.msra.mxu0 0.0
        %1197 = vmatprep.subr.mxu0 0.0
        %1198 = vmatpush1.msra.mxu0 0.0
        %1199 = vmatprep.subr.mxu0 0.0
        %1200 = vmatpush1.msra.mxu0 0.0
        %1201 = vmatprep.subr.mxu0 0.0
        %1202 = vmatpush1.msra.mxu0 0.0
        %1203 = vmatprep.subr.mxu0 0.0
        %1204 = vmatpush1.msra.mxu0 0.0
        %1205 = vmatprep.subr.mxu0 0.0
        %1206 = vmatpush1.msra.mxu0 0.0
        %1207 = vmatprep.subr.mxu0 0.0
        %1208 = vmatpush1.msra.mxu0 0.0
        %1209 = vmatprep.subr.mxu0 0.0
        %1210 = vmatpush1.msra.mxu0 0.0
        %1211 = vmatprep.subr.mxu0 0.0
        %1212 = vmatpush1.msra.mxu0 0.0
        %1213 = vmatprep.subr.mxu0 0.0
        %1214 = vmatpush1.msra.mxu0 0.0
        %1215 = vmatprep.subr.mxu0 0.0
        %1216 = vmatpush1.msra.mxu0 0.0
        %1217 = vmatprep.subr.mxu0 0.0
        %1218 = vmatpush1.msra.mxu0 %v1010
        %1219 = vmatprep.subr.mxu0 0.0
        %1220 = vmatpush2.msra.mxu0 0.0
        %1221 = vmatprep.subr.mxu0 0.0
        %1222 = vmatpush2.msra.mxu0 0.0
        %1223 = vmatprep.subr.mxu0 0.0
        %1224 = vmatpush2.msra.mxu0 0.0
        %1225 = vmatprep.subr.mxu0 0.0
        %1226 = vmatpush2.msra.mxu0 0.0
        %1227 = vmatprep.subr.mxu0 0.0
        %1228 = vmatpush2.msra.mxu0 0.0
        %1229 = vmatprep.subr.mxu0 0.0
        %1230 = vmatpush2.msra.mxu0 0.0
        %1231 = vmatprep.subr.mxu0 0.0
        %1232 = vmatpush2.msra.mxu0 0.0
        %1233 = vmatprep.subr.mxu0 0.0
        %1234 = vmatpush2.msra.mxu0 0.0
        %1235 = vmatprep.subr.mxu0 0.0
        %1236 = vmatpush2.msra.mxu0 0.0
        %1237 = vmatprep.subr.mxu0 0.0
        %1238 = vmatpush2.msra.mxu0 0.0
        %1239 = vmatprep.subr.mxu0 0.0
        %1240 = vmatpush2.msra.mxu0 0.0
        %1241 = vmatprep.subr.mxu0 0.0
        %1242 = vmatpush2.msra.mxu0 0.0
        %1243 = vmatprep.subr.mxu0 0.0
        %1244 = vmatpush2.msra.mxu0 0.0
        %1245 = vmatprep.subr.mxu0 0.0
        %1246 = vmatpush2.msra.mxu0 0.0
        %1247 = vmatprep.subr.mxu0 0.0
        %1248 = vmatpush2.msra.mxu0 0.0
        %1249 = vmatprep.subr.mxu0 0.0
        %1250 = vmatpush2.msra.mxu0 0.0
        %1251 = vmatprep.mubr.f32.mxu0 0.0
        %1252 = vmatmul.mubr.f32.gmra.mxu0 %v1182
        %v1253 = vpop.f32.mrf.mxu0
        %v1254 = vadd.f32 0.0, %v1253
        %v1255 = vpop.f32.mrf.mxu0
        %1256 = vmatprep.mubr.f32.mxu0 0.0
        %1257 = vmatmul.mubr.f32.gmra.mxu0 %v1185
        %v1258 = vpop.f32.mrf.mxu0
        %v1259 = vadd.f32 0.0, %v1258
        %v1260 = vpop.f32.mrf.mxu0
        %1261 = vdwg.mxu0
        %v1262 = vadd.f32 %v1170, %v1254
        %v1263 = vadd.f32 %v1175, %v1259
        %v1264 = vld [vmem:[%s11] sm:$0xff]
        %v1265 = vld [vmem:[%s11 + $0x8] sm:$0xff]
        %1267 = vset.pattern.permute.xlu0 2
        %1268 = vperm.xlu0 %1267, %v1264
        %v1269 = vpop.permute.xlu0 %1268
        %1272 = vset.pattern.permute.xlu0 2
        %1273 = vperm.xlu0 %1272, %v1265
        %v1274 = vpop.permute.xlu0 %1273
        %v1276 = vadd.f32 %v1262, %v1269
        %v1277 = vadd.f32 %v1263, %v1274
        %v1278 = vmax.f32 %v1276, 0.0
        %v1279 = vmax.f32 %v1277, 0.0
        %1280 = vrot.lane.b32.xlu0 %v1278, 32
        %v1281 = vpop.permute.xlu0 %1280
        %v1282 = vsel %vm993, %v1281, %v1278
        %1283 = vrot.lane.b32.xlu0 %v1279, 32
        %v1284 = vpop.permute.xlu0 %1283
        %v1285 = vsel %vm993, %v1284, %v1279
        %1286 = vrot.lane.b32.xlu0 %v1282, 32
        %v1287 = vpop.permute.xlu0 %1286
        %1288 = vrot.lane.b32.xlu0 %v1285, 32
        %v1289 = vpop.permute.xlu0 %1288
        %v1290 = vsel %vm993, %v1287, %v1278
        %v1291 = vsel %vm993, %v1289, %v1279
        %1294 = vrot.lane.b32.xlu0 %v1290, 97
        %v1295 = vpop.permute.xlu0 %1294
        %1296 = vrot.lane.b32.xlu0 %v1291, 97
        %v1297 = vpop.permute.xlu0 %1296
        %v1300 = vsel %vm636, 0.0, %v1295
        %v1301 = vsel %vm636, 0.0, %v1297
        %1302 = vrot.lane.b32.xlu0 %v1290, 127
        %v1303 = vpop.permute.xlu0 %1302
        %1304 = vrot.lane.b32.xlu0 %v1291, 127
        %v1305 = vpop.permute.xlu0 %1304
        %v1308 = vsel %vm1006, 0.0, %v1303
        %v1309 = vsel %vm1006, 0.0, %v1305
        %s1310 = scalar_lea.vmem %s4, 16
        %v1311 = vld [vmem:[%s1310] sm:$0xff]
        %v1312 = vld [vmem:[%s1310 + $0x8] sm:$0xff]
        %v1313 = vld [vmem:[%s4] sm:$0xff]
        %v1314 = vld [vmem:[%s4 + $0x8] sm:$0xff]
        %vm1315 = vcmask 130048
        %v1317 = vsel %vm1315, %v1313, 0
        %v1320 = vsel %vm1315, %v1314, 0
        %1322 = vmatprep.subr.mxu0 0.0
        %1323 = vmatpush1.msra.mxu0 0.0
        %1324 = vmatprep.subr.mxu0 0.0
        %1325 = vmatpush1.msra.mxu0 0.0
        %1326 = vmatprep.subr.mxu0 0.0
        %1327 = vmatpush1.msra.mxu0 0.0
        %1328 = vmatprep.subr.mxu0 0.0
        %1329 = vmatpush1.msra.mxu0 0.0
        %1330 = vmatprep.subr.mxu0 0.0
        %1331 = vmatpush1.msra.mxu0 0.0
        %1332 = vmatprep.subr.mxu0 0.0
        %1333 = vmatpush1.msra.mxu0 0.0
        %1334 = vmatprep.subr.mxu0 0.0
        %1335 = vmatpush1.msra.mxu0 0.0
        %1336 = vmatprep.subr.mxu0 0.0
        %1337 = vmatpush1.msra.mxu0 0.0
        %1338 = vmatprep.subr.mxu0 0.0
        %1339 = vmatpush1.msra.mxu0 0.0
        %1340 = vmatprep.subr.mxu0 0.0
        %1341 = vmatpush1.msra.mxu0 0.0
        %1342 = vmatprep.subr.mxu0 0.0
        %1343 = vmatpush1.msra.mxu0 0.0
        %1344 = vmatprep.subr.mxu0 0.0
        %1345 = vmatpush1.msra.mxu0 0.0
        %1346 = vmatprep.subr.mxu0 0.0
        %1347 = vmatpush1.msra.mxu0 0.0
        %1348 = vmatprep.subr.mxu0 0.0
        %1349 = vmatpush1.msra.mxu0 0.0
        %1350 = vmatprep.subr.mxu0 0.0
        %1351 = vmatpush1.msra.mxu0 %v1301
        %1352 = vmatprep.subr.mxu0 0.0
        %1353 = vmatpush1.msra.mxu0 %v1300
        %1354 = vmatprep.subr.mxu0 0.0
        %1355 = vmatpush2.msra.mxu0 0.0
        %1356 = vmatprep.subr.mxu0 0.0
        %1357 = vmatpush2.msra.mxu0 0.0
        %1358 = vmatprep.subr.mxu0 0.0
        %1359 = vmatpush2.msra.mxu0 0.0
        %1360 = vmatprep.subr.mxu0 0.0
        %1361 = vmatpush2.msra.mxu0 0.0
        %1362 = vmatprep.subr.mxu0 0.0
        %1363 = vmatpush2.msra.mxu0 0.0
        %1364 = vmatprep.subr.mxu0 0.0
        %1365 = vmatpush2.msra.mxu0 0.0
        %1366 = vmatprep.subr.mxu0 0.0
        %1367 = vmatpush2.msra.mxu0 0.0
        %1368 = vmatprep.subr.mxu0 0.0
        %1369 = vmatpush2.msra.mxu0 0.0
        %1370 = vmatprep.subr.mxu0 0.0
        %1371 = vmatpush2.msra.mxu0 0.0
        %1372 = vmatprep.subr.mxu0 0.0
        %1373 = vmatpush2.msra.mxu0 0.0
        %1374 = vmatprep.subr.mxu0 0.0
        %1375 = vmatpush2.msra.mxu0 0.0
        %1376 = vmatprep.subr.mxu0 0.0
        %1377 = vmatpush2.msra.mxu0 0.0
        %1378 = vmatprep.subr.mxu0 0.0
        %1379 = vmatpush2.msra.mxu0 0.0
        %1380 = vmatprep.subr.mxu0 0.0
        %1381 = vmatpush2.msra.mxu0 0.0
        %1382 = vmatprep.subr.mxu0 0.0
        %1383 = vmatpush2.msra.mxu0 0.0
        %1384 = vmatprep.subr.mxu0 0.0
        %1385 = vmatpush2.msra.mxu0 0.0
        %1386 = vmatprep.mubr.f32.mxu0 0.0
        %1387 = vmatmul.mubr.f32.gmra.mxu0 %v1317
        %v1388 = vpop.f32.mrf.mxu0
        %v1389 = vadd.f32 0.0, %v1388
        %v1390 = vpop.f32.mrf.mxu0
        %1391 = vmatprep.mubr.f32.mxu0 0.0
        %1392 = vmatmul.mubr.f32.gmra.mxu0 %v1320
        %v1393 = vpop.f32.mrf.mxu0
        %v1394 = vadd.f32 0.0, %v1393
        %v1395 = vpop.f32.mrf.mxu0
        %1396 = vdwg.mxu0
        %v1398 = vsel %vm1315, %v1311, 0
        %v1401 = vsel %vm1315, %v1312, 0
        %1403 = vmatprep.subr.mxu0 0.0
        %1404 = vmatpush1.msra.mxu0 0.0
        %1405 = vmatprep.subr.mxu0 0.0
        %1406 = vmatpush1.msra.mxu0 0.0
        %1407 = vmatprep.subr.mxu0 0.0
        %1408 = vmatpush1.msra.mxu0 0.0
        %1409 = vmatprep.subr.mxu0 0.0
        %1410 = vmatpush1.msra.mxu0 0.0
        %1411 = vmatprep.subr.mxu0 0.0
        %1412 = vmatpush1.msra.mxu0 0.0
        %1413 = vmatprep.subr.mxu0 0.0
        %1414 = vmatpush1.msra.mxu0 0.0
        %1415 = vmatprep.subr.mxu0 0.0
        %1416 = vmatpush1.msra.mxu0 0.0
        %1417 = vmatprep.subr.mxu0 0.0
        %1418 = vmatpush1.msra.mxu0 0.0
        %1419 = vmatprep.subr.mxu0 0.0
        %1420 = vmatpush1.msra.mxu0 0.0
        %1421 = vmatprep.subr.mxu0 0.0
        %1422 = vmatpush1.msra.mxu0 0.0
        %1423 = vmatprep.subr.mxu0 0.0
        %1424 = vmatpush1.msra.mxu0 0.0
        %1425 = vmatprep.subr.mxu0 0.0
        %1426 = vmatpush1.msra.mxu0 0.0
        %1427 = vmatprep.subr.mxu0 0.0
        %1428 = vmatpush1.msra.mxu0 0.0
        %1429 = vmatprep.subr.mxu0 0.0
        %1430 = vmatpush1.msra.mxu0 0.0
        %1431 = vmatprep.subr.mxu0 0.0
        %1432 = vmatpush1.msra.mxu0 %v1279
        %1433 = vmatprep.subr.mxu0 0.0
        %1434 = vmatpush1.msra.mxu0 %v1278
        %1435 = vmatprep.subr.mxu0 0.0
        %1436 = vmatpush2.msra.mxu0 0.0
        %1437 = vmatprep.subr.mxu0 0.0
        %1438 = vmatpush2.msra.mxu0 0.0
        %1439 = vmatprep.subr.mxu0 0.0
        %1440 = vmatpush2.msra.mxu0 0.0
        %1441 = vmatprep.subr.mxu0 0.0
        %1442 = vmatpush2.msra.mxu0 0.0
        %1443 = vmatprep.subr.mxu0 0.0
        %1444 = vmatpush2.msra.mxu0 0.0
        %1445 = vmatprep.subr.mxu0 0.0
        %1446 = vmatpush2.msra.mxu0 0.0
        %1447 = vmatprep.subr.mxu0 0.0
        %1448 = vmatpush2.msra.mxu0 0.0
        %1449 = vmatprep.subr.mxu0 0.0
        %1450 = vmatpush2.msra.mxu0 0.0
        %1451 = vmatprep.subr.mxu0 0.0
        %1452 = vmatpush2.msra.mxu0 0.0
        %1453 = vmatprep.subr.mxu0 0.0
        %1454 = vmatpush2.msra.mxu0 0.0
        %1455 = vmatprep.subr.mxu0 0.0
        %1456 = vmatpush2.msra.mxu0 0.0
        %1457 = vmatprep.subr.mxu0 0.0
        %1458 = vmatpush2.msra.mxu0 0.0
        %1459 = vmatprep.subr.mxu0 0.0
        %1460 = vmatpush2.msra.mxu0 0.0
        %1461 = vmatprep.subr.mxu0 0.0
        %1462 = vmatpush2.msra.mxu0 0.0
        %1463 = vmatprep.subr.mxu0 0.0
        %1464 = vmatpush2.msra.mxu0 0.0
        %1465 = vmatprep.subr.mxu0 0.0
        %1466 = vmatpush2.msra.mxu0 0.0
        %1467 = vmatprep.mubr.f32.mxu0 0.0
        %1468 = vmatmul.mubr.f32.gmra.mxu0 %v1398
        %v1469 = vpop.f32.mrf.mxu0
        %v1470 = vadd.f32 %v1389, %v1469
        %v1471 = vpop.f32.mrf.mxu0
        %1472 = vmatprep.mubr.f32.mxu0 0.0
        %1473 = vmatmul.mubr.f32.gmra.mxu0 %v1401
        %v1474 = vpop.f32.mrf.mxu0
        %v1475 = vadd.f32 %v1394, %v1474
        %v1476 = vpop.f32.mrf.mxu0
        %1477 = vdwg.mxu0
        %s1478 = scalar_lea.vmem %s4, 32
        %v1479 = vld [vmem:[%s1478] sm:$0xff]
        %v1480 = vld [vmem:[%s1478 + $0x8] sm:$0xff]
        %v1482 = vsel %vm1315, %v1479, 0
        %v1485 = vsel %vm1315, %v1480, 0
        %1487 = vmatprep.subr.mxu0 0.0
        %1488 = vmatpush1.msra.mxu0 0.0
        %1489 = vmatprep.subr.mxu0 0.0
        %1490 = vmatpush1.msra.mxu0 0.0
        %1491 = vmatprep.subr.mxu0 0.0
        %1492 = vmatpush1.msra.mxu0 0.0
        %1493 = vmatprep.subr.mxu0 0.0
        %1494 = vmatpush1.msra.mxu0 0.0
        %1495 = vmatprep.subr.mxu0 0.0
        %1496 = vmatpush1.msra.mxu0 0.0
        %1497 = vmatprep.subr.mxu0 0.0
        %1498 = vmatpush1.msra.mxu0 0.0
        %1499 = vmatprep.subr.mxu0 0.0
        %1500 = vmatpush1.msra.mxu0 0.0
        %1501 = vmatprep.subr.mxu0 0.0
        %1502 = vmatpush1.msra.mxu0 0.0
        %1503 = vmatprep.subr.mxu0 0.0
        %1504 = vmatpush1.msra.mxu0 0.0
        %1505 = vmatprep.subr.mxu0 0.0
        %1506 = vmatpush1.msra.mxu0 0.0
        %1507 = vmatprep.subr.mxu0 0.0
        %1508 = vmatpush1.msra.mxu0 0.0
        %1509 = vmatprep.subr.mxu0 0.0
        %1510 = vmatpush1.msra.mxu0 0.0
        %1511 = vmatprep.subr.mxu0 0.0
        %1512 = vmatpush1.msra.mxu0 0.0
        %1513 = vmatprep.subr.mxu0 0.0
        %1514 = vmatpush1.msra.mxu0 0.0
        %1515 = vmatprep.subr.mxu0 0.0
        %1516 = vmatpush1.msra.mxu0 %v1309
        %1517 = vmatprep.subr.mxu0 0.0
        %1518 = vmatpush1.msra.mxu0 %v1308
        %1519 = vmatprep.subr.mxu0 0.0
        %1520 = vmatpush2.msra.mxu0 0.0
        %1521 = vmatprep.subr.mxu0 0.0
        %1522 = vmatpush2.msra.mxu0 0.0
        %1523 = vmatprep.subr.mxu0 0.0
        %1524 = vmatpush2.msra.mxu0 0.0
        %1525 = vmatprep.subr.mxu0 0.0
        %1526 = vmatpush2.msra.mxu0 0.0
        %1527 = vmatprep.subr.mxu0 0.0
        %1528 = vmatpush2.msra.mxu0 0.0
        %1529 = vmatprep.subr.mxu0 0.0
        %1530 = vmatpush2.msra.mxu0 0.0
        %1531 = vmatprep.subr.mxu0 0.0
        %1532 = vmatpush2.msra.mxu0 0.0
        %1533 = vmatprep.subr.mxu0 0.0
        %1534 = vmatpush2.msra.mxu0 0.0
        %1535 = vmatprep.subr.mxu0 0.0
        %1536 = vmatpush2.msra.mxu0 0.0
        %1537 = vmatprep.subr.mxu0 0.0
        %1538 = vmatpush2.msra.mxu0 0.0
        %1539 = vmatprep.subr.mxu0 0.0
        %1540 = vmatpush2.msra.mxu0 0.0
        %1541 = vmatprep.subr.mxu0 0.0
        %1542 = vmatpush2.msra.mxu0 0.0
        %1543 = vmatprep.subr.mxu0 0.0
        %1544 = vmatpush2.msra.mxu0 0.0
        %1545 = vmatprep.subr.mxu0 0.0
        %1546 = vmatpush2.msra.mxu0 0.0
        %1547 = vmatprep.subr.mxu0 0.0
        %1548 = vmatpush2.msra.mxu0 0.0
        %1549 = vmatprep.subr.mxu0 0.0
        %1550 = vmatpush2.msra.mxu0 0.0
        %1551 = vmatprep.mubr.f32.mxu0 0.0
        %1552 = vmatmul.mubr.f32.gmra.mxu0 %v1482
        %v1553 = vpop.f32.mrf.mxu0
        %v1554 = vadd.f32 0.0, %v1553
        %v1555 = vpop.f32.mrf.mxu0
        %1556 = vmatprep.mubr.f32.mxu0 0.0
        %1557 = vmatmul.mubr.f32.gmra.mxu0 %v1485
        %v1558 = vpop.f32.mrf.mxu0
        %v1559 = vadd.f32 0.0, %v1558
        %v1560 = vpop.f32.mrf.mxu0
        %1561 = vdwg.mxu0
        %v1562 = vadd.f32 %v1470, %v1554
        %v1563 = vadd.f32 %v1475, %v1559
        %1564 = vset.pattern.permute.xlu0 3
        %1565 = vperm.xlu0 %1564, %v1264
        %v1566 = vpop.permute.xlu0 %1565
        %1568 = vset.pattern.permute.xlu0 3
        %1569 = vperm.xlu0 %1568, %v1265
        %v1570 = vpop.permute.xlu0 %1569
        %v1572 = vadd.f32 %v1562, %v1566
        %v1573 = vadd.f32 %v1563, %v1570
        %v1574 = vmax.f32 %v1572, 0.0
        %v1575 = vmax.f32 %v1573, 0.0
        %vm1576 = vcmask 261120
        %1577 = vst.msk [vmem:[%s521] sm:$0xff] %vm1576, %v1574
        %1578 = vst.msk [vmem:[%s521 + $0x8] sm:$0xff] %vm1576, %v1575
        %1579 = vrot.lane.b32.xlu0 %v1574, 32
        %v1580 = vpop.permute.xlu0 %1579
        %v1581 = vsel %vm993, %v1580, %v1574
        %1582 = vrot.lane.b32.xlu0 %v1575, 32
        %v1583 = vpop.permute.xlu0 %1582
        %v1584 = vsel %vm993, %v1583, %v1575
        %1585 = vrot.lane.b32.xlu0 %v1581, 32
        %v1586 = vpop.permute.xlu0 %1585
        %1587 = vrot.lane.b32.xlu0 %v1584, 32
        %v1588 = vpop.permute.xlu0 %1587
        %v1589 = vsel %vm993, %v1586, %v1574
        %v1590 = vsel %vm993, %v1588, %v1575
        %1593 = vrot.lane.b32.xlu0 %v1589, 127
        %v1594 = vpop.permute.xlu0 %1593
        %1595 = vrot.lane.b32.xlu0 %v1590, 127
        %v1596 = vpop.permute.xlu0 %1595
        %v1599 = vmax.f32 %v1574, %v1594
        %v1600 = vmax.f32 %v1575, %v1596
        %v1602 = vsel %vm1576, %v1599, 0
        %v1605 = vsel %vm1576, %v1600, 0
        %1607 = vmatprep.subr.mxu0 0.0
        %1608 = vmatpush1.msra.mxu0 0.0
        %1609 = vmatprep.subr.mxu0 0.0
        %1610 = vmatpush1.msra.mxu0 0.0
        %1611 = vmatprep.subr.mxu0 0.0
        %1612 = vmatpush1.msra.mxu0 0.0
        %1613 = vmatprep.subr.mxu0 0.0
        %1614 = vmatpush1.msra.mxu0 0.0
        %1615 = vmatprep.subr.mxu0 0.0
        %1616 = vmatpush1.msra.mxu0 0.0
        %1617 = vmatprep.subr.mxu0 0.0
        %1618 = vmatpush1.msra.mxu0 0.0
        %1619 = vmatprep.subr.mxu0 0.0
        %1620 = vmatpush1.msra.mxu0 0.0
        %1621 = vmatprep.subr.mxu0 0.0
        %1622 = vmatpush1.msra.mxu0 0.0
        %1623 = vmatprep.subr.mxu0 0.0
        %1624 = vmatpush1.msra.mxu0 0.0
        %1625 = vmatprep.subr.mxu0 0.0
        %1626 = vmatpush1.msra.mxu0 0.0
        %1627 = vmatprep.subr.mxu0 0.0
        %1628 = vmatpush1.msra.mxu0 0.0
        %1629 = vmatprep.subr.mxu0 0.0
        %1630 = vmatpush1.msra.mxu0 0.0
        %1631 = vmatprep.subr.mxu0 0.0
        %1632 = vmatpush1.msra.mxu0 %v903
        %1633 = vmatprep.subr.mxu0 0.0
        %1634 = vmatpush1.msra.mxu0 %v902
        %1635 = vmatprep.subr.mxu0 0.0
        %1636 = vmatpush1.msra.mxu0 %v901
        %1637 = vmatprep.subr.mxu0 0.0
        %1638 = vmatpush1.msra.mxu0 %v900
        %1639 = vmatprep.subr.mxu0 0.0
        %1640 = vmatpush2.msra.mxu0 0.0
        %1641 = vmatprep.subr.mxu0 0.0
        %1642 = vmatpush2.msra.mxu0 0.0
        %1643 = vmatprep.subr.mxu0 0.0
        %1644 = vmatpush2.msra.mxu0 0.0
        %1645 = vmatprep.subr.mxu0 0.0
        %1646 = vmatpush2.msra.mxu0 0.0
        %1647 = vmatprep.subr.mxu0 0.0
        %1648 = vmatpush2.msra.mxu0 0.0
        %1649 = vmatprep.subr.mxu0 0.0
        %1650 = vmatpush2.msra.mxu0 0.0
        %1651 = vmatprep.subr.mxu0 0.0
        %1652 = vmatpush2.msra.mxu0 0.0
        %1653 = vmatprep.subr.mxu0 0.0
        %1654 = vmatpush2.msra.mxu0 0.0
        %1655 = vmatprep.subr.mxu0 0.0
        %1656 = vmatpush2.msra.mxu0 0.0
        %1657 = vmatprep.subr.mxu0 0.0
        %1658 = vmatpush2.msra.mxu0 0.0
        %1659 = vmatprep.subr.mxu0 0.0
        %1660 = vmatpush2.msra.mxu0 0.0
        %1661 = vmatprep.subr.mxu0 0.0
        %1662 = vmatpush2.msra.mxu0 0.0
        %1663 = vmatprep.subr.mxu0 0.0
        %1664 = vmatpush2.msra.mxu0 0.0
        %1665 = vmatprep.subr.mxu0 0.0
        %1666 = vmatpush2.msra.mxu0 0.0
        %1667 = vmatprep.subr.mxu0 0.0
        %1668 = vmatpush2.msra.mxu0 0.0
        %1669 = vmatprep.subr.mxu0 0.0
        %1670 = vmatpush2.msra.mxu0 0.0
        %1671 = vmatprep.mubr.f32.mxu0 0.0
        %1672 = vmatmul.mubr.f32.gmra.mxu0 %v1602
        %v1673 = vpop.f32.mrf.mxu0
        %v1674 = vadd.f32 0.0, %v1673
        %v1675 = vpop.f32.mrf.mxu0
        %1676 = vmatprep.mubr.f32.mxu0 0.0
        %1677 = vmatmul.mubr.f32.gmra.mxu0 %v1605
        %v1678 = vpop.f32.mrf.mxu0
        %v1679 = vadd.f32 0.0, %v1678
        %v1680 = vpop.f32.mrf.mxu0
        %1681 = vdwg.mxu0
        %vm1682 = vcmp.eq.s32.totalorder %v563, 15
        %vm1683 = vcmask 1047680
        %1684 = vrot.lane.b32.xlu0 %v1674, 16
        %v1685 = vpop.permute.xlu0 %1684
        %v1686 = vsel %vm1683, %v1685, %v1674
        %1687 = vrot.lane.b32.xlu0 %v1679, 16
        %v1688 = vpop.permute.xlu0 %1687
        %v1689 = vsel %vm1683, %v1688, %v1679
        %1690 = vrot.lane.b32.xlu0 %v1686, 16
        %v1691 = vpop.permute.xlu0 %1690
        %1692 = vrot.lane.b32.xlu0 %v1689, 16
        %v1693 = vpop.permute.xlu0 %1692
        %v1694 = vsel %vm1683, %v1691, %v1674
        %v1695 = vsel %vm1683, %v1693, %v1679
        %1698 = vrot.lane.b32.xlu0 %v1694, 113
        %v1699 = vpop.permute.xlu0 %1698
        %1700 = vrot.lane.b32.xlu0 %v1695, 113
        %v1701 = vpop.permute.xlu0 %1700
        %v1704 = vsel %vm636, 0.0, %v1699
        %v1705 = vsel %vm636, 0.0, %v1701
        %v1706 = vsel %vm1682, 1, 0
        %vm1707 = vcmp.eq.s32.totalorder %v1706, 1
        %1708 = vrot.lane.b32.xlu0 %v1694, 127
        %v1709 = vpop.permute.xlu0 %1708
        %1710 = vrot.lane.b32.xlu0 %v1695, 127
        %v1711 = vpop.permute.xlu0 %1710
        %v1714 = vsel %vm1707, 0.0, %v1709
        %v1715 = vsel %vm1707, 0.0, %v1711
        %s1716 = scalar_lea.vmem %s5, 32
        %v1717 = vld [vmem:[%s1716] sm:$0xff]
        %v1718 = vld [vmem:[%s1716 + $0x8] sm:$0xff]
        %v1719 = vld [vmem:[%s1716 + $0x10] sm:$0xff]
        %v1720 = vld [vmem:[%s1716 + $0x18] sm:$0xff]
        %v1721 = vld [vmem:[%s5] sm:$0xff]
        %v1722 = vld [vmem:[%s5 + $0x8] sm:$0xff]
        %v1723 = vld [vmem:[%s5 + $0x10] sm:$0xff]
        %v1724 = vld [vmem:[%s5 + $0x18] sm:$0xff]
        %v1726 = vsel %vm1315, %v1721, 0
        %v1729 = vsel %vm1315, %v1722, 0
        %v1732 = vsel %vm1315, %v1723, 0
        %v1735 = vsel %vm1315, %v1724, 0
        %1737 = vmatprep.subr.mxu0 0.0
        %1738 = vmatpush1.msra.mxu0 0.0
        %1739 = vmatprep.subr.mxu0 0.0
        %1740 = vmatpush1.msra.mxu0 0.0
        %1741 = vmatprep.subr.mxu0 0.0
        %1742 = vmatpush1.msra.mxu0 0.0
        %1743 = vmatprep.subr.mxu0 0.0
        %1744 = vmatpush1.msra.mxu0 0.0
        %1745 = vmatprep.subr.mxu0 0.0
        %1746 = vmatpush1.msra.mxu0 0.0
        %1747 = vmatprep.subr.mxu0 0.0
        %1748 = vmatpush1.msra.mxu0 0.0
        %1749 = vmatprep.subr.mxu0 0.0
        %1750 = vmatpush1.msra.mxu0 0.0
        %1751 = vmatprep.subr.mxu0 0.0
        %1752 = vmatpush1.msra.mxu0 0.0
        %1753 = vmatprep.subr.mxu0 0.0
        %1754 = vmatpush1.msra.mxu0 0.0
        %1755 = vmatprep.subr.mxu0 0.0
        %1756 = vmatpush1.msra.mxu0 0.0
        %1757 = vmatprep.subr.mxu0 0.0
        %1758 = vmatpush1.msra.mxu0 0.0
        %1759 = vmatprep.subr.mxu0 0.0
        %1760 = vmatpush1.msra.mxu0 0.0
        %1761 = vmatprep.subr.mxu0 0.0
        %1762 = vmatpush1.msra.mxu0 0.0
        %1763 = vmatprep.subr.mxu0 0.0
        %1764 = vmatpush1.msra.mxu0 0.0
        %1765 = vmatprep.subr.mxu0 0.0
        %1766 = vmatpush1.msra.mxu0 %v1705
        %1767 = vmatprep.subr.mxu0 0.0
        %1768 = vmatpush1.msra.mxu0 %v1704
        %1769 = vmatprep.subr.mxu0 0.0
        %1770 = vmatpush2.msra.mxu0 0.0
        %1771 = vmatprep.subr.mxu0 0.0
        %1772 = vmatpush2.msra.mxu0 0.0
        %1773 = vmatprep.subr.mxu0 0.0
        %1774 = vmatpush2.msra.mxu0 0.0
        %1775 = vmatprep.subr.mxu0 0.0
        %1776 = vmatpush2.msra.mxu0 0.0
        %1777 = vmatprep.subr.mxu0 0.0
        %1778 = vmatpush2.msra.mxu0 0.0
        %1779 = vmatprep.subr.mxu0 0.0
        %1780 = vmatpush2.msra.mxu0 0.0
        %1781 = vmatprep.subr.mxu0 0.0
        %1782 = vmatpush2.msra.mxu0 0.0
        %1783 = vmatprep.subr.mxu0 0.0
        %1784 = vmatpush2.msra.mxu0 0.0
        %1785 = vmatprep.subr.mxu0 0.0
        %1786 = vmatpush2.msra.mxu0 0.0
        %1787 = vmatprep.subr.mxu0 0.0
        %1788 = vmatpush2.msra.mxu0 0.0
        %1789 = vmatprep.subr.mxu0 0.0
        %1790 = vmatpush2.msra.mxu0 0.0
        %1791 = vmatprep.subr.mxu0 0.0
        %1792 = vmatpush2.msra.mxu0 0.0
        %1793 = vmatprep.subr.mxu0 0.0
        %1794 = vmatpush2.msra.mxu0 0.0
        %1795 = vmatprep.subr.mxu0 0.0
        %1796 = vmatpush2.msra.mxu0 0.0
        %1797 = vmatprep.subr.mxu0 0.0
        %1798 = vmatpush2.msra.mxu0 0.0
        %1799 = vmatprep.subr.mxu0 0.0
        %1800 = vmatpush2.msra.mxu0 0.0
        %1801 = vmatprep.mubr.f32.mxu0 0.0
        %1802 = vmatmul.mubr.f32.gmra.mxu0 %v1726
        %v1803 = vpop.f32.mrf.mxu0
        %v1804 = vadd.f32 0.0, %v1803
        %v1805 = vpop.f32.mrf.mxu0
        %1806 = vmatprep.mubr.f32.mxu0 0.0
        %1807 = vmatmul.mubr.f32.gmra.mxu0 %v1729
        %v1808 = vpop.f32.mrf.mxu0
        %v1809 = vadd.f32 0.0, %v1808
        %v1810 = vpop.f32.mrf.mxu0
        %1811 = vmatprep.mubr.f32.mxu0 0.0
        %1812 = vmatmul.mubr.f32.gmra.mxu0 %v1732
        %v1813 = vpop.f32.mrf.mxu0
        %v1814 = vadd.f32 0.0, %v1813
        %v1815 = vpop.f32.mrf.mxu0
        %1816 = vmatprep.mubr.f32.mxu0 0.0
        %1817 = vmatmul.mubr.f32.gmra.mxu0 %v1735
        %v1818 = vpop.f32.mrf.mxu0
        %v1819 = vadd.f32 0.0, %v1818
        %v1820 = vpop.f32.mrf.mxu0
        %1821 = vdwg.mxu0
        %v1823 = vsel %vm1315, %v1717, 0
        %v1826 = vsel %vm1315, %v1718, 0
        %v1829 = vsel %vm1315, %v1719, 0
        %v1832 = vsel %vm1315, %v1720, 0
        %1834 = vmatprep.subr.mxu0 0.0
        %1835 = vmatpush1.msra.mxu0 0.0
        %1836 = vmatprep.subr.mxu0 0.0
        %1837 = vmatpush1.msra.mxu0 0.0
        %1838 = vmatprep.subr.mxu0 0.0
        %1839 = vmatpush1.msra.mxu0 0.0
        %1840 = vmatprep.subr.mxu0 0.0
        %1841 = vmatpush1.msra.mxu0 0.0
        %1842 = vmatprep.subr.mxu0 0.0
        %1843 = vmatpush1.msra.mxu0 0.0
        %1844 = vmatprep.subr.mxu0 0.0
        %1845 = vmatpush1.msra.mxu0 0.0
        %1846 = vmatprep.subr.mxu0 0.0
        %1847 = vmatpush1.msra.mxu0 0.0
        %1848 = vmatprep.subr.mxu0 0.0
        %1849 = vmatpush1.msra.mxu0 0.0
        %1850 = vmatprep.subr.mxu0 0.0
        %1851 = vmatpush1.msra.mxu0 0.0
        %1852 = vmatprep.subr.mxu0 0.0
        %1853 = vmatpush1.msra.mxu0 0.0
        %1854 = vmatprep.subr.mxu0 0.0
        %1855 = vmatpush1.msra.mxu0 0.0
        %1856 = vmatprep.subr.mxu0 0.0
        %1857 = vmatpush1.msra.mxu0 0.0
        %1858 = vmatprep.subr.mxu0 0.0
        %1859 = vmatpush1.msra.mxu0 0.0
        %1860 = vmatprep.subr.mxu0 0.0
        %1861 = vmatpush1.msra.mxu0 0.0
        %1862 = vmatprep.subr.mxu0 0.0
        %1863 = vmatpush1.msra.mxu0 %v1679
        %1864 = vmatprep.subr.mxu0 0.0
        %1865 = vmatpush1.msra.mxu0 %v1674
        %1866 = vmatprep.subr.mxu0 0.0
        %1867 = vmatpush2.msra.mxu0 0.0
        %1868 = vmatprep.subr.mxu0 0.0
        %1869 = vmatpush2.msra.mxu0 0.0
        %1870 = vmatprep.subr.mxu0 0.0
        %1871 = vmatpush2.msra.mxu0 0.0
        %1872 = vmatprep.subr.mxu0 0.0
        %1873 = vmatpush2.msra.mxu0 0.0
        %1874 = vmatprep.subr.mxu0 0.0
        %1875 = vmatpush2.msra.mxu0 0.0
        %1876 = vmatprep.subr.mxu0 0.0
        %1877 = vmatpush2.msra.mxu0 0.0
        %1878 = vmatprep.subr.mxu0 0.0
        %1879 = vmatpush2.msra.mxu0 0.0
        %1880 = vmatprep.subr.mxu0 0.0
        %1881 = vmatpush2.msra.mxu0 0.0
        %1882 = vmatprep.subr.mxu0 0.0
        %1883 = vmatpush2.msra.mxu0 0.0
        %1884 = vmatprep.subr.mxu0 0.0
        %1885 = vmatpush2.msra.mxu0 0.0
        %1886 = vmatprep.subr.mxu0 0.0
        %1887 = vmatpush2.msra.mxu0 0.0
        %1888 = vmatprep.subr.mxu0 0.0
        %1889 = vmatpush2.msra.mxu0 0.0
        %1890 = vmatprep.subr.mxu0 0.0
        %1891 = vmatpush2.msra.mxu0 0.0
        %1892 = vmatprep.subr.mxu0 0.0
        %1893 = vmatpush2.msra.mxu0 0.0
        %1894 = vmatprep.subr.mxu0 0.0
        %1895 = vmatpush2.msra.mxu0 0.0
        %1896 = vmatprep.subr.mxu0 0.0
        %1897 = vmatpush2.msra.mxu0 0.0
        %1898 = vmatprep.mubr.f32.mxu0 0.0
        %1899 = vmatmul.mubr.f32.gmra.mxu0 %v1823
        %v1900 = vpop.f32.mrf.mxu0
        %v1901 = vadd.f32 %v1804, %v1900
        %v1902 = vpop.f32.mrf.mxu0
        %1903 = vmatprep.mubr.f32.mxu0 0.0
        %1904 = vmatmul.mubr.f32.gmra.mxu0 %v1826
        %v1905 = vpop.f32.mrf.mxu0
        %v1906 = vadd.f32 %v1809, %v1905
        %v1907 = vpop.f32.mrf.mxu0
        %1908 = vmatprep.mubr.f32.mxu0 0.0
        %1909 = vmatmul.mubr.f32.gmra.mxu0 %v1829
        %v1910 = vpop.f32.mrf.mxu0
        %v1911 = vadd.f32 %v1814, %v1910
        %v1912 = vpop.f32.mrf.mxu0
        %1913 = vmatprep.mubr.f32.mxu0 0.0
        %1914 = vmatmul.mubr.f32.gmra.mxu0 %v1832
        %v1915 = vpop.f32.mrf.mxu0
        %v1916 = vadd.f32 %v1819, %v1915
        %v1917 = vpop.f32.mrf.mxu0
        %1918 = vdwg.mxu0
        %s1919 = scalar_lea.vmem %s5, 64
        %v1920 = vld [vmem:[%s1919] sm:$0xff]
        %v1921 = vld [vmem:[%s1919 + $0x8] sm:$0xff]
        %v1922 = vld [vmem:[%s1919 + $0x10] sm:$0xff]
        %v1923 = vld [vmem:[%s1919 + $0x18] sm:$0xff]
        %v1925 = vsel %vm1315, %v1920, 0
        %v1928 = vsel %vm1315, %v1921, 0
        %v1931 = vsel %vm1315, %v1922, 0
        %v1934 = vsel %vm1315, %v1923, 0
        %1936 = vmatprep.subr.mxu0 0.0
        %1937 = vmatpush1.msra.mxu0 0.0
        %1938 = vmatprep.subr.mxu0 0.0
        %1939 = vmatpush1.msra.mxu0 0.0
        %1940 = vmatprep.subr.mxu0 0.0
        %1941 = vmatpush1.msra.mxu0 0.0
        %1942 = vmatprep.subr.mxu0 0.0
        %1943 = vmatpush1.msra.mxu0 0.0
        %1944 = vmatprep.subr.mxu0 0.0
        %1945 = vmatpush1.msra.mxu0 0.0
        %1946 = vmatprep.subr.mxu0 0.0
        %1947 = vmatpush1.msra.mxu0 0.0
        %1948 = vmatprep.subr.mxu0 0.0
        %1949 = vmatpush1.msra.mxu0 0.0
        %1950 = vmatprep.subr.mxu0 0.0
        %1951 = vmatpush1.msra.mxu0 0.0
        %1952 = vmatprep.subr.mxu0 0.0
        %1953 = vmatpush1.msra.mxu0 0.0
        %1954 = vmatprep.subr.mxu0 0.0
        %1955 = vmatpush1.msra.mxu0 0.0
        %1956 = vmatprep.subr.mxu0 0.0
        %1957 = vmatpush1.msra.mxu0 0.0
        %1958 = vmatprep.subr.mxu0 0.0
        %1959 = vmatpush1.msra.mxu0 0.0
        %1960 = vmatprep.subr.mxu0 0.0
        %1961 = vmatpush1.msra.mxu0 0.0
        %1962 = vmatprep.subr.mxu0 0.0
        %1963 = vmatpush1.msra.mxu0 0.0
        %1964 = vmatprep.subr.mxu0 0.0
        %1965 = vmatpush1.msra.mxu0 %v1715
        %1966 = vmatprep.subr.mxu0 0.0
        %1967 = vmatpush1.msra.mxu0 %v1714
        %1968 = vmatprep.subr.mxu0 0.0
        %1969 = vmatpush2.msra.mxu0 0.0
        %1970 = vmatprep.subr.mxu0 0.0
        %1971 = vmatpush2.msra.mxu0 0.0
        %1972 = vmatprep.subr.mxu0 0.0
        %1973 = vmatpush2.msra.mxu0 0.0
        %1974 = vmatprep.subr.mxu0 0.0
        %1975 = vmatpush2.msra.mxu0 0.0
        %1976 = vmatprep.subr.mxu0 0.0
        %1977 = vmatpush2.msra.mxu0 0.0
        %1978 = vmatprep.subr.mxu0 0.0
        %1979 = vmatpush2.msra.mxu0 0.0
        %1980 = vmatprep.subr.mxu0 0.0
        %1981 = vmatpush2.msra.mxu0 0.0
        %1982 = vmatprep.subr.mxu0 0.0
        %1983 = vmatpush2.msra.mxu0 0.0
        %1984 = vmatprep.subr.mxu0 0.0
        %1985 = vmatpush2.msra.mxu0 0.0
        %1986 = vmatprep.subr.mxu0 0.0
        %1987 = vmatpush2.msra.mxu0 0.0
        %1988 = vmatprep.subr.mxu0 0.0
        %1989 = vmatpush2.msra.mxu0 0.0
        %1990 = vmatprep.subr.mxu0 0.0
        %1991 = vmatpush2.msra.mxu0 0.0
        %1992 = vmatprep.subr.mxu0 0.0
        %1993 = vmatpush2.msra.mxu0 0.0
        %1994 = vmatprep.subr.mxu0 0.0
        %1995 = vmatpush2.msra.mxu0 0.0
        %1996 = vmatprep.subr.mxu0 0.0
        %1997 = vmatpush2.msra.mxu0 0.0
        %1998 = vmatprep.subr.mxu0 0.0
        %1999 = vmatpush2.msra.mxu0 0.0
        %2000 = vmatprep.mubr.f32.mxu0 0.0
        %2001 = vmatmul.mubr.f32.gmra.mxu0 %v1925
        %v2002 = vpop.f32.mrf.mxu0
        %v2003 = vadd.f32 0.0, %v2002
        %v2004 = vpop.f32.mrf.mxu0
        %2005 = vmatprep.mubr.f32.mxu0 0.0
        %2006 = vmatmul.mubr.f32.gmra.mxu0 %v1928
        %v2007 = vpop.f32.mrf.mxu0
        %v2008 = vadd.f32 0.0, %v2007
        %v2009 = vpop.f32.mrf.mxu0
        %2010 = vmatprep.mubr.f32.mxu0 0.0
        %2011 = vmatmul.mubr.f32.gmra.mxu0 %v1931
        %v2012 = vpop.f32.mrf.mxu0
        %v2013 = vadd.f32 0.0, %v2012
        %v2014 = vpop.f32.mrf.mxu0
        %2015 = vmatprep.mubr.f32.mxu0 0.0
        %2016 = vmatmul.mubr.f32.gmra.mxu0 %v1934
        %v2017 = vpop.f32.mrf.mxu0
        %v2018 = vadd.f32 0.0, %v2017
        %v2019 = vpop.f32.mrf.mxu0
        %2020 = vdwg.mxu0
        %v2021 = vadd.f32 %v1901, %v2003
        %v2022 = vadd.f32 %v1906, %v2008
        %v2023 = vadd.f32 %v1911, %v2013
        %v2024 = vadd.f32 %v1916, %v2018
        %v2025 = vld [vmem:[%s11] sm:$0xff]
        %v2026 = vld [vmem:[%s11 + $0x8] sm:$0xff]
        %v2027 = vld [vmem:[%s11 + $0x10] sm:$0xff]
        %v2028 = vld [vmem:[%s11 + $0x18] sm:$0xff]
        %2030 = vset.pattern.permute.xlu0 4
        %2031 = vperm.xlu0 %2030, %v2025
        %v2032 = vpop.permute.xlu0 %2031
        %2035 = vset.pattern.permute.xlu0 4
        %2036 = vperm.xlu0 %2035, %v2026
        %v2037 = vpop.permute.xlu0 %2036
        %2040 = vset.pattern.permute.xlu0 4
        %2041 = vperm.xlu0 %2040, %v2027
        %v2042 = vpop.permute.xlu0 %2041
        %2045 = vset.pattern.permute.xlu0 4
        %2046 = vperm.xlu0 %2045, %v2028
        %v2047 = vpop.permute.xlu0 %2046
        %v2049 = vadd.f32 %v2021, %v2032
        %v2050 = vadd.f32 %v2022, %v2037
        %v2051 = vadd.f32 %v2023, %v2042
        %v2052 = vadd.f32 %v2024, %v2047
        %v2053 = vmax.f32 %v2049, 0.0
        %v2054 = vmax.f32 %v2050, 0.0
        %v2055 = vmax.f32 %v2051, 0.0
        %v2056 = vmax.f32 %v2052, 0.0
        %2057 = vrot.lane.b32.xlu0 %v2053, 16
        %v2058 = vpop.permute.xlu0 %2057
        %v2059 = vsel %vm1683, %v2058, %v2053
        %2060 = vrot.lane.b32.xlu0 %v2054, 16
        %v2061 = vpop.permute.xlu0 %2060
        %v2062 = vsel %vm1683, %v2061, %v2054
        %2063 = vrot.lane.b32.xlu0 %v2055, 16
        %v2064 = vpop.permute.xlu0 %2063
        %v2065 = vsel %vm1683, %v2064, %v2055
        %2066 = vrot.lane.b32.xlu0 %v2056, 16
        %v2067 = vpop.permute.xlu0 %2066
        %v2068 = vsel %vm1683, %v2067, %v2056
        %2069 = vrot.lane.b32.xlu0 %v2059, 16
        %v2070 = vpop.permute.xlu0 %2069
        %2071 = vrot.lane.b32.xlu0 %v2062, 16
        %v2072 = vpop.permute.xlu0 %2071
        %2073 = vrot.lane.b32.xlu0 %v2065, 16
        %v2074 = vpop.permute.xlu0 %2073
        %2075 = vrot.lane.b32.xlu0 %v2068, 16
        %v2076 = vpop.permute.xlu0 %2075
        %v2077 = vsel %vm1683, %v2070, %v2053
        %v2078 = vsel %vm1683, %v2072, %v2054
        %v2079 = vsel %vm1683, %v2074, %v2055
        %v2080 = vsel %vm1683, %v2076, %v2056
        %2085 = vrot.lane.b32.xlu0 %v2077, 113
        %v2086 = vpop.permute.xlu0 %2085
        %2087 = vrot.lane.b32.xlu0 %v2078, 113
        %v2088 = vpop.permute.xlu0 %2087
        %2089 = vrot.lane.b32.xlu0 %v2079, 113
        %v2090 = vpop.permute.xlu0 %2089
        %2091 = vrot.lane.b32.xlu0 %v2080, 113
        %v2092 = vpop.permute.xlu0 %2091
        %v2097 = vsel %vm636, 0.0, %v2086
        %v2098 = vsel %vm636, 0.0, %v2088
        %v2099 = vsel %vm636, 0.0, %v2090
        %v2100 = vsel %vm636, 0.0, %v2092
        %2101 = vrot.lane.b32.xlu0 %v2077, 127
        %v2102 = vpop.permute.xlu0 %2101
        %2103 = vrot.lane.b32.xlu0 %v2078, 127
        %v2104 = vpop.permute.xlu0 %2103
        %2105 = vrot.lane.b32.xlu0 %v2079, 127
        %v2106 = vpop.permute.xlu0 %2105
        %2107 = vrot.lane.b32.xlu0 %v2080, 127
        %v2108 = vpop.permute.xlu0 %2107
        %v2113 = vsel %vm1707, 0.0, %v2102
        %v2114 = vsel %vm1707, 0.0, %v2104
        %v2115 = vsel %vm1707, 0.0, %v2106
        %v2116 = vsel %vm1707, 0.0, %v2108
        %s2117 = scalar_lea.vmem %s6, 32
        %v2118 = vld [vmem:[%s2117] sm:$0xff]
        %v2119 = vld [vmem:[%s2117 + $0x8] sm:$0xff]
        %v2120 = vld [vmem:[%s2117 + $0x10] sm:$0xff]
        %v2121 = vld [vmem:[%s2117 + $0x18] sm:$0xff]
        %v2122 = vld [vmem:[%s6] sm:$0xff]
        %v2123 = vld [vmem:[%s6 + $0x8] sm:$0xff]
        %v2124 = vld [vmem:[%s6 + $0x10] sm:$0xff]
        %v2125 = vld [vmem:[%s6 + $0x18] sm:$0xff]
        %v2127 = vsel %vm1576, %v2122, 0
        %v2130 = vsel %vm1576, %v2123, 0
        %v2133 = vsel %vm1576, %v2124, 0
        %v2136 = vsel %vm1576, %v2125, 0
        %2138 = vmatprep.subr.mxu0 0.0
        %2139 = vmatpush1.msra.mxu0 0.0
        %2140 = vmatprep.subr.mxu0 0.0
        %2141 = vmatpush1.msra.mxu0 0.0
        %2142 = vmatprep.subr.mxu0 0.0
        %2143 = vmatpush1.msra.mxu0 0.0
        %2144 = vmatprep.subr.mxu0 0.0
        %2145 = vmatpush1.msra.mxu0 0.0
        %2146 = vmatprep.subr.mxu0 0.0
        %2147 = vmatpush1.msra.mxu0 0.0
        %2148 = vmatprep.subr.mxu0 0.0
        %2149 = vmatpush1.msra.mxu0 0.0
        %2150 = vmatprep.subr.mxu0 0.0
        %2151 = vmatpush1.msra.mxu0 0.0
        %2152 = vmatprep.subr.mxu0 0.0
        %2153 = vmatpush1.msra.mxu0 0.0
        %2154 = vmatprep.subr.mxu0 0.0
        %2155 = vmatpush1.msra.mxu0 0.0
        %2156 = vmatprep.subr.mxu0 0.0
        %2157 = vmatpush1.msra.mxu0 0.0
        %2158 = vmatprep.subr.mxu0 0.0
        %2159 = vmatpush1.msra.mxu0 0.0
        %2160 = vmatprep.subr.mxu0 0.0
        %2161 = vmatpush1.msra.mxu0 0.0
        %2162 = vmatprep.subr.mxu0 0.0
        %2163 = vmatpush1.msra.mxu0 %v2100
        %2164 = vmatprep.subr.mxu0 0.0
        %2165 = vmatpush1.msra.mxu0 %v2099
        %2166 = vmatprep.subr.mxu0 0.0
        %2167 = vmatpush1.msra.mxu0 %v2098
        %2168 = vmatprep.subr.mxu0 0.0
        %2169 = vmatpush1.msra.mxu0 %v2097
        %2170 = vmatprep.subr.mxu0 0.0
        %2171 = vmatpush2.msra.mxu0 0.0
        %2172 = vmatprep.subr.mxu0 0.0
        %2173 = vmatpush2.msra.mxu0 0.0
        %2174 = vmatprep.subr.mxu0 0.0
        %2175 = vmatpush2.msra.mxu0 0.0
        %2176 = vmatprep.subr.mxu0 0.0
        %2177 = vmatpush2.msra.mxu0 0.0
        %2178 = vmatprep.subr.mxu0 0.0
        %2179 = vmatpush2.msra.mxu0 0.0
        %2180 = vmatprep.subr.mxu0 0.0
        %2181 = vmatpush2.msra.mxu0 0.0
        %2182 = vmatprep.subr.mxu0 0.0
        %2183 = vmatpush2.msra.mxu0 0.0
        %2184 = vmatprep.subr.mxu0 0.0
        %2185 = vmatpush2.msra.mxu0 0.0
        %2186 = vmatprep.subr.mxu0 0.0
        %2187 = vmatpush2.msra.mxu0 0.0
        %2188 = vmatprep.subr.mxu0 0.0
        %2189 = vmatpush2.msra.mxu0 0.0
        %2190 = vmatprep.subr.mxu0 0.0
        %2191 = vmatpush2.msra.mxu0 0.0
        %2192 = vmatprep.subr.mxu0 0.0
        %2193 = vmatpush2.msra.mxu0 0.0
        %2194 = vmatprep.subr.mxu0 0.0
        %2195 = vmatpush2.msra.mxu0 0.0
        %2196 = vmatprep.subr.mxu0 0.0
        %2197 = vmatpush2.msra.mxu0 0.0
        %2198 = vmatprep.subr.mxu0 0.0
        %2199 = vmatpush2.msra.mxu0 0.0
        %2200 = vmatprep.subr.mxu0 0.0
        %2201 = vmatpush2.msra.mxu0 0.0
        %2202 = vmatprep.mubr.f32.mxu0 0.0
        %2203 = vmatmul.mubr.f32.gmra.mxu0 %v2127
        %v2204 = vpop.f32.mrf.mxu0
        %v2205 = vadd.f32 0.0, %v2204
        %v2206 = vpop.f32.mrf.mxu0
        %2207 = vmatprep.mubr.f32.mxu0 0.0
        %2208 = vmatmul.mubr.f32.gmra.mxu0 %v2130
        %v2209 = vpop.f32.mrf.mxu0
        %v2210 = vadd.f32 0.0, %v2209
        %v2211 = vpop.f32.mrf.mxu0
        %2212 = vmatprep.mubr.f32.mxu0 0.0
        %2213 = vmatmul.mubr.f32.gmra.mxu0 %v2133
        %v2214 = vpop.f32.mrf.mxu0
        %v2215 = vadd.f32 0.0, %v2214
        %v2216 = vpop.f32.mrf.mxu0
        %2217 = vmatprep.mubr.f32.mxu0 0.0
        %2218 = vmatmul.mubr.f32.gmra.mxu0 %v2136
        %v2219 = vpop.f32.mrf.mxu0
        %v2220 = vadd.f32 0.0, %v2219
        %v2221 = vpop.f32.mrf.mxu0
        %2222 = vdwg.mxu0
        %v2224 = vsel %vm1576, %v2118, 0
        %v2227 = vsel %vm1576, %v2119, 0
        %v2230 = vsel %vm1576, %v2120, 0
        %v2233 = vsel %vm1576, %v2121, 0
        %2235 = vmatprep.subr.mxu0 0.0
        %2236 = vmatpush1.msra.mxu0 0.0
        %2237 = vmatprep.subr.mxu0 0.0
        %2238 = vmatpush1.msra.mxu0 0.0
        %2239 = vmatprep.subr.mxu0 0.0
        %2240 = vmatpush1.msra.mxu0 0.0
        %2241 = vmatprep.subr.mxu0 0.0
        %2242 = vmatpush1.msra.mxu0 0.0
        %2243 = vmatprep.subr.mxu0 0.0
        %2244 = vmatpush1.msra.mxu0 0.0
        %2245 = vmatprep.subr.mxu0 0.0
        %2246 = vmatpush1.msra.mxu0 0.0
        %2247 = vmatprep.subr.mxu0 0.0
        %2248 = vmatpush1.msra.mxu0 0.0
        %2249 = vmatprep.subr.mxu0 0.0
        %2250 = vmatpush1.msra.mxu0 0.0
        %2251 = vmatprep.subr.mxu0 0.0
        %2252 = vmatpush1.msra.mxu0 0.0
        %2253 = vmatprep.subr.mxu0 0.0
        %2254 = vmatpush1.msra.mxu0 0.0
        %2255 = vmatprep.subr.mxu0 0.0
        %2256 = vmatpush1.msra.mxu0 0.0
        %2257 = vmatprep.subr.mxu0 0.0
        %2258 = vmatpush1.msra.mxu0 0.0
        %2259 = vmatprep.subr.mxu0 0.0
        %2260 = vmatpush1.msra.mxu0 %v2056
        %2261 = vmatprep.subr.mxu0 0.0
        %2262 = vmatpush1.msra.mxu0 %v2055
        %2263 = vmatprep.subr.mxu0 0.0
        %2264 = vmatpush1.msra.mxu0 %v2054
        %2265 = vmatprep.subr.mxu0 0.0
        %2266 = vmatpush1.msra.mxu0 %v2053
        %2267 = vmatprep.subr.mxu0 0.0
        %2268 = vmatpush2.msra.mxu0 0.0
        %2269 = vmatprep.subr.mxu0 0.0
        %2270 = vmatpush2.msra.mxu0 0.0
        %2271 = vmatprep.subr.mxu0 0.0
        %2272 = vmatpush2.msra.mxu0 0.0
        %2273 = vmatprep.subr.mxu0 0.0
        %2274 = vmatpush2.msra.mxu0 0.0
        %2275 = vmatprep.subr.mxu0 0.0
        %2276 = vmatpush2.msra.mxu0 0.0
        %2277 = vmatprep.subr.mxu0 0.0
        %2278 = vmatpush2.msra.mxu0 0.0
        %2279 = vmatprep.subr.mxu0 0.0
        %2280 = vmatpush2.msra.mxu0 0.0
        %2281 = vmatprep.subr.mxu0 0.0
        %2282 = vmatpush2.msra.mxu0 0.0
        %2283 = vmatprep.subr.mxu0 0.0
        %2284 = vmatpush2.msra.mxu0 0.0
        %2285 = vmatprep.subr.mxu0 0.0
        %2286 = vmatpush2.msra.mxu0 0.0
        %2287 = vmatprep.subr.mxu0 0.0
        %2288 = vmatpush2.msra.mxu0 0.0
        %2289 = vmatprep.subr.mxu0 0.0
        %2290 = vmatpush2.msra.mxu0 0.0
        %2291 = vmatprep.subr.mxu0 0.0
        %2292 = vmatpush2.msra.mxu0 0.0
        %2293 = vmatprep.subr.mxu0 0.0
        %2294 = vmatpush2.msra.mxu0 0.0
        %2295 = vmatprep.subr.mxu0 0.0
        %2296 = vmatpush2.msra.mxu0 0.0
        %2297 = vmatprep.subr.mxu0 0.0
        %2298 = vmatpush2.msra.mxu0 0.0
        %2299 = vmatprep.mubr.f32.mxu0 0.0
        %2300 = vmatmul.mubr.f32.gmra.mxu0 %v2224
        %v2301 = vpop.f32.mrf.mxu0
        %v2302 = vadd.f32 %v2205, %v2301
        %v2303 = vpop.f32.mrf.mxu0
        %2304 = vmatprep.mubr.f32.mxu0 0.0
        %2305 = vmatmul.mubr.f32.gmra.mxu0 %v2227
        %v2306 = vpop.f32.mrf.mxu0
        %v2307 = vadd.f32 %v2210, %v2306
        %v2308 = vpop.f32.mrf.mxu0
        %2309 = vmatprep.mubr.f32.mxu0 0.0
        %2310 = vmatmul.mubr.f32.gmra.mxu0 %v2230
        %v2311 = vpop.f32.mrf.mxu0
        %v2312 = vadd.f32 %v2215, %v2311
        %v2313 = vpop.f32.mrf.mxu0
        %2314 = vmatprep.mubr.f32.mxu0 0.0
        %2315 = vmatmul.mubr.f32.gmra.mxu0 %v2233
        %v2316 = vpop.f32.mrf.mxu0
        %v2317 = vadd.f32 %v2220, %v2316
        %v2318 = vpop.f32.mrf.mxu0
        %2319 = vdwg.mxu0
        %s2320 = scalar_lea.vmem %s6, 64
        %v2321 = vld [vmem:[%s2320] sm:$0xff]
        %v2322 = vld [vmem:[%s2320 + $0x8] sm:$0xff]
        %v2323 = vld [vmem:[%s2320 + $0x10] sm:$0xff]
        %v2324 = vld [vmem:[%s2320 + $0x18] sm:$0xff]
        %v2326 = vsel %vm1576, %v2321, 0
        %v2329 = vsel %vm1576, %v2322, 0
        %v2332 = vsel %vm1576, %v2323, 0
        %v2335 = vsel %vm1576, %v2324, 0
        %2337 = vmatprep.subr.mxu0 0.0
        %2338 = vmatpush1.msra.mxu0 0.0
        %2339 = vmatprep.subr.mxu0 0.0
        %2340 = vmatpush1.msra.mxu0 0.0
        %2341 = vmatprep.subr.mxu0 0.0
        %2342 = vmatpush1.msra.mxu0 0.0
        %2343 = vmatprep.subr.mxu0 0.0
        %2344 = vmatpush1.msra.mxu0 0.0
        %2345 = vmatprep.subr.mxu0 0.0
        %2346 = vmatpush1.msra.mxu0 0.0
        %2347 = vmatprep.subr.mxu0 0.0
        %2348 = vmatpush1.msra.mxu0 0.0
        %2349 = vmatprep.subr.mxu0 0.0
        %2350 = vmatpush1.msra.mxu0 0.0
        %2351 = vmatprep.subr.mxu0 0.0
        %2352 = vmatpush1.msra.mxu0 0.0
        %2353 = vmatprep.subr.mxu0 0.0
        %2354 = vmatpush1.msra.mxu0 0.0
        %2355 = vmatprep.subr.mxu0 0.0
        %2356 = vmatpush1.msra.mxu0 0.0
        %2357 = vmatprep.subr.mxu0 0.0
        %2358 = vmatpush1.msra.mxu0 0.0
        %2359 = vmatprep.subr.mxu0 0.0
        %2360 = vmatpush1.msra.mxu0 0.0
        %2361 = vmatprep.subr.mxu0 0.0
        %2362 = vmatpush1.msra.mxu0 %v2116
        %2363 = vmatprep.subr.mxu0 0.0
        %2364 = vmatpush1.msra.mxu0 %v2115
        %2365 = vmatprep.subr.mxu0 0.0
        %2366 = vmatpush1.msra.mxu0 %v2114
        %2367 = vmatprep.subr.mxu0 0.0
        %2368 = vmatpush1.msra.mxu0 %v2113
        %2369 = vmatprep.subr.mxu0 0.0
        %2370 = vmatpush2.msra.mxu0 0.0
        %2371 = vmatprep.subr.mxu0 0.0
        %2372 = vmatpush2.msra.mxu0 0.0
        %2373 = vmatprep.subr.mxu0 0.0
        %2374 = vmatpush2.msra.mxu0 0.0
        %2375 = vmatprep.subr.mxu0 0.0
        %2376 = vmatpush2.msra.mxu0 0.0
        %2377 = vmatprep.subr.mxu0 0.0
        %2378 = vmatpush2.msra.mxu0 0.0
        %2379 = vmatprep.subr.mxu0 0.0
        %2380 = vmatpush2.msra.mxu0 0.0
        %2381 = vmatprep.subr.mxu0 0.0
        %2382 = vmatpush2.msra.mxu0 0.0
        %2383 = vmatprep.subr.mxu0 0.0
        %2384 = vmatpush2.msra.mxu0 0.0
        %2385 = vmatprep.subr.mxu0 0.0
        %2386 = vmatpush2.msra.mxu0 0.0
        %2387 = vmatprep.subr.mxu0 0.0
        %2388 = vmatpush2.msra.mxu0 0.0
        %2389 = vmatprep.subr.mxu0 0.0
        %2390 = vmatpush2.msra.mxu0 0.0
        %2391 = vmatprep.subr.mxu0 0.0
        %2392 = vmatpush2.msra.mxu0 0.0
        %2393 = vmatprep.subr.mxu0 0.0
        %2394 = vmatpush2.msra.mxu0 0.0
        %2395 = vmatprep.subr.mxu0 0.0
        %2396 = vmatpush2.msra.mxu0 0.0
        %2397 = vmatprep.subr.mxu0 0.0
        %2398 = vmatpush2.msra.mxu0 0.0
        %2399 = vmatprep.subr.mxu0 0.0
        %2400 = vmatpush2.msra.mxu0 0.0
        %2401 = vmatprep.mubr.f32.mxu0 0.0
        %2402 = vmatmul.mubr.f32.gmra.mxu0 %v2326
        %v2403 = vpop.f32.mrf.mxu0
        %v2404 = vadd.f32 0.0, %v2403
        %v2405 = vpop.f32.mrf.mxu0
        %2406 = vmatprep.mubr.f32.mxu0 0.0
        %2407 = vmatmul.mubr.f32.gmra.mxu0 %v2329
        %v2408 = vpop.f32.mrf.mxu0
        %v2409 = vadd.f32 0.0, %v2408
        %v2410 = vpop.f32.mrf.mxu0
        %2411 = vmatprep.mubr.f32.mxu0 0.0
        %2412 = vmatmul.mubr.f32.gmra.mxu0 %v2332
        %v2413 = vpop.f32.mrf.mxu0
        %v2414 = vadd.f32 0.0, %v2413
        %v2415 = vpop.f32.mrf.mxu0
        %2416 = vmatprep.mubr.f32.mxu0 0.0
        %2417 = vmatmul.mubr.f32.gmra.mxu0 %v2335
        %v2418 = vpop.f32.mrf.mxu0
        %v2419 = vadd.f32 0.0, %v2418
        %v2420 = vpop.f32.mrf.mxu0
        %2421 = vdwg.mxu0
        %v2422 = vadd.f32 %v2302, %v2404
        %v2423 = vadd.f32 %v2307, %v2409
        %v2424 = vadd.f32 %v2312, %v2414
        %v2425 = vadd.f32 %v2317, %v2419
        %2426 = vset.pattern.permute.xlu0 5
        %2427 = vperm.xlu0 %2426, %v2025
        %v2428 = vpop.permute.xlu0 %2427
        %2430 = vset.pattern.permute.xlu0 5
        %2431 = vperm.xlu0 %2430, %v2026
        %v2432 = vpop.permute.xlu0 %2431
        %2434 = vset.pattern.permute.xlu0 5
        %2435 = vperm.xlu0 %2434, %v2027
        %v2436 = vpop.permute.xlu0 %2435
        %2438 = vset.pattern.permute.xlu0 5
        %2439 = vperm.xlu0 %2438, %v2028
        %v2440 = vpop.permute.xlu0 %2439
        %v2442 = vadd.f32 %v2422, %v2428
        %v2443 = vadd.f32 %v2423, %v2432
        %v2444 = vadd.f32 %v2424, %v2436
        %v2445 = vadd.f32 %v2425, %v2440
        %v2446 = vmax.f32 %v2442, 0.0
        %v2447 = vmax.f32 %v2443, 0.0
        %v2448 = vmax.f32 %v2444, 0.0
        %v2449 = vmax.f32 %v2445, 0.0
        %2450 = vst.msk [vmem:[%s550] sm:$0xff] %vm1315, %v2446
        %2451 = vst.msk [vmem:[%s550 + $0x8] sm:$0xff] %vm1315, %v2447
        %2452 = vst.msk [vmem:[%s550 + $0x10] sm:$0xff] %vm1315, %v2448
        %2453 = vst.msk [vmem:[%s550 + $0x18] sm:$0xff] %vm1315, %v2449
        %2454 = vrot.lane.b32.xlu0 %v2446, 16
        %v2455 = vpop.permute.xlu0 %2454
        %v2456 = vsel %vm1683, %v2455, %v2446
        %2457 = vrot.lane.b32.xlu0 %v2447, 16
        %v2458 = vpop.permute.xlu0 %2457
        %v2459 = vsel %vm1683, %v2458, %v2447
        %2460 = vrot.lane.b32.xlu0 %v2448, 16
        %v2461 = vpop.permute.xlu0 %2460
        %v2462 = vsel %vm1683, %v2461, %v2448
        %2463 = vrot.lane.b32.xlu0 %v2449, 16
        %v2464 = vpop.permute.xlu0 %2463
        %v2465 = vsel %vm1683, %v2464, %v2449
        %2466 = vrot.lane.b32.xlu0 %v2456, 16
        %v2467 = vpop.permute.xlu0 %2466
        %2468 = vrot.lane.b32.xlu0 %v2459, 16
        %v2469 = vpop.permute.xlu0 %2468
        %2470 = vrot.lane.b32.xlu0 %v2462, 16
        %v2471 = vpop.permute.xlu0 %2470
        %2472 = vrot.lane.b32.xlu0 %v2465, 16
        %v2473 = vpop.permute.xlu0 %2472
        %v2474 = vsel %vm1683, %v2467, %v2446
        %v2475 = vsel %vm1683, %v2469, %v2447
        %v2476 = vsel %vm1683, %v2471, %v2448
        %v2477 = vsel %vm1683, %v2473, %v2449
        %2482 = vrot.lane.b32.xlu0 %v2474, 127
        %v2483 = vpop.permute.xlu0 %2482
        %2484 = vrot.lane.b32.xlu0 %v2475, 127
        %v2485 = vpop.permute.xlu0 %2484
        %2486 = vrot.lane.b32.xlu0 %v2476, 127
        %v2487 = vpop.permute.xlu0 %2486
        %2488 = vrot.lane.b32.xlu0 %v2477, 127
        %v2489 = vpop.permute.xlu0 %2488
        %v2494 = vmax.f32 %v2446, %v2483
        %v2495 = vmax.f32 %v2447, %v2485
        %v2496 = vmax.f32 %v2448, %v2487
        %v2497 = vmax.f32 %v2449, %v2489
        %v2499 = vsel %vm1315, %v2494, 0
        %v2502 = vsel %vm1315, %v2495, 0
        %v2505 = vsel %vm1315, %v2496, 0
        %v2508 = vsel %vm1315, %v2497, 0
        %2510 = vmatprep.subr.mxu0 0.0
        %2511 = vmatpush1.msra.mxu0 0.0
        %2512 = vmatprep.subr.mxu0 0.0
        %2513 = vmatpush1.msra.mxu0 0.0
        %2514 = vmatprep.subr.mxu0 0.0
        %2515 = vmatpush1.msra.mxu0 0.0
        %2516 = vmatprep.subr.mxu0 0.0
        %2517 = vmatpush1.msra.mxu0 0.0
        %2518 = vmatprep.subr.mxu0 0.0
        %2519 = vmatpush1.msra.mxu0 0.0
        %2520 = vmatprep.subr.mxu0 0.0
        %2521 = vmatpush1.msra.mxu0 0.0
        %2522 = vmatprep.subr.mxu0 0.0
        %2523 = vmatpush1.msra.mxu0 0.0
        %2524 = vmatprep.subr.mxu0 0.0
        %2525 = vmatpush1.msra.mxu0 0.0
        %2526 = vmatprep.subr.mxu0 0.0
        %2527 = vmatpush1.msra.mxu0 0.0
        %2528 = vmatprep.subr.mxu0 0.0
        %2529 = vmatpush1.msra.mxu0 0.0
        %2530 = vmatprep.subr.mxu0 0.0
        %2531 = vmatpush1.msra.mxu0 0.0
        %2532 = vmatprep.subr.mxu0 0.0
        %2533 = vmatpush1.msra.mxu0 0.0
        %2534 = vmatprep.subr.mxu0 0.0
        %2535 = vmatpush1.msra.mxu0 0.0
        %2536 = vmatprep.subr.mxu0 0.0
        %2537 = vmatpush1.msra.mxu0 0.0
        %2538 = vmatprep.subr.mxu0 0.0
        %2539 = vmatpush1.msra.mxu0 %v901
        %2540 = vmatprep.subr.mxu0 0.0
        %2541 = vmatpush1.msra.mxu0 %v900
        %2542 = vmatprep.subr.mxu0 0.0
        %2543 = vmatpush2.msra.mxu0 0.0
        %2544 = vmatprep.subr.mxu0 0.0
        %2545 = vmatpush2.msra.mxu0 0.0
        %2546 = vmatprep.subr.mxu0 0.0
        %2547 = vmatpush2.msra.mxu0 0.0
        %2548 = vmatprep.subr.mxu0 0.0
        %2549 = vmatpush2.msra.mxu0 0.0
        %2550 = vmatprep.subr.mxu0 0.0
        %2551 = vmatpush2.msra.mxu0 0.0
        %2552 = vmatprep.subr.mxu0 0.0
        %2553 = vmatpush2.msra.mxu0 0.0
        %2554 = vmatprep.subr.mxu0 0.0
        %2555 = vmatpush2.msra.mxu0 0.0
        %2556 = vmatprep.subr.mxu0 0.0
        %2557 = vmatpush2.msra.mxu0 0.0
        %2558 = vmatprep.subr.mxu0 0.0
        %2559 = vmatpush2.msra.mxu0 0.0
        %2560 = vmatprep.subr.mxu0 0.0
        %2561 = vmatpush2.msra.mxu0 0.0
        %2562 = vmatprep.subr.mxu0 0.0
        %2563 = vmatpush2.msra.mxu0 0.0
        %2564 = vmatprep.subr.mxu0 0.0
        %2565 = vmatpush2.msra.mxu0 0.0
        %2566 = vmatprep.subr.mxu0 0.0
        %2567 = vmatpush2.msra.mxu0 0.0
        %2568 = vmatprep.subr.mxu0 0.0
        %2569 = vmatpush2.msra.mxu0 0.0
        %2570 = vmatprep.subr.mxu0 0.0
        %2571 = vmatpush2.msra.mxu0 0.0
        %2572 = vmatprep.subr.mxu0 0.0
        %2573 = vmatpush2.msra.mxu0 0.0
        %2574 = vmatprep.mubr.f32.mxu0 0.0
        %2575 = vmatmul.mubr.f32.gmra.mxu0 %v2499
        %v2576 = vpop.f32.mrf.mxu0
        %v2577 = vadd.f32 0.0, %v2576
        %v2578 = vpop.f32.mrf.mxu0
        %2579 = vmatprep.mubr.f32.mxu0 0.0
        %2580 = vmatmul.mubr.f32.gmra.mxu0 %v2502
        %v2581 = vpop.f32.mrf.mxu0
        %v2582 = vadd.f32 0.0, %v2581
        %v2583 = vpop.f32.mrf.mxu0
        %2584 = vmatprep.mubr.f32.mxu0 0.0
        %2585 = vmatmul.mubr.f32.gmra.mxu0 %v2505
        %v2586 = vpop.f32.mrf.mxu0
        %v2587 = vadd.f32 0.0, %v2586
        %v2588 = vpop.f32.mrf.mxu0
        %2589 = vmatprep.mubr.f32.mxu0 0.0
        %2590 = vmatmul.mubr.f32.gmra.mxu0 %v2508
        %v2591 = vpop.f32.mrf.mxu0
        %v2592 = vadd.f32 0.0, %v2591
        %v2593 = vpop.f32.mrf.mxu0
        %2594 = vdwg.mxu0
        %vm2595 = vcmp.eq.s32.totalorder %v563, 7
        %vm2596 = vcmask 1047616
        %2597 = vrot.lane.b32.xlu0 %v2577, 8
        %v2598 = vpop.permute.xlu0 %2597
        %v2599 = vsel %vm2596, %v2598, %v2577
        %2600 = vrot.lane.b32.xlu0 %v2582, 8
        %v2601 = vpop.permute.xlu0 %2600
        %v2602 = vsel %vm2596, %v2601, %v2582
        %2603 = vrot.lane.b32.xlu0 %v2587, 8
        %v2604 = vpop.permute.xlu0 %2603
        %v2605 = vsel %vm2596, %v2604, %v2587
        %2606 = vrot.lane.b32.xlu0 %v2592, 8
        %v2607 = vpop.permute.xlu0 %2606
        %v2608 = vsel %vm2596, %v2607, %v2592
        %2609 = vrot.lane.b32.xlu0 %v2599, 8
        %v2610 = vpop.permute.xlu0 %2609
        %2611 = vrot.lane.b32.xlu0 %v2602, 8
        %v2612 = vpop.permute.xlu0 %2611
        %2613 = vrot.lane.b32.xlu0 %v2605, 8
        %v2614 = vpop.permute.xlu0 %2613
        %2615 = vrot.lane.b32.xlu0 %v2608, 8
        %v2616 = vpop.permute.xlu0 %2615
        %v2617 = vsel %vm2596, %v2610, %v2577
        %v2618 = vsel %vm2596, %v2612, %v2582
        %v2619 = vsel %vm2596, %v2614, %v2587
        %v2620 = vsel %vm2596, %v2616, %v2592
        %2625 = vrot.lane.b32.xlu0 %v2617, 121
        %v2626 = vpop.permute.xlu0 %2625
        %2627 = vrot.lane.b32.xlu0 %v2618, 121
        %v2628 = vpop.permute.xlu0 %2627
        %2629 = vrot.lane.b32.xlu0 %v2619, 121
        %v2630 = vpop.permute.xlu0 %2629
        %2631 = vrot.lane.b32.xlu0 %v2620, 121
        %v2632 = vpop.permute.xlu0 %2631
        %v2637 = vsel %vm636, 0.0, %v2626
        %v2638 = vsel %vm636, 0.0, %v2628
        %v2639 = vsel %vm636, 0.0, %v2630
        %v2640 = vsel %vm636, 0.0, %v2632
        %v2641 = vsel %vm2595, 1, 0
        %vm2642 = vcmp.eq.s32.totalorder %v2641, 1
        %2643 = vrot.lane.b32.xlu0 %v2617, 127
        %v2644 = vpop.permute.xlu0 %2643
        %2645 = vrot.lane.b32.xlu0 %v2618, 127
        %v2646 = vpop.permute.xlu0 %2645
        %2647 = vrot.lane.b32.xlu0 %v2619, 127
        %v2648 = vpop.permute.xlu0 %2647
        %2649 = vrot.lane.b32.xlu0 %v2620, 127
        %v2650 = vpop.permute.xlu0 %2649
        %v2655 = vsel %vm2642, 0.0, %v2644
        %v2656 = vsel %vm2642, 0.0, %v2646
        %v2657 = vsel %vm2642, 0.0, %v2648
        %v2658 = vsel %vm2642, 0.0, %v2650
        %s2659 = scalar_lea.vmem %s7, 32
        %v2660 = vld [vmem:[%s2659] sm:$0xff]
        %v2661 = vld [vmem:[%s2659 + $0x8] sm:$0xff]
        %v2662 = vld [vmem:[%s2659 + $0x10] sm:$0xff]
        %v2663 = vld [vmem:[%s2659 + $0x18] sm:$0xff]
        %v2664 = vld [vmem:[%s7] sm:$0xff]
        %v2665 = vld [vmem:[%s7 + $0x8] sm:$0xff]
        %v2666 = vld [vmem:[%s7 + $0x10] sm:$0xff]
        %v2667 = vld [vmem:[%s7 + $0x18] sm:$0xff]
        %v2669 = vsel %vm1576, %v2664, 0
        %v2672 = vsel %vm1576, %v2665, 0
        %v2675 = vsel %vm1576, %v2666, 0
        %v2678 = vsel %vm1576, %v2667, 0
        %2680 = vmatprep.subr.mxu0 0.0
        %2681 = vmatpush1.msra.mxu0 0.0
        %2682 = vmatprep.subr.mxu0 0.0
        %2683 = vmatpush1.msra.mxu0 0.0
        %2684 = vmatprep.subr.mxu0 0.0
        %2685 = vmatpush1.msra.mxu0 0.0
        %2686 = vmatprep.subr.mxu0 0.0
        %2687 = vmatpush1.msra.mxu0 0.0
        %2688 = vmatprep.subr.mxu0 0.0
        %2689 = vmatpush1.msra.mxu0 0.0
        %2690 = vmatprep.subr.mxu0 0.0
        %2691 = vmatpush1.msra.mxu0 0.0
        %2692 = vmatprep.subr.mxu0 0.0
        %2693 = vmatpush1.msra.mxu0 0.0
        %2694 = vmatprep.subr.mxu0 0.0
        %2695 = vmatpush1.msra.mxu0 0.0
        %2696 = vmatprep.subr.mxu0 0.0
        %2697 = vmatpush1.msra.mxu0 0.0
        %2698 = vmatprep.subr.mxu0 0.0
        %2699 = vmatpush1.msra.mxu0 0.0
        %2700 = vmatprep.subr.mxu0 0.0
        %2701 = vmatpush1.msra.mxu0 0.0
        %2702 = vmatprep.subr.mxu0 0.0
        %2703 = vmatpush1.msra.mxu0 0.0
        %2704 = vmatprep.subr.mxu0 0.0
        %2705 = vmatpush1.msra.mxu0 %v2640
        %2706 = vmatprep.subr.mxu0 0.0
        %2707 = vmatpush1.msra.mxu0 %v2639
        %2708 = vmatprep.subr.mxu0 0.0
        %2709 = vmatpush1.msra.mxu0 %v2638
        %2710 = vmatprep.subr.mxu0 0.0
        %2711 = vmatpush1.msra.mxu0 %v2637
        %2712 = vmatprep.subr.mxu0 0.0
        %2713 = vmatpush2.msra.mxu0 0.0
        %2714 = vmatprep.subr.mxu0 0.0
        %2715 = vmatpush2.msra.mxu0 0.0
        %2716 = vmatprep.subr.mxu0 0.0
        %2717 = vmatpush2.msra.mxu0 0.0
        %2718 = vmatprep.subr.mxu0 0.0
        %2719 = vmatpush2.msra.mxu0 0.0
        %2720 = vmatprep.subr.mxu0 0.0
        %2721 = vmatpush2.msra.mxu0 0.0
        %2722 = vmatprep.subr.mxu0 0.0
        %2723 = vmatpush2.msra.mxu0 0.0
        %2724 = vmatprep.subr.mxu0 0.0
        %2725 = vmatpush2.msra.mxu0 0.0
        %2726 = vmatprep.subr.mxu0 0.0
        %2727 = vmatpush2.msra.mxu0 0.0
        %2728 = vmatprep.subr.mxu0 0.0
        %2729 = vmatpush2.msra.mxu0 0.0
        %2730 = vmatprep.subr.mxu0 0.0
        %2731 = vmatpush2.msra.mxu0 0.0
        %2732 = vmatprep.subr.mxu0 0.0
        %2733 = vmatpush2.msra.mxu0 0.0
        %2734 = vmatprep.subr.mxu0 0.0
        %2735 = vmatpush2.msra.mxu0 0.0
        %2736 = vmatprep.subr.mxu0 0.0
        %2737 = vmatpush2.msra.mxu0 0.0
        %2738 = vmatprep.subr.mxu0 0.0
        %2739 = vmatpush2.msra.mxu0 0.0
        %2740 = vmatprep.subr.mxu0 0.0
        %2741 = vmatpush2.msra.mxu0 0.0
        %2742 = vmatprep.subr.mxu0 0.0
        %2743 = vmatpush2.msra.mxu0 0.0
        %2744 = vmatprep.mubr.f32.mxu0 0.0
        %2745 = vmatmul.mubr.f32.gmra.mxu0 %v2669
        %v2746 = vpop.f32.mrf.mxu0
        %v2747 = vadd.f32 0.0, %v2746
        %v2748 = vpop.f32.mrf.mxu0
        %2749 = vmatprep.mubr.f32.mxu0 0.0
        %2750 = vmatmul.mubr.f32.gmra.mxu0 %v2672
        %v2751 = vpop.f32.mrf.mxu0
        %v2752 = vadd.f32 0.0, %v2751
        %v2753 = vpop.f32.mrf.mxu0
        %2754 = vmatprep.mubr.f32.mxu0 0.0
        %2755 = vmatmul.mubr.f32.gmra.mxu0 %v2675
        %v2756 = vpop.f32.mrf.mxu0
        %v2757 = vadd.f32 0.0, %v2756
        %v2758 = vpop.f32.mrf.mxu0
        %2759 = vmatprep.mubr.f32.mxu0 0.0
        %2760 = vmatmul.mubr.f32.gmra.mxu0 %v2678
        %v2761 = vpop.f32.mrf.mxu0
        %v2762 = vadd.f32 0.0, %v2761
        %v2763 = vpop.f32.mrf.mxu0
        %2764 = vdwg.mxu0
        %v2766 = vsel %vm1576, %v2660, 0
        %v2769 = vsel %vm1576, %v2661, 0
        %v2772 = vsel %vm1576, %v2662, 0
        %v2775 = vsel %vm1576, %v2663, 0
        %2777 = vmatprep.subr.mxu0 0.0
        %2778 = vmatpush1.msra.mxu0 0.0
        %2779 = vmatprep.subr.mxu0 0.0
        %2780 = vmatpush1.msra.mxu0 0.0
        %2781 = vmatprep.subr.mxu0 0.0
        %2782 = vmatpush1.msra.mxu0 0.0
        %2783 = vmatprep.subr.mxu0 0.0
        %2784 = vmatpush1.msra.mxu0 0.0
        %2785 = vmatprep.subr.mxu0 0.0
        %2786 = vmatpush1.msra.mxu0 0.0
        %2787 = vmatprep.subr.mxu0 0.0
        %2788 = vmatpush1.msra.mxu0 0.0
        %2789 = vmatprep.subr.mxu0 0.0
        %2790 = vmatpush1.msra.mxu0 0.0
        %2791 = vmatprep.subr.mxu0 0.0
        %2792 = vmatpush1.msra.mxu0 0.0
        %2793 = vmatprep.subr.mxu0 0.0
        %2794 = vmatpush1.msra.mxu0 0.0
        %2795 = vmatprep.subr.mxu0 0.0
        %2796 = vmatpush1.msra.mxu0 0.0
        %2797 = vmatprep.subr.mxu0 0.0
        %2798 = vmatpush1.msra.mxu0 0.0
        %2799 = vmatprep.subr.mxu0 0.0
        %2800 = vmatpush1.msra.mxu0 0.0
        %2801 = vmatprep.subr.mxu0 0.0
        %2802 = vmatpush1.msra.mxu0 %v2592
        %2803 = vmatprep.subr.mxu0 0.0
        %2804 = vmatpush1.msra.mxu0 %v2587
        %2805 = vmatprep.subr.mxu0 0.0
        %2806 = vmatpush1.msra.mxu0 %v2582
        %2807 = vmatprep.subr.mxu0 0.0
        %2808 = vmatpush1.msra.mxu0 %v2577
        %2809 = vmatprep.subr.mxu0 0.0
        %2810 = vmatpush2.msra.mxu0 0.0
        %2811 = vmatprep.subr.mxu0 0.0
        %2812 = vmatpush2.msra.mxu0 0.0
        %2813 = vmatprep.subr.mxu0 0.0
        %2814 = vmatpush2.msra.mxu0 0.0
        %2815 = vmatprep.subr.mxu0 0.0
        %2816 = vmatpush2.msra.mxu0 0.0
        %2817 = vmatprep.subr.mxu0 0.0
        %2818 = vmatpush2.msra.mxu0 0.0
        %2819 = vmatprep.subr.mxu0 0.0
        %2820 = vmatpush2.msra.mxu0 0.0
        %2821 = vmatprep.subr.mxu0 0.0
        %2822 = vmatpush2.msra.mxu0 0.0
        %2823 = vmatprep.subr.mxu0 0.0
        %2824 = vmatpush2.msra.mxu0 0.0
        %2825 = vmatprep.subr.mxu0 0.0
        %2826 = vmatpush2.msra.mxu0 0.0
        %2827 = vmatprep.subr.mxu0 0.0
        %2828 = vmatpush2.msra.mxu0 0.0
        %2829 = vmatprep.subr.mxu0 0.0
        %2830 = vmatpush2.msra.mxu0 0.0
        %2831 = vmatprep.subr.mxu0 0.0
        %2832 = vmatpush2.msra.mxu0 0.0
        %2833 = vmatprep.subr.mxu0 0.0
        %2834 = vmatpush2.msra.mxu0 0.0
        %2835 = vmatprep.subr.mxu0 0.0
        %2836 = vmatpush2.msra.mxu0 0.0
        %2837 = vmatprep.subr.mxu0 0.0
        %2838 = vmatpush2.msra.mxu0 0.0
        %2839 = vmatprep.subr.mxu0 0.0
        %2840 = vmatpush2.msra.mxu0 0.0
        %2841 = vmatprep.mubr.f32.mxu0 0.0
        %2842 = vmatmul.mubr.f32.gmra.mxu0 %v2766
        %v2843 = vpop.f32.mrf.mxu0
        %v2844 = vadd.f32 %v2747, %v2843
        %v2845 = vpop.f32.mrf.mxu0
        %2846 = vmatprep.mubr.f32.mxu0 0.0
        %2847 = vmatmul.mubr.f32.gmra.mxu0 %v2769
        %v2848 = vpop.f32.mrf.mxu0
        %v2849 = vadd.f32 %v2752, %v2848
        %v2850 = vpop.f32.mrf.mxu0
        %2851 = vmatprep.mubr.f32.mxu0 0.0
        %2852 = vmatmul.mubr.f32.gmra.mxu0 %v2772
        %v2853 = vpop.f32.mrf.mxu0
        %v2854 = vadd.f32 %v2757, %v2853
        %v2855 = vpop.f32.mrf.mxu0
        %2856 = vmatprep.mubr.f32.mxu0 0.0
        %2857 = vmatmul.mubr.f32.gmra.mxu0 %v2775
        %v2858 = vpop.f32.mrf.mxu0
        %v2859 = vadd.f32 %v2762, %v2858
        %v2860 = vpop.f32.mrf.mxu0
        %2861 = vdwg.mxu0
        %s2862 = scalar_lea.vmem %s7, 64
        %v2863 = vld [vmem:[%s2862] sm:$0xff]
        %v2864 = vld [vmem:[%s2862 + $0x8] sm:$0xff]
        %v2865 = vld [vmem:[%s2862 + $0x10] sm:$0xff]
        %v2866 = vld [vmem:[%s2862 + $0x18] sm:$0xff]
        %v2868 = vsel %vm1576, %v2863, 0
        %v2871 = vsel %vm1576, %v2864, 0
        %v2874 = vsel %vm1576, %v2865, 0
        %v2877 = vsel %vm1576, %v2866, 0
        %2879 = vmatprep.subr.mxu0 0.0
        %2880 = vmatpush1.msra.mxu0 0.0
        %2881 = vmatprep.subr.mxu0 0.0
        %2882 = vmatpush1.msra.mxu0 0.0
        %2883 = vmatprep.subr.mxu0 0.0
        %2884 = vmatpush1.msra.mxu0 0.0
        %2885 = vmatprep.subr.mxu0 0.0
        %2886 = vmatpush1.msra.mxu0 0.0
        %2887 = vmatprep.subr.mxu0 0.0
        %2888 = vmatpush1.msra.mxu0 0.0
        %2889 = vmatprep.subr.mxu0 0.0
        %2890 = vmatpush1.msra.mxu0 0.0
        %2891 = vmatprep.subr.mxu0 0.0
        %2892 = vmatpush1.msra.mxu0 0.0
        %2893 = vmatprep.subr.mxu0 0.0
        %2894 = vmatpush1.msra.mxu0 0.0
        %2895 = vmatprep.subr.mxu0 0.0
        %2896 = vmatpush1.msra.mxu0 0.0
        %2897 = vmatprep.subr.mxu0 0.0
        %2898 = vmatpush1.msra.mxu0 0.0
        %2899 = vmatprep.subr.mxu0 0.0
        %2900 = vmatpush1.msra.mxu0 0.0
        %2901 = vmatprep.subr.mxu0 0.0
        %2902 = vmatpush1.msra.mxu0 0.0
        %2903 = vmatprep.subr.mxu0 0.0
        %2904 = vmatpush1.msra.mxu0 %v2658
        %2905 = vmatprep.subr.mxu0 0.0
        %2906 = vmatpush1.msra.mxu0 %v2657
        %2907 = vmatprep.subr.mxu0 0.0
        %2908 = vmatpush1.msra.mxu0 %v2656
        %2909 = vmatprep.subr.mxu0 0.0
        %2910 = vmatpush1.msra.mxu0 %v2655
        %2911 = vmatprep.subr.mxu0 0.0
        %2912 = vmatpush2.msra.mxu0 0.0
        %2913 = vmatprep.subr.mxu0 0.0
        %2914 = vmatpush2.msra.mxu0 0.0
        %2915 = vmatprep.subr.mxu0 0.0
        %2916 = vmatpush2.msra.mxu0 0.0
        %2917 = vmatprep.subr.mxu0 0.0
        %2918 = vmatpush2.msra.mxu0 0.0
        %2919 = vmatprep.subr.mxu0 0.0
        %2920 = vmatpush2.msra.mxu0 0.0
        %2921 = vmatprep.subr.mxu0 0.0
        %2922 = vmatpush2.msra.mxu0 0.0
        %2923 = vmatprep.subr.mxu0 0.0
        %2924 = vmatpush2.msra.mxu0 0.0
        %2925 = vmatprep.subr.mxu0 0.0
        %2926 = vmatpush2.msra.mxu0 0.0
        %2927 = vmatprep.subr.mxu0 0.0
        %2928 = vmatpush2.msra.mxu0 0.0
        %2929 = vmatprep.subr.mxu0 0.0
        %2930 = vmatpush2.msra.mxu0 0.0
        %2931 = vmatprep.subr.mxu0 0.0
        %2932 = vmatpush2.msra.mxu0 0.0
        %2933 = vmatprep.subr.mxu0 0.0
        %2934 = vmatpush2.msra.mxu0 0.0
        %2935 = vmatprep.subr.mxu0 0.0
        %2936 = vmatpush2.msra.mxu0 0.0
        %2937 = vmatprep.subr.mxu0 0.0
        %2938 = vmatpush2.msra.mxu0 0.0
        %2939 = vmatprep.subr.mxu0 0.0
        %2940 = vmatpush2.msra.mxu0 0.0
        %2941 = vmatprep.subr.mxu0 0.0
        %2942 = vmatpush2.msra.mxu0 0.0
        %2943 = vmatprep.mubr.f32.mxu0 0.0
        %2944 = vmatmul.mubr.f32.gmra.mxu0 %v2868
        %v2945 = vpop.f32.mrf.mxu0
        %v2946 = vadd.f32 0.0, %v2945
        %v2947 = vpop.f32.mrf.mxu0
        %2948 = vmatprep.mubr.f32.mxu0 0.0
        %2949 = vmatmul.mubr.f32.gmra.mxu0 %v2871
        %v2950 = vpop.f32.mrf.mxu0
        %v2951 = vadd.f32 0.0, %v2950
        %v2952 = vpop.f32.mrf.mxu0
        %2953 = vmatprep.mubr.f32.mxu0 0.0
        %2954 = vmatmul.mubr.f32.gmra.mxu0 %v2874
        %v2955 = vpop.f32.mrf.mxu0
        %v2956 = vadd.f32 0.0, %v2955
        %v2957 = vpop.f32.mrf.mxu0
        %2958 = vmatprep.mubr.f32.mxu0 0.0
        %2959 = vmatmul.mubr.f32.gmra.mxu0 %v2877
        %v2960 = vpop.f32.mrf.mxu0
        %v2961 = vadd.f32 0.0, %v2960
        %v2962 = vpop.f32.mrf.mxu0
        %2963 = vdwg.mxu0
        %v2964 = vadd.f32 %v2844, %v2946
        %v2965 = vadd.f32 %v2849, %v2951
        %v2966 = vadd.f32 %v2854, %v2956
        %v2967 = vadd.f32 %v2859, %v2961
        %v2968 = vld [vmem:[%s11] sm:$0xff]
        %v2969 = vld [vmem:[%s11 + $0x8] sm:$0xff]
        %v2970 = vld [vmem:[%s11 + $0x10] sm:$0xff]
        %v2971 = vld [vmem:[%s11 + $0x18] sm:$0xff]
        %2973 = vset.pattern.permute.xlu0 6
        %2974 = vperm.xlu0 %2973, %v2968
        %v2975 = vpop.permute.xlu0 %2974
        %2978 = vset.pattern.permute.xlu0 6
        %2979 = vperm.xlu0 %2978, %v2969
        %v2980 = vpop.permute.xlu0 %2979
        %2983 = vset.pattern.permute.xlu0 6
        %2984 = vperm.xlu0 %2983, %v2970
        %v2985 = vpop.permute.xlu0 %2984
        %2988 = vset.pattern.permute.xlu0 6
        %2989 = vperm.xlu0 %2988, %v2971
        %v2990 = vpop.permute.xlu0 %2989
        %v2992 = vadd.f32 %v2964, %v2975
        %v2993 = vadd.f32 %v2965, %v2980
        %v2994 = vadd.f32 %v2966, %v2985
        %v2995 = vadd.f32 %v2967, %v2990
        %v2996 = vmax.f32 %v2992, 0.0
        %v2997 = vmax.f32 %v2993, 0.0
        %v2998 = vmax.f32 %v2994, 0.0
        %v2999 = vmax.f32 %v2995, 0.0
        %3000 = vrot.lane.b32.xlu0 %v2996, 8
        %v3001 = vpop.permute.xlu0 %3000
        %v3002 = vsel %vm2596, %v3001, %v2996
        %3003 = vrot.lane.b32.xlu0 %v2997, 8
        %v3004 = vpop.permute.xlu0 %3003
        %v3005 = vsel %vm2596, %v3004, %v2997
        %3006 = vrot.lane.b32.xlu0 %v2998, 8
        %v3007 = vpop.permute.xlu0 %3006
        %v3008 = vsel %vm2596, %v3007, %v2998
        %3009 = vrot.lane.b32.xlu0 %v2999, 8
        %v3010 = vpop.permute.xlu0 %3009
        %v3011 = vsel %vm2596, %v3010, %v2999
        %3012 = vrot.lane.b32.xlu0 %v3002, 8
        %v3013 = vpop.permute.xlu0 %3012
        %3014 = vrot.lane.b32.xlu0 %v3005, 8
        %v3015 = vpop.permute.xlu0 %3014
        %3016 = vrot.lane.b32.xlu0 %v3008, 8
        %v3017 = vpop.permute.xlu0 %3016
        %3018 = vrot.lane.b32.xlu0 %v3011, 8
        %v3019 = vpop.permute.xlu0 %3018
        %v3020 = vsel %vm2596, %v3013, %v2996
        %v3021 = vsel %vm2596, %v3015, %v2997
        %v3022 = vsel %vm2596, %v3017, %v2998
        %v3023 = vsel %vm2596, %v3019, %v2999
        %3028 = vrot.lane.b32.xlu0 %v3020, 121
        %v3029 = vpop.permute.xlu0 %3028
        %3030 = vrot.lane.b32.xlu0 %v3021, 121
        %v3031 = vpop.permute.xlu0 %3030
        %3032 = vrot.lane.b32.xlu0 %v3022, 121
        %v3033 = vpop.permute.xlu0 %3032
        %3034 = vrot.lane.b32.xlu0 %v3023, 121
        %v3035 = vpop.permute.xlu0 %3034
        %v3040 = vsel %vm636, 0.0, %v3029
        %v3041 = vsel %vm636, 0.0, %v3031
        %v3042 = vsel %vm636, 0.0, %v3033
        %v3043 = vsel %vm636, 0.0, %v3035
        %3044 = vrot.lane.b32.xlu0 %v3020, 127
        %v3045 = vpop.permute.xlu0 %3044
        %3046 = vrot.lane.b32.xlu0 %v3021, 127
        %v3047 = vpop.permute.xlu0 %3046
        %3048 = vrot.lane.b32.xlu0 %v3022, 127
        %v3049 = vpop.permute.xlu0 %3048
        %3050 = vrot.lane.b32.xlu0 %v3023, 127
        %v3051 = vpop.permute.xlu0 %3050
        %v3056 = vsel %vm2642, 0.0, %v3045
        %v3057 = vsel %vm2642, 0.0, %v3047
        %v3058 = vsel %vm2642, 0.0, %v3049
        %v3059 = vsel %vm2642, 0.0, %v3051
        %s3060 = scalar_lea.vmem %s8, 32
        %v3061 = vld [vmem:[%s3060] sm:$0xff]
        %v3062 = vld [vmem:[%s3060 + $0x8] sm:$0xff]
        %v3063 = vld [vmem:[%s3060 + $0x10] sm:$0xff]
        %v3064 = vld [vmem:[%s3060 + $0x18] sm:$0xff]
        %v3065 = vld [vmem:[%s8] sm:$0xff]
        %v3066 = vld [vmem:[%s8 + $0x8] sm:$0xff]
        %v3067 = vld [vmem:[%s8 + $0x10] sm:$0xff]
        %v3068 = vld [vmem:[%s8 + $0x18] sm:$0xff]
        %v3070 = vsel %vm1576, %v3065, 0
        %v3073 = vsel %vm1576, %v3066, 0
        %v3076 = vsel %vm1576, %v3067, 0
        %v3079 = vsel %vm1576, %v3068, 0
        %3081 = vmatprep.subr.mxu0 0.0
        %3082 = vmatpush1.msra.mxu0 0.0
        %3083 = vmatprep.subr.mxu0 0.0
        %3084 = vmatpush1.msra.mxu0 0.0
        %3085 = vmatprep.subr.mxu0 0.0
        %3086 = vmatpush1.msra.mxu0 0.0
        %3087 = vmatprep.subr.mxu0 0.0
        %3088 = vmatpush1.msra.mxu0 0.0
        %3089 = vmatprep.subr.mxu0 0.0
        %3090 = vmatpush1.msra.mxu0 0.0
        %3091 = vmatprep.subr.mxu0 0.0
        %3092 = vmatpush1.msra.mxu0 0.0
        %3093 = vmatprep.subr.mxu0 0.0
        %3094 = vmatpush1.msra.mxu0 0.0
        %3095 = vmatprep.subr.mxu0 0.0
        %3096 = vmatpush1.msra.mxu0 0.0
        %3097 = vmatprep.subr.mxu0 0.0
        %3098 = vmatpush1.msra.mxu0 0.0
        %3099 = vmatprep.subr.mxu0 0.0
        %3100 = vmatpush1.msra.mxu0 0.0
        %3101 = vmatprep.subr.mxu0 0.0
        %3102 = vmatpush1.msra.mxu0 0.0
        %3103 = vmatprep.subr.mxu0 0.0
        %3104 = vmatpush1.msra.mxu0 0.0
        %3105 = vmatprep.subr.mxu0 0.0
        %3106 = vmatpush1.msra.mxu0 %v3043
        %3107 = vmatprep.subr.mxu0 0.0
        %3108 = vmatpush1.msra.mxu0 %v3042
        %3109 = vmatprep.subr.mxu0 0.0
        %3110 = vmatpush1.msra.mxu0 %v3041
        %3111 = vmatprep.subr.mxu0 0.0
        %3112 = vmatpush1.msra.mxu0 %v3040
        %3113 = vmatprep.subr.mxu0 0.0
        %3114 = vmatpush2.msra.mxu0 0.0
        %3115 = vmatprep.subr.mxu0 0.0
        %3116 = vmatpush2.msra.mxu0 0.0
        %3117 = vmatprep.subr.mxu0 0.0
        %3118 = vmatpush2.msra.mxu0 0.0
        %3119 = vmatprep.subr.mxu0 0.0
        %3120 = vmatpush2.msra.mxu0 0.0
        %3121 = vmatprep.subr.mxu0 0.0
        %3122 = vmatpush2.msra.mxu0 0.0
        %3123 = vmatprep.subr.mxu0 0.0
        %3124 = vmatpush2.msra.mxu0 0.0
        %3125 = vmatprep.subr.mxu0 0.0
        %3126 = vmatpush2.msra.mxu0 0.0
        %3127 = vmatprep.subr.mxu0 0.0
        %3128 = vmatpush2.msra.mxu0 0.0
        %3129 = vmatprep.subr.mxu0 0.0
        %3130 = vmatpush2.msra.mxu0 0.0
        %3131 = vmatprep.subr.mxu0 0.0
        %3132 = vmatpush2.msra.mxu0 0.0
        %3133 = vmatprep.subr.mxu0 0.0
        %3134 = vmatpush2.msra.mxu0 0.0
        %3135 = vmatprep.subr.mxu0 0.0
        %3136 = vmatpush2.msra.mxu0 0.0
        %3137 = vmatprep.subr.mxu0 0.0
        %3138 = vmatpush2.msra.mxu0 0.0
        %3139 = vmatprep.subr.mxu0 0.0
        %3140 = vmatpush2.msra.mxu0 0.0
        %3141 = vmatprep.subr.mxu0 0.0
        %3142 = vmatpush2.msra.mxu0 0.0
        %3143 = vmatprep.subr.mxu0 0.0
        %3144 = vmatpush2.msra.mxu0 0.0
        %3145 = vmatprep.mubr.f32.mxu0 0.0
        %3146 = vmatmul.mubr.f32.gmra.mxu0 %v3070
        %v3147 = vpop.f32.mrf.mxu0
        %v3148 = vadd.f32 0.0, %v3147
        %v3149 = vpop.f32.mrf.mxu0
        %3150 = vmatprep.mubr.f32.mxu0 0.0
        %3151 = vmatmul.mubr.f32.gmra.mxu0 %v3073
        %v3152 = vpop.f32.mrf.mxu0
        %v3153 = vadd.f32 0.0, %v3152
        %v3154 = vpop.f32.mrf.mxu0
        %3155 = vmatprep.mubr.f32.mxu0 0.0
        %3156 = vmatmul.mubr.f32.gmra.mxu0 %v3076
        %v3157 = vpop.f32.mrf.mxu0
        %v3158 = vadd.f32 0.0, %v3157
        %v3159 = vpop.f32.mrf.mxu0
        %3160 = vmatprep.mubr.f32.mxu0 0.0
        %3161 = vmatmul.mubr.f32.gmra.mxu0 %v3079
        %v3162 = vpop.f32.mrf.mxu0
        %v3163 = vadd.f32 0.0, %v3162
        %v3164 = vpop.f32.mrf.mxu0
        %3165 = vdwg.mxu0
        %v3167 = vsel %vm1576, %v3061, 0
        %v3170 = vsel %vm1576, %v3062, 0
        %v3173 = vsel %vm1576, %v3063, 0
        %v3176 = vsel %vm1576, %v3064, 0
        %3178 = vmatprep.subr.mxu0 0.0
        %3179 = vmatpush1.msra.mxu0 0.0
        %3180 = vmatprep.subr.mxu0 0.0
        %3181 = vmatpush1.msra.mxu0 0.0
        %3182 = vmatprep.subr.mxu0 0.0
        %3183 = vmatpush1.msra.mxu0 0.0
        %3184 = vmatprep.subr.mxu0 0.0
        %3185 = vmatpush1.msra.mxu0 0.0
        %3186 = vmatprep.subr.mxu0 0.0
        %3187 = vmatpush1.msra.mxu0 0.0
        %3188 = vmatprep.subr.mxu0 0.0
        %3189 = vmatpush1.msra.mxu0 0.0
        %3190 = vmatprep.subr.mxu0 0.0
        %3191 = vmatpush1.msra.mxu0 0.0
        %3192 = vmatprep.subr.mxu0 0.0
        %3193 = vmatpush1.msra.mxu0 0.0
        %3194 = vmatprep.subr.mxu0 0.0
        %3195 = vmatpush1.msra.mxu0 0.0
        %3196 = vmatprep.subr.mxu0 0.0
        %3197 = vmatpush1.msra.mxu0 0.0
        %3198 = vmatprep.subr.mxu0 0.0
        %3199 = vmatpush1.msra.mxu0 0.0
        %3200 = vmatprep.subr.mxu0 0.0
        %3201 = vmatpush1.msra.mxu0 0.0
        %3202 = vmatprep.subr.mxu0 0.0
        %3203 = vmatpush1.msra.mxu0 %v2999
        %3204 = vmatprep.subr.mxu0 0.0
        %3205 = vmatpush1.msra.mxu0 %v2998
        %3206 = vmatprep.subr.mxu0 0.0
        %3207 = vmatpush1.msra.mxu0 %v2997
        %3208 = vmatprep.subr.mxu0 0.0
        %3209 = vmatpush1.msra.mxu0 %v2996
        %3210 = vmatprep.subr.mxu0 0.0
        %3211 = vmatpush2.msra.mxu0 0.0
        %3212 = vmatprep.subr.mxu0 0.0
        %3213 = vmatpush2.msra.mxu0 0.0
        %3214 = vmatprep.subr.mxu0 0.0
        %3215 = vmatpush2.msra.mxu0 0.0
        %3216 = vmatprep.subr.mxu0 0.0
        %3217 = vmatpush2.msra.mxu0 0.0
        %3218 = vmatprep.subr.mxu0 0.0
        %3219 = vmatpush2.msra.mxu0 0.0
        %3220 = vmatprep.subr.mxu0 0.0
        %3221 = vmatpush2.msra.mxu0 0.0
        %3222 = vmatprep.subr.mxu0 0.0
        %3223 = vmatpush2.msra.mxu0 0.0
        %3224 = vmatprep.subr.mxu0 0.0
        %3225 = vmatpush2.msra.mxu0 0.0
        %3226 = vmatprep.subr.mxu0 0.0
        %3227 = vmatpush2.msra.mxu0 0.0
        %3228 = vmatprep.subr.mxu0 0.0
        %3229 = vmatpush2.msra.mxu0 0.0
        %3230 = vmatprep.subr.mxu0 0.0
        %3231 = vmatpush2.msra.mxu0 0.0
        %3232 = vmatprep.subr.mxu0 0.0
        %3233 = vmatpush2.msra.mxu0 0.0
        %3234 = vmatprep.subr.mxu0 0.0
        %3235 = vmatpush2.msra.mxu0 0.0
        %3236 = vmatprep.subr.mxu0 0.0
        %3237 = vmatpush2.msra.mxu0 0.0
        %3238 = vmatprep.subr.mxu0 0.0
        %3239 = vmatpush2.msra.mxu0 0.0
        %3240 = vmatprep.subr.mxu0 0.0
        %3241 = vmatpush2.msra.mxu0 0.0
        %3242 = vmatprep.mubr.f32.mxu0 0.0
        %3243 = vmatmul.mubr.f32.gmra.mxu0 %v3167
        %v3244 = vpop.f32.mrf.mxu0
        %v3245 = vadd.f32 %v3148, %v3244
        %v3246 = vpop.f32.mrf.mxu0
        %3247 = vmatprep.mubr.f32.mxu0 0.0
        %3248 = vmatmul.mubr.f32.gmra.mxu0 %v3170
        %v3249 = vpop.f32.mrf.mxu0
        %v3250 = vadd.f32 %v3153, %v3249
        %v3251 = vpop.f32.mrf.mxu0
        %3252 = vmatprep.mubr.f32.mxu0 0.0
        %3253 = vmatmul.mubr.f32.gmra.mxu0 %v3173
        %v3254 = vpop.f32.mrf.mxu0
        %v3255 = vadd.f32 %v3158, %v3254
        %v3256 = vpop.f32.mrf.mxu0
        %3257 = vmatprep.mubr.f32.mxu0 0.0
        %3258 = vmatmul.mubr.f32.gmra.mxu0 %v3176
        %v3259 = vpop.f32.mrf.mxu0
        %v3260 = vadd.f32 %v3163, %v3259
        %v3261 = vpop.f32.mrf.mxu0
        %3262 = vdwg.mxu0
        %s3263 = scalar_lea.vmem %s8, 64
        %v3264 = vld [vmem:[%s3263] sm:$0xff]
        %v3265 = vld [vmem:[%s3263 + $0x8] sm:$0xff]
        %v3266 = vld [vmem:[%s3263 + $0x10] sm:$0xff]
        %v3267 = vld [vmem:[%s3263 + $0x18] sm:$0xff]
        %v3269 = vsel %vm1576, %v3264, 0
        %v3272 = vsel %vm1576, %v3265, 0
        %v3275 = vsel %vm1576, %v3266, 0
        %v3278 = vsel %vm1576, %v3267, 0
        %3280 = vmatprep.subr.mxu0 0.0
        %3281 = vmatpush1.msra.mxu0 0.0
        %3282 = vmatprep.subr.mxu0 0.0
        %3283 = vmatpush1.msra.mxu0 0.0
        %3284 = vmatprep.subr.mxu0 0.0
        %3285 = vmatpush1.msra.mxu0 0.0
        %3286 = vmatprep.subr.mxu0 0.0
        %3287 = vmatpush1.msra.mxu0 0.0
        %3288 = vmatprep.subr.mxu0 0.0
        %3289 = vmatpush1.msra.mxu0 0.0
        %3290 = vmatprep.subr.mxu0 0.0
        %3291 = vmatpush1.msra.mxu0 0.0
        %3292 = vmatprep.subr.mxu0 0.0
        %3293 = vmatpush1.msra.mxu0 0.0
        %3294 = vmatprep.subr.mxu0 0.0
        %3295 = vmatpush1.msra.mxu0 0.0
        %3296 = vmatprep.subr.mxu0 0.0
        %3297 = vmatpush1.msra.mxu0 0.0
        %3298 = vmatprep.subr.mxu0 0.0
        %3299 = vmatpush1.msra.mxu0 0.0
        %3300 = vmatprep.subr.mxu0 0.0
        %3301 = vmatpush1.msra.mxu0 0.0
        %3302 = vmatprep.subr.mxu0 0.0
        %3303 = vmatpush1.msra.mxu0 0.0
        %3304 = vmatprep.subr.mxu0 0.0
        %3305 = vmatpush1.msra.mxu0 %v3059
        %3306 = vmatprep.subr.mxu0 0.0
        %3307 = vmatpush1.msra.mxu0 %v3058
        %3308 = vmatprep.subr.mxu0 0.0
        %3309 = vmatpush1.msra.mxu0 %v3057
        %3310 = vmatprep.subr.mxu0 0.0
        %3311 = vmatpush1.msra.mxu0 %v3056
        %3312 = vmatprep.subr.mxu0 0.0
        %3313 = vmatpush2.msra.mxu0 0.0
        %3314 = vmatprep.subr.mxu0 0.0
        %3315 = vmatpush2.msra.mxu0 0.0
        %3316 = vmatprep.subr.mxu0 0.0
        %3317 = vmatpush2.msra.mxu0 0.0
        %3318 = vmatprep.subr.mxu0 0.0
        %3319 = vmatpush2.msra.mxu0 0.0
        %3320 = vmatprep.subr.mxu0 0.0
        %3321 = vmatpush2.msra.mxu0 0.0
        %3322 = vmatprep.subr.mxu0 0.0
        %3323 = vmatpush2.msra.mxu0 0.0
        %3324 = vmatprep.subr.mxu0 0.0
        %3325 = vmatpush2.msra.mxu0 0.0
        %3326 = vmatprep.subr.mxu0 0.0
        %3327 = vmatpush2.msra.mxu0 0.0
        %3328 = vmatprep.subr.mxu0 0.0
        %3329 = vmatpush2.msra.mxu0 0.0
        %3330 = vmatprep.subr.mxu0 0.0
        %3331 = vmatpush2.msra.mxu0 0.0
        %3332 = vmatprep.subr.mxu0 0.0
        %3333 = vmatpush2.msra.mxu0 0.0
        %3334 = vmatprep.subr.mxu0 0.0
        %3335 = vmatpush2.msra.mxu0 0.0
        %3336 = vmatprep.subr.mxu0 0.0
        %3337 = vmatpush2.msra.mxu0 0.0
        %3338 = vmatprep.subr.mxu0 0.0
        %3339 = vmatpush2.msra.mxu0 0.0
        %3340 = vmatprep.subr.mxu0 0.0
        %3341 = vmatpush2.msra.mxu0 0.0
        %3342 = vmatprep.subr.mxu0 0.0
        %3343 = vmatpush2.msra.mxu0 0.0
        %3344 = vmatprep.mubr.f32.mxu0 0.0
        %3345 = vmatmul.mubr.f32.gmra.mxu0 %v3269
        %v3346 = vpop.f32.mrf.mxu0
        %v3347 = vadd.f32 0.0, %v3346
        %v3348 = vpop.f32.mrf.mxu0
        %3349 = vmatprep.mubr.f32.mxu0 0.0
        %3350 = vmatmul.mubr.f32.gmra.mxu0 %v3272
        %v3351 = vpop.f32.mrf.mxu0
        %v3352 = vadd.f32 0.0, %v3351
        %v3353 = vpop.f32.mrf.mxu0
        %3354 = vmatprep.mubr.f32.mxu0 0.0
        %3355 = vmatmul.mubr.f32.gmra.mxu0 %v3275
        %v3356 = vpop.f32.mrf.mxu0
        %v3357 = vadd.f32 0.0, %v3356
        %v3358 = vpop.f32.mrf.mxu0
        %3359 = vmatprep.mubr.f32.mxu0 0.0
        %3360 = vmatmul.mubr.f32.gmra.mxu0 %v3278
        %v3361 = vpop.f32.mrf.mxu0
        %v3362 = vadd.f32 0.0, %v3361
        %v3363 = vpop.f32.mrf.mxu0
        %3364 = vdwg.mxu0
        %v3365 = vadd.f32 %v3245, %v3347
        %v3366 = vadd.f32 %v3250, %v3352
        %v3367 = vadd.f32 %v3255, %v3357
        %v3368 = vadd.f32 %v3260, %v3362
        %3369 = vset.pattern.permute.xlu0 7
        %3370 = vperm.xlu0 %3369, %v2968
        %v3371 = vpop.permute.xlu0 %3370
        %3373 = vset.pattern.permute.xlu0 7
        %3374 = vperm.xlu0 %3373, %v2969
        %v3375 = vpop.permute.xlu0 %3374
        %3377 = vset.pattern.permute.xlu0 7
        %3378 = vperm.xlu0 %3377, %v2970
        %v3379 = vpop.permute.xlu0 %3378
        %3381 = vset.pattern.permute.xlu0 7
        %3382 = vperm.xlu0 %3381, %v2971
        %v3383 = vpop.permute.xlu0 %3382
        %v3385 = vadd.f32 %v3365, %v3371
        %v3386 = vadd.f32 %v3366, %v3375
        %v3387 = vadd.f32 %v3367, %v3379
        %v3388 = vadd.f32 %v3368, %v3383
        %v3389 = vmax.f32 %v3385, 0.0
        %v3390 = vmax.f32 %v3386, 0.0
        %v3391 = vmax.f32 %v3387, 0.0
        %v3392 = vmax.f32 %v3388, 0.0
        %3393 = vst.msk [vmem:[%s555] sm:$0xff] %vm651, %v3389
        %3394 = vst.msk [vmem:[%s555 + $0x8] sm:$0xff] %vm651, %v3390
        %3395 = vst.msk [vmem:[%s555 + $0x10] sm:$0xff] %vm651, %v3391
        %3396 = vst.msk [vmem:[%s555 + $0x18] sm:$0xff] %vm651, %v3392
        %3397 = vrot.lane.b32.xlu0 %v3389, 8
        %v3398 = vpop.permute.xlu0 %3397
        %v3399 = vsel %vm2596, %v3398, %v3389
        %3400 = vrot.lane.b32.xlu0 %v3390, 8
        %v3401 = vpop.permute.xlu0 %3400
        %v3402 = vsel %vm2596, %v3401, %v3390
        %3403 = vrot.lane.b32.xlu0 %v3391, 8
        %v3404 = vpop.permute.xlu0 %3403
        %v3405 = vsel %vm2596, %v3404, %v3391
        %3406 = vrot.lane.b32.xlu0 %v3392, 8
        %v3407 = vpop.permute.xlu0 %3406
        %v3408 = vsel %vm2596, %v3407, %v3392
        %3409 = vrot.lane.b32.xlu0 %v3399, 8
        %v3410 = vpop.permute.xlu0 %3409
        %3411 = vrot.lane.b32.xlu0 %v3402, 8
        %v3412 = vpop.permute.xlu0 %3411
        %3413 = vrot.lane.b32.xlu0 %v3405, 8
        %v3414 = vpop.permute.xlu0 %3413
        %3415 = vrot.lane.b32.xlu0 %v3408, 8
        %v3416 = vpop.permute.xlu0 %3415
        %v3417 = vsel %vm2596, %v3410, %v3389
        %v3418 = vsel %vm2596, %v3412, %v3390
        %v3419 = vsel %vm2596, %v3414, %v3391
        %v3420 = vsel %vm2596, %v3416, %v3392
        %3425 = vrot.lane.b32.xlu0 %v3417, 127
        %v3426 = vpop.permute.xlu0 %3425
        %3427 = vrot.lane.b32.xlu0 %v3418, 127
        %v3428 = vpop.permute.xlu0 %3427
        %3429 = vrot.lane.b32.xlu0 %v3419, 127
        %v3430 = vpop.permute.xlu0 %3429
        %3431 = vrot.lane.b32.xlu0 %v3420, 127
        %v3432 = vpop.permute.xlu0 %3431
        %v3437 = vmax.f32 %v3389, %v3426
        %v3438 = vmax.f32 %v3390, %v3428
        %v3439 = vmax.f32 %v3391, %v3430
        %v3440 = vmax.f32 %v3392, %v3432
        %v3442 = vsel %vm651, %v3437, 0
        %v3445 = vsel %vm651, %v3438, 0
        %v3448 = vsel %vm651, %v3439, 0
        %v3451 = vsel %vm651, %v3440, 0
        %3453 = vmatprep.subr.mxu0 0.0
        %3454 = vmatpush1.msra.mxu0 0.0
        %3455 = vmatprep.subr.mxu0 0.0
        %3456 = vmatpush1.msra.mxu0 0.0
        %3457 = vmatprep.subr.mxu0 0.0
        %3458 = vmatpush1.msra.mxu0 0.0
        %3459 = vmatprep.subr.mxu0 0.0
        %3460 = vmatpush1.msra.mxu0 0.0
        %3461 = vmatprep.subr.mxu0 0.0
        %3462 = vmatpush1.msra.mxu0 0.0
        %3463 = vmatprep.subr.mxu0 0.0
        %3464 = vmatpush1.msra.mxu0 0.0
        %3465 = vmatprep.subr.mxu0 0.0
        %3466 = vmatpush1.msra.mxu0 0.0
        %3467 = vmatprep.subr.mxu0 0.0
        %3468 = vmatpush1.msra.mxu0 0.0
        %3469 = vmatprep.subr.mxu0 0.0
        %3470 = vmatpush1.msra.mxu0 0.0
        %3471 = vmatprep.subr.mxu0 0.0
        %3472 = vmatpush1.msra.mxu0 0.0
        %3473 = vmatprep.subr.mxu0 0.0
        %3474 = vmatpush1.msra.mxu0 0.0
        %3475 = vmatprep.subr.mxu0 0.0
        %3476 = vmatpush1.msra.mxu0 0.0
        %3477 = vmatprep.subr.mxu0 0.0
        %3478 = vmatpush1.msra.mxu0 0.0
        %3479 = vmatprep.subr.mxu0 0.0
        %3480 = vmatpush1.msra.mxu0 0.0
        %3481 = vmatprep.subr.mxu0 0.0
        %3482 = vmatpush1.msra.mxu0 0.0
        %3483 = vmatprep.subr.mxu0 0.0
        %3484 = vmatpush1.msra.mxu0 %v900
        %3485 = vmatprep.subr.mxu0 0.0
        %3486 = vmatpush2.msra.mxu0 0.0
        %3487 = vmatprep.subr.mxu0 0.0
        %3488 = vmatpush2.msra.mxu0 0.0
        %3489 = vmatprep.subr.mxu0 0.0
        %3490 = vmatpush2.msra.mxu0 0.0
        %3491 = vmatprep.subr.mxu0 0.0
        %3492 = vmatpush2.msra.mxu0 0.0
        %3493 = vmatprep.subr.mxu0 0.0
        %3494 = vmatpush2.msra.mxu0 0.0
        %3495 = vmatprep.subr.mxu0 0.0
        %3496 = vmatpush2.msra.mxu0 0.0
        %3497 = vmatprep.subr.mxu0 0.0
        %3498 = vmatpush2.msra.mxu0 0.0
        %3499 = vmatprep.subr.mxu0 0.0
        %3500 = vmatpush2.msra.mxu0 0.0
        %3501 = vmatprep.subr.mxu0 0.0
        %3502 = vmatpush2.msra.mxu0 0.0
        %3503 = vmatprep.subr.mxu0 0.0
        %3504 = vmatpush2.msra.mxu0 0.0
        %3505 = vmatprep.subr.mxu0 0.0
        %3506 = vmatpush2.msra.mxu0 0.0
        %3507 = vmatprep.subr.mxu0 0.0
        %3508 = vmatpush2.msra.mxu0 0.0
        %3509 = vmatprep.subr.mxu0 0.0
        %3510 = vmatpush2.msra.mxu0 0.0
        %3511 = vmatprep.subr.mxu0 0.0
        %3512 = vmatpush2.msra.mxu0 0.0
        %3513 = vmatprep.subr.mxu0 0.0
        %3514 = vmatpush2.msra.mxu0 0.0
        %3515 = vmatprep.subr.mxu0 0.0
        %3516 = vmatpush2.msra.mxu0 0.0
        %3517 = vmatprep.mubr.f32.mxu0 0.0
        %3518 = vmatmul.mubr.f32.gmra.mxu0 %v3442
        %v3519 = vpop.f32.mrf.mxu0
        %v3520 = vadd.f32 0.0, %v3519
        %v3521 = vpop.f32.mrf.mxu0
        %3522 = vmatprep.mubr.f32.mxu0 0.0
        %3523 = vmatmul.mubr.f32.gmra.mxu0 %v3445
        %v3524 = vpop.f32.mrf.mxu0
        %v3525 = vadd.f32 0.0, %v3524
        %v3526 = vpop.f32.mrf.mxu0
        %3527 = vmatprep.mubr.f32.mxu0 0.0
        %3528 = vmatmul.mubr.f32.gmra.mxu0 %v3448
        %v3529 = vpop.f32.mrf.mxu0
        %v3530 = vadd.f32 0.0, %v3529
        %v3531 = vpop.f32.mrf.mxu0
        %3532 = vmatprep.mubr.f32.mxu0 0.0
        %3533 = vmatmul.mubr.f32.gmra.mxu0 %v3451
        %v3534 = vpop.f32.mrf.mxu0
        %v3535 = vadd.f32 0.0, %v3534
        %v3536 = vpop.f32.mrf.mxu0
        %3537 = vdwg.mxu0
        %vm3538 = vcmp.eq.s32.totalorder %v563, 3
        %vm3539 = vcmask 1047584
        %3540 = vrot.lane.b32.xlu0 %v3520, 4
        %v3541 = vpop.permute.xlu0 %3540
        %v3542 = vsel %vm3539, %v3541, %v3520
        %3543 = vrot.lane.b32.xlu0 %v3525, 4
        %v3544 = vpop.permute.xlu0 %3543
        %v3545 = vsel %vm3539, %v3544, %v3525
        %3546 = vrot.lane.b32.xlu0 %v3530, 4
        %v3547 = vpop.permute.xlu0 %3546
        %v3548 = vsel %vm3539, %v3547, %v3530
        %3549 = vrot.lane.b32.xlu0 %v3535, 4
        %v3550 = vpop.permute.xlu0 %3549
        %v3551 = vsel %vm3539, %v3550, %v3535
        %3552 = vrot.lane.b32.xlu0 %v3542, 4
        %v3553 = vpop.permute.xlu0 %3552
        %3554 = vrot.lane.b32.xlu0 %v3545, 4
        %v3555 = vpop.permute.xlu0 %3554
        %3556 = vrot.lane.b32.xlu0 %v3548, 4
        %v3557 = vpop.permute.xlu0 %3556
        %3558 = vrot.lane.b32.xlu0 %v3551, 4
        %v3559 = vpop.permute.xlu0 %3558
        %v3560 = vsel %vm3539, %v3553, %v3520
        %v3561 = vsel %vm3539, %v3555, %v3525
        %v3562 = vsel %vm3539, %v3557, %v3530
        %v3563 = vsel %vm3539, %v3559, %v3535
        %3568 = vrot.lane.b32.xlu0 %v3560, 125
        %v3569 = vpop.permute.xlu0 %3568
        %3570 = vrot.lane.b32.xlu0 %v3561, 125
        %v3571 = vpop.permute.xlu0 %3570
        %3572 = vrot.lane.b32.xlu0 %v3562, 125
        %v3573 = vpop.permute.xlu0 %3572
        %3574 = vrot.lane.b32.xlu0 %v3563, 125
        %v3575 = vpop.permute.xlu0 %3574
        %v3580 = vsel %vm636, 0.0, %v3569
        %v3581 = vsel %vm636, 0.0, %v3571
        %v3582 = vsel %vm636, 0.0, %v3573
        %v3583 = vsel %vm636, 0.0, %v3575
        %v3584 = vsel %vm3538, 1, 0
        %vm3585 = vcmp.eq.s32.totalorder %v3584, 1
        %3586 = vrot.lane.b32.xlu0 %v3560, 127
        %v3587 = vpop.permute.xlu0 %3586
        %3588 = vrot.lane.b32.xlu0 %v3561, 127
        %v3589 = vpop.permute.xlu0 %3588
        %3590 = vrot.lane.b32.xlu0 %v3562, 127
        %v3591 = vpop.permute.xlu0 %3590
        %3592 = vrot.lane.b32.xlu0 %v3563, 127
        %v3593 = vpop.permute.xlu0 %3592
        %v3598 = vsel %vm3585, 0.0, %v3587
        %v3599 = vsel %vm3585, 0.0, %v3589
        %v3600 = vsel %vm3585, 0.0, %v3591
        %v3601 = vsel %vm3585, 0.0, %v3593
        %s3602 = scalar_lea.vmem %s9, 64
        %v3603 = vld [vmem:[%s3602] sm:$0xff]
        %v3604 = vld [vmem:[%s3602 + $0x8] sm:$0xff]
        %v3605 = vld [vmem:[%s3602 + $0x10] sm:$0xff]
        %v3606 = vld [vmem:[%s3602 + $0x18] sm:$0xff]
        %v3607 = vld [vmem:[%s3602 + $0x20] sm:$0xff]
        %v3608 = vld [vmem:[%s3602 + $0x28] sm:$0xff]
        %v3609 = vld [vmem:[%s3602 + $0x30] sm:$0xff]
        %v3610 = vld [vmem:[%s3602 + $0x38] sm:$0xff]
        %v3611 = vld [vmem:[%s9] sm:$0xff]
        %v3612 = vld [vmem:[%s9 + $0x8] sm:$0xff]
        %v3613 = vld [vmem:[%s9 + $0x10] sm:$0xff]
        %v3614 = vld [vmem:[%s9 + $0x18] sm:$0xff]
        %v3615 = vld [vmem:[%s9 + $0x20] sm:$0xff]
        %v3616 = vld [vmem:[%s9 + $0x28] sm:$0xff]
        %v3617 = vld [vmem:[%s9 + $0x30] sm:$0xff]
        %v3618 = vld [vmem:[%s9 + $0x38] sm:$0xff]
        %v3620 = vsel %vm1576, %v3611, 0
        %v3623 = vsel %vm1576, %v3612, 0
        %v3626 = vsel %vm1576, %v3613, 0
        %v3629 = vsel %vm1576, %v3614, 0
        %v3632 = vsel %vm1576, %v3615, 0
        %v3635 = vsel %vm1576, %v3616, 0
        %v3638 = vsel %vm1576, %v3617, 0
        %v3641 = vsel %vm1576, %v3618, 0
        %3643 = vmatprep.subr.mxu0 0.0
        %3644 = vmatpush1.msra.mxu0 0.0
        %3645 = vmatprep.subr.mxu0 0.0
        %3646 = vmatpush1.msra.mxu0 0.0
        %3647 = vmatprep.subr.mxu0 0.0
        %3648 = vmatpush1.msra.mxu0 0.0
        %3649 = vmatprep.subr.mxu0 0.0
        %3650 = vmatpush1.msra.mxu0 0.0
        %3651 = vmatprep.subr.mxu0 0.0
        %3652 = vmatpush1.msra.mxu0 0.0
        %3653 = vmatprep.subr.mxu0 0.0
        %3654 = vmatpush1.msra.mxu0 0.0
        %3655 = vmatprep.subr.mxu0 0.0
        %3656 = vmatpush1.msra.mxu0 0.0
        %3657 = vmatprep.subr.mxu0 0.0
        %3658 = vmatpush1.msra.mxu0 0.0
        %3659 = vmatprep.subr.mxu0 0.0
        %3660 = vmatpush1.msra.mxu0 0.0
        %3661 = vmatprep.subr.mxu0 0.0
        %3662 = vmatpush1.msra.mxu0 0.0
        %3663 = vmatprep.subr.mxu0 0.0
        %3664 = vmatpush1.msra.mxu0 0.0
        %3665 = vmatprep.subr.mxu0 0.0
        %3666 = vmatpush1.msra.mxu0 0.0
        %3667 = vmatprep.subr.mxu0 0.0
        %3668 = vmatpush1.msra.mxu0 %v3583
        %3669 = vmatprep.subr.mxu0 0.0
        %3670 = vmatpush1.msra.mxu0 %v3582
        %3671 = vmatprep.subr.mxu0 0.0
        %3672 = vmatpush1.msra.mxu0 %v3581
        %3673 = vmatprep.subr.mxu0 0.0
        %3674 = vmatpush1.msra.mxu0 %v3580
        %3675 = vmatprep.subr.mxu0 0.0
        %3676 = vmatpush2.msra.mxu0 0.0
        %3677 = vmatprep.subr.mxu0 0.0
        %3678 = vmatpush2.msra.mxu0 0.0
        %3679 = vmatprep.subr.mxu0 0.0
        %3680 = vmatpush2.msra.mxu0 0.0
        %3681 = vmatprep.subr.mxu0 0.0
        %3682 = vmatpush2.msra.mxu0 0.0
        %3683 = vmatprep.subr.mxu0 0.0
        %3684 = vmatpush2.msra.mxu0 0.0
        %3685 = vmatprep.subr.mxu0 0.0
        %3686 = vmatpush2.msra.mxu0 0.0
        %3687 = vmatprep.subr.mxu0 0.0
        %3688 = vmatpush2.msra.mxu0 0.0
        %3689 = vmatprep.subr.mxu0 0.0
        %3690 = vmatpush2.msra.mxu0 0.0
        %3691 = vmatprep.subr.mxu0 0.0
        %3692 = vmatpush2.msra.mxu0 0.0
        %3693 = vmatprep.subr.mxu0 0.0
        %3694 = vmatpush2.msra.mxu0 0.0
        %3695 = vmatprep.subr.mxu0 0.0
        %3696 = vmatpush2.msra.mxu0 0.0
        %3697 = vmatprep.subr.mxu0 0.0
        %3698 = vmatpush2.msra.mxu0 0.0
        %3699 = vmatprep.subr.mxu0 0.0
        %3700 = vmatpush2.msra.mxu0 0.0
        %3701 = vmatprep.subr.mxu0 0.0
        %3702 = vmatpush2.msra.mxu0 0.0
        %3703 = vmatprep.subr.mxu0 0.0
        %3704 = vmatpush2.msra.mxu0 0.0
        %3705 = vmatprep.subr.mxu0 0.0
        %3706 = vmatpush2.msra.mxu0 0.0
        %3707 = vmatprep.mubr.f32.mxu0 0.0
        %3708 = vmatmul.mubr.f32.gmra.mxu0 %v3620
        %v3709 = vpop.f32.mrf.mxu0
        %v3710 = vadd.f32 0.0, %v3709
        %v3711 = vpop.f32.mrf.mxu0
        %3712 = vmatprep.mubr.f32.mxu0 0.0
        %3713 = vmatmul.mubr.f32.gmra.mxu0 %v3623
        %v3714 = vpop.f32.mrf.mxu0
        %v3715 = vadd.f32 0.0, %v3714
        %v3716 = vpop.f32.mrf.mxu0
        %3717 = vmatprep.mubr.f32.mxu0 0.0
        %3718 = vmatmul.mubr.f32.gmra.mxu0 %v3626
        %v3719 = vpop.f32.mrf.mxu0
        %v3720 = vadd.f32 0.0, %v3719
        %v3721 = vpop.f32.mrf.mxu0
        %3722 = vmatprep.mubr.f32.mxu0 0.0
        %3723 = vmatmul.mubr.f32.gmra.mxu0 %v3629
        %v3724 = vpop.f32.mrf.mxu0
        %v3725 = vadd.f32 0.0, %v3724
        %v3726 = vpop.f32.mrf.mxu0
        %3727 = vmatprep.mubr.f32.mxu0 0.0
        %3728 = vmatmul.mubr.f32.gmra.mxu0 %v3632
        %v3729 = vpop.f32.mrf.mxu0
        %v3730 = vadd.f32 0.0, %v3729
        %v3731 = vpop.f32.mrf.mxu0
        %3732 = vmatprep.mubr.f32.mxu0 0.0
        %3733 = vmatmul.mubr.f32.gmra.mxu0 %v3635
        %v3734 = vpop.f32.mrf.mxu0
        %v3735 = vadd.f32 0.0, %v3734
        %v3736 = vpop.f32.mrf.mxu0
        %3737 = vmatprep.mubr.f32.mxu0 0.0
        %3738 = vmatmul.mubr.f32.gmra.mxu0 %v3638
        %v3739 = vpop.f32.mrf.mxu0
        %v3740 = vadd.f32 0.0, %v3739
        %v3741 = vpop.f32.mrf.mxu0
        %3742 = vmatprep.mubr.f32.mxu0 0.0
        %3743 = vmatmul.mubr.f32.gmra.mxu0 %v3641
        %v3744 = vpop.f32.mrf.mxu0
        %v3745 = vadd.f32 0.0, %v3744
        %v3746 = vpop.f32.mrf.mxu0
        %3747 = vdwg.mxu0
        %v3749 = vsel %vm1576, %v3603, 0
        %v3752 = vsel %vm1576, %v3604, 0
        %v3755 = vsel %vm1576, %v3605, 0
        %v3758 = vsel %vm1576, %v3606, 0
        %v3761 = vsel %vm1576, %v3607, 0
        %v3764 = vsel %vm1576, %v3608, 0
        %v3767 = vsel %vm1576, %v3609, 0
        %v3770 = vsel %vm1576, %v3610, 0
        %3772 = vmatprep.subr.mxu0 0.0
        %3773 = vmatpush1.msra.mxu0 0.0
        %3774 = vmatprep.subr.mxu0 0.0
        %3775 = vmatpush1.msra.mxu0 0.0
        %3776 = vmatprep.subr.mxu0 0.0
        %3777 = vmatpush1.msra.mxu0 0.0
        %3778 = vmatprep.subr.mxu0 0.0
        %3779 = vmatpush1.msra.mxu0 0.0
        %3780 = vmatprep.subr.mxu0 0.0
        %3781 = vmatpush1.msra.mxu0 0.0
        %3782 = vmatprep.subr.mxu0 0.0
        %3783 = vmatpush1.msra.mxu0 0.0
        %3784 = vmatprep.subr.mxu0 0.0
        %3785 = vmatpush1.msra.mxu0 0.0
        %3786 = vmatprep.subr.mxu0 0.0
        %3787 = vmatpush1.msra.mxu0 0.0
        %3788 = vmatprep.subr.mxu0 0.0
        %3789 = vmatpush1.msra.mxu0 0.0
        %3790 = vmatprep.subr.mxu0 0.0
        %3791 = vmatpush1.msra.mxu0 0.0
        %3792 = vmatprep.subr.mxu0 0.0
        %3793 = vmatpush1.msra.mxu0 0.0
        %3794 = vmatprep.subr.mxu0 0.0
        %3795 = vmatpush1.msra.mxu0 0.0
        %3796 = vmatprep.subr.mxu0 0.0
        %3797 = vmatpush1.msra.mxu0 %v3535
        %3798 = vmatprep.subr.mxu0 0.0
        %3799 = vmatpush1.msra.mxu0 %v3530
        %3800 = vmatprep.subr.mxu0 0.0
        %3801 = vmatpush1.msra.mxu0 %v3525
        %3802 = vmatprep.subr.mxu0 0.0
        %3803 = vmatpush1.msra.mxu0 %v3520
        %3804 = vmatprep.subr.mxu0 0.0
        %3805 = vmatpush2.msra.mxu0 0.0
        %3806 = vmatprep.subr.mxu0 0.0
        %3807 = vmatpush2.msra.mxu0 0.0
        %3808 = vmatprep.subr.mxu0 0.0
        %3809 = vmatpush2.msra.mxu0 0.0
        %3810 = vmatprep.subr.mxu0 0.0
        %3811 = vmatpush2.msra.mxu0 0.0
        %3812 = vmatprep.subr.mxu0 0.0
        %3813 = vmatpush2.msra.mxu0 0.0
        %3814 = vmatprep.subr.mxu0 0.0
        %3815 = vmatpush2.msra.mxu0 0.0
        %3816 = vmatprep.subr.mxu0 0.0
        %3817 = vmatpush2.msra.mxu0 0.0
        %3818 = vmatprep.subr.mxu0 0.0
        %3819 = vmatpush2.msra.mxu0 0.0
        %3820 = vmatprep.subr.mxu0 0.0
        %3821 = vmatpush2.msra.mxu0 0.0
        %3822 = vmatprep.subr.mxu0 0.0
        %3823 = vmatpush2.msra.mxu0 0.0
        %3824 = vmatprep.subr.mxu0 0.0
        %3825 = vmatpush2.msra.mxu0 0.0
        %3826 = vmatprep.subr.mxu0 0.0
        %3827 = vmatpush2.msra.mxu0 0.0
        %3828 = vmatprep.subr.mxu0 0.0
        %3829 = vmatpush2.msra.mxu0 0.0
        %3830 = vmatprep.subr.mxu0 0.0
        %3831 = vmatpush2.msra.mxu0 0.0
        %3832 = vmatprep.subr.mxu0 0.0
        %3833 = vmatpush2.msra.mxu0 0.0
        %3834 = vmatprep.subr.mxu0 0.0
        %3835 = vmatpush2.msra.mxu0 0.0
        %3836 = vmatprep.mubr.f32.mxu0 0.0
        %3837 = vmatmul.mubr.f32.gmra.mxu0 %v3749
        %v3838 = vpop.f32.mrf.mxu0
        %v3839 = vadd.f32 %v3710, %v3838
        %v3840 = vpop.f32.mrf.mxu0
        %3841 = vmatprep.mubr.f32.mxu0 0.0
        %3842 = vmatmul.mubr.f32.gmra.mxu0 %v3752
        %v3843 = vpop.f32.mrf.mxu0
        %v3844 = vadd.f32 %v3715, %v3843
        %v3845 = vpop.f32.mrf.mxu0
        %3846 = vmatprep.mubr.f32.mxu0 0.0
        %3847 = vmatmul.mubr.f32.gmra.mxu0 %v3755
        %v3848 = vpop.f32.mrf.mxu0
        %v3849 = vadd.f32 %v3720, %v3848
        %v3850 = vpop.f32.mrf.mxu0
        %3851 = vmatprep.mubr.f32.mxu0 0.0
        %3852 = vmatmul.mubr.f32.gmra.mxu0 %v3758
        %v3853 = vpop.f32.mrf.mxu0
        %v3854 = vadd.f32 %v3725, %v3853
        %v3855 = vpop.f32.mrf.mxu0
        %3856 = vmatprep.mubr.f32.mxu0 0.0
        %3857 = vmatmul.mubr.f32.gmra.mxu0 %v3761
        %v3858 = vpop.f32.mrf.mxu0
        %v3859 = vadd.f32 %v3730, %v3858
        %v3860 = vpop.f32.mrf.mxu0
        %3861 = vmatprep.mubr.f32.mxu0 0.0
        %3862 = vmatmul.mubr.f32.gmra.mxu0 %v3764
        %v3863 = vpop.f32.mrf.mxu0
        %v3864 = vadd.f32 %v3735, %v3863
        %v3865 = vpop.f32.mrf.mxu0
        %3866 = vmatprep.mubr.f32.mxu0 0.0
        %3867 = vmatmul.mubr.f32.gmra.mxu0 %v3767
        %v3868 = vpop.f32.mrf.mxu0
        %v3869 = vadd.f32 %v3740, %v3868
        %v3870 = vpop.f32.mrf.mxu0
        %3871 = vmatprep.mubr.f32.mxu0 0.0
        %3872 = vmatmul.mubr.f32.gmra.mxu0 %v3770
        %v3873 = vpop.f32.mrf.mxu0
        %v3874 = vadd.f32 %v3745, %v3873
        %v3875 = vpop.f32.mrf.mxu0
        %3876 = vdwg.mxu0
        %s3877 = scalar_lea.vmem %s9, 128
        %v3878 = vld [vmem:[%s3877] sm:$0xff]
        %v3879 = vld [vmem:[%s3877 + $0x8] sm:$0xff]
        %v3880 = vld [vmem:[%s3877 + $0x10] sm:$0xff]
        %v3881 = vld [vmem:[%s3877 + $0x18] sm:$0xff]
        %v3882 = vld [vmem:[%s3877 + $0x20] sm:$0xff]
        %v3883 = vld [vmem:[%s3877 + $0x28] sm:$0xff]
        %v3884 = vld [vmem:[%s3877 + $0x30] sm:$0xff]
        %v3885 = vld [vmem:[%s3877 + $0x38] sm:$0xff]
        %v3887 = vsel %vm1576, %v3878, 0
        %v3890 = vsel %vm1576, %v3879, 0
        %v3893 = vsel %vm1576, %v3880, 0
        %v3896 = vsel %vm1576, %v3881, 0
        %v3899 = vsel %vm1576, %v3882, 0
        %v3902 = vsel %vm1576, %v3883, 0
        %v3905 = vsel %vm1576, %v3884, 0
        %v3908 = vsel %vm1576, %v3885, 0
        %3910 = vmatprep.subr.mxu0 0.0
        %3911 = vmatpush1.msra.mxu0 0.0
        %3912 = vmatprep.subr.mxu0 0.0
        %3913 = vmatpush1.msra.mxu0 0.0
        %3914 = vmatprep.subr.mxu0 0.0
        %3915 = vmatpush1.msra.mxu0 0.0
        %3916 = vmatprep.subr.mxu0 0.0
        %3917 = vmatpush1.msra.mxu0 0.0
        %3918 = vmatprep.subr.mxu0 0.0
        %3919 = vmatpush1.msra.mxu0 0.0
        %3920 = vmatprep.subr.mxu0 0.0
        %3921 = vmatpush1.msra.mxu0 0.0
        %3922 = vmatprep.subr.mxu0 0.0
        %3923 = vmatpush1.msra.mxu0 0.0
        %3924 = vmatprep.subr.mxu0 0.0
        %3925 = vmatpush1.msra.mxu0 0.0
        %3926 = vmatprep.subr.mxu0 0.0
        %3927 = vmatpush1.msra.mxu0 0.0
        %3928 = vmatprep.subr.mxu0 0.0
        %3929 = vmatpush1.msra.mxu0 0.0
        %3930 = vmatprep.subr.mxu0 0.0
        %3931 = vmatpush1.msra.mxu0 0.0
        %3932 = vmatprep.subr.mxu0 0.0
        %3933 = vmatpush1.msra.mxu0 0.0
        %3934 = vmatprep.subr.mxu0 0.0
        %3935 = vmatpush1.msra.mxu0 %v3601
        %3936 = vmatprep.subr.mxu0 0.0
        %3937 = vmatpush1.msra.mxu0 %v3600
        %3938 = vmatprep.subr.mxu0 0.0
        %3939 = vmatpush1.msra.mxu0 %v3599
        %3940 = vmatprep.subr.mxu0 0.0
        %3941 = vmatpush1.msra.mxu0 %v3598
        %3942 = vmatprep.subr.mxu0 0.0
        %3943 = vmatpush2.msra.mxu0 0.0
        %3944 = vmatprep.subr.mxu0 0.0
        %3945 = vmatpush2.msra.mxu0 0.0
        %3946 = vmatprep.subr.mxu0 0.0
        %3947 = vmatpush2.msra.mxu0 0.0
        %3948 = vmatprep.subr.mxu0 0.0
        %3949 = vmatpush2.msra.mxu0 0.0
        %3950 = vmatprep.subr.mxu0 0.0
        %3951 = vmatpush2.msra.mxu0 0.0
        %3952 = vmatprep.subr.mxu0 0.0
        %3953 = vmatpush2.msra.mxu0 0.0
        %3954 = vmatprep.subr.mxu0 0.0
        %3955 = vmatpush2.msra.mxu0 0.0
        %3956 = vmatprep.subr.mxu0 0.0
        %3957 = vmatpush2.msra.mxu0 0.0
        %3958 = vmatprep.subr.mxu0 0.0
        %3959 = vmatpush2.msra.mxu0 0.0
        %3960 = vmatprep.subr.mxu0 0.0
        %3961 = vmatpush2.msra.mxu0 0.0
        %3962 = vmatprep.subr.mxu0 0.0
        %3963 = vmatpush2.msra.mxu0 0.0
        %3964 = vmatprep.subr.mxu0 0.0
        %3965 = vmatpush2.msra.mxu0 0.0
        %3966 = vmatprep.subr.mxu0 0.0
        %3967 = vmatpush2.msra.mxu0 0.0
        %3968 = vmatprep.subr.mxu0 0.0
        %3969 = vmatpush2.msra.mxu0 0.0
        %3970 = vmatprep.subr.mxu0 0.0
        %3971 = vmatpush2.msra.mxu0 0.0
        %3972 = vmatprep.subr.mxu0 0.0
        %3973 = vmatpush2.msra.mxu0 0.0
        %3974 = vmatprep.mubr.f32.mxu0 0.0
        %3975 = vmatmul.mubr.f32.gmra.mxu0 %v3887
        %v3976 = vpop.f32.mrf.mxu0
        %v3977 = vadd.f32 0.0, %v3976
        %v3978 = vpop.f32.mrf.mxu0
        %3979 = vmatprep.mubr.f32.mxu0 0.0
        %3980 = vmatmul.mubr.f32.gmra.mxu0 %v3890
        %v3981 = vpop.f32.mrf.mxu0
        %v3982 = vadd.f32 0.0, %v3981
        %v3983 = vpop.f32.mrf.mxu0
        %3984 = vmatprep.mubr.f32.mxu0 0.0
        %3985 = vmatmul.mubr.f32.gmra.mxu0 %v3893
        %v3986 = vpop.f32.mrf.mxu0
        %v3987 = vadd.f32 0.0, %v3986
        %v3988 = vpop.f32.mrf.mxu0
        %3989 = vmatprep.mubr.f32.mxu0 0.0
        %3990 = vmatmul.mubr.f32.gmra.mxu0 %v3896
        %v3991 = vpop.f32.mrf.mxu0
        %v3992 = vadd.f32 0.0, %v3991
        %v3993 = vpop.f32.mrf.mxu0
        %3994 = vmatprep.mubr.f32.mxu0 0.0
        %3995 = vmatmul.mubr.f32.gmra.mxu0 %v3899
        %v3996 = vpop.f32.mrf.mxu0
        %v3997 = vadd.f32 0.0, %v3996
        %v3998 = vpop.f32.mrf.mxu0
        %3999 = vmatprep.mubr.f32.mxu0 0.0
        %4000 = vmatmul.mubr.f32.gmra.mxu0 %v3902
        %v4001 = vpop.f32.mrf.mxu0
        %v4002 = vadd.f32 0.0, %v4001
        %v4003 = vpop.f32.mrf.mxu0
        %4004 = vmatprep.mubr.f32.mxu0 0.0
        %4005 = vmatmul.mubr.f32.gmra.mxu0 %v3905
        %v4006 = vpop.f32.mrf.mxu0
        %v4007 = vadd.f32 0.0, %v4006
        %v4008 = vpop.f32.mrf.mxu0
        %4009 = vmatprep.mubr.f32.mxu0 0.0
        %4010 = vmatmul.mubr.f32.gmra.mxu0 %v3908
        %v4011 = vpop.f32.mrf.mxu0
        %v4012 = vadd.f32 0.0, %v4011
        %v4013 = vpop.f32.mrf.mxu0
        %4014 = vdwg.mxu0
        %v4015 = vadd.f32 %v3839, %v3977
        %v4016 = vadd.f32 %v3844, %v3982
        %v4017 = vadd.f32 %v3849, %v3987
        %v4018 = vadd.f32 %v3854, %v3992
        %v4019 = vadd.f32 %v3859, %v3997
        %v4020 = vadd.f32 %v3864, %v4002
        %v4021 = vadd.f32 %v3869, %v4007
        %v4022 = vadd.f32 %v3874, %v4012
        %v4023 = vld [vmem:[%s11] sm:$0xff]
        %v4024 = vld [vmem:[%s11 + $0x8] sm:$0xff]
        %v4025 = vld [vmem:[%s11 + $0x10] sm:$0xff]
        %v4026 = vld [vmem:[%s11 + $0x18] sm:$0xff]
        %v4027 = vld [vmem:[%s11 + $0x20] sm:$0xff]
        %v4028 = vld [vmem:[%s11 + $0x28] sm:$0xff]
        %v4029 = vld [vmem:[%s11 + $0x30] sm:$0xff]
        %v4030 = vld [vmem:[%s11 + $0x38] sm:$0xff]
        %4032 = vset.pattern.permute.xlu0 8
        %4033 = vperm.xlu0 %4032, %v4023
        %v4034 = vpop.permute.xlu0 %4033
        %4037 = vset.pattern.permute.xlu0 8
        %4038 = vperm.xlu0 %4037, %v4024
        %v4039 = vpop.permute.xlu0 %4038
        %4042 = vset.pattern.permute.xlu0 8
        %4043 = vperm.xlu0 %4042, %v4025
        %v4044 = vpop.permute.xlu0 %4043
        %4047 = vset.pattern.permute.xlu0 8
        %4048 = vperm.xlu0 %4047, %v4026
        %v4049 = vpop.permute.xlu0 %4048
        %4052 = vset.pattern.permute.xlu0 8
        %4053 = vperm.xlu0 %4052, %v4027
        %v4054 = vpop.permute.xlu0 %4053
        %4057 = vset.pattern.permute.xlu0 8
        %4058 = vperm.xlu0 %4057, %v4028
        %v4059 = vpop.permute.xlu0 %4058
        %4062 = vset.pattern.permute.xlu0 8
        %4063 = vperm.xlu0 %4062, %v4029
        %v4064 = vpop.permute.xlu0 %4063
        %4067 = vset.pattern.permute.xlu0 8
        %4068 = vperm.xlu0 %4067, %v4030
        %v4069 = vpop.permute.xlu0 %4068
        %v4071 = vadd.f32 %v4015, %v4034
        %v4072 = vadd.f32 %v4016, %v4039
        %v4073 = vadd.f32 %v4017, %v4044
        %v4074 = vadd.f32 %v4018, %v4049
        %v4075 = vadd.f32 %v4019, %v4054
        %v4076 = vadd.f32 %v4020, %v4059
        %v4077 = vadd.f32 %v4021, %v4064
        %v4078 = vadd.f32 %v4022, %v4069
        %v4079 = vmax.f32 %v4071, 0.0
        %v4080 = vmax.f32 %v4072, 0.0
        %v4081 = vmax.f32 %v4073, 0.0
        %v4082 = vmax.f32 %v4074, 0.0
        %v4083 = vmax.f32 %v4075, 0.0
        %v4084 = vmax.f32 %v4076, 0.0
        %v4085 = vmax.f32 %v4077, 0.0
        %v4086 = vmax.f32 %v4078, 0.0
        %4087 = vrot.lane.b32.xlu0 %v4079, 4
        %v4088 = vpop.permute.xlu0 %4087
        %v4089 = vsel %vm3539, %v4088, %v4079
        %4090 = vrot.lane.b32.xlu0 %v4080, 4
        %v4091 = vpop.permute.xlu0 %4090
        %v4092 = vsel %vm3539, %v4091, %v4080
        %4093 = vrot.lane.b32.xlu0 %v4081, 4
        %v4094 = vpop.permute.xlu0 %4093
        %v4095 = vsel %vm3539, %v4094, %v4081
        %4096 = vrot.lane.b32.xlu0 %v4082, 4
        %v4097 = vpop.permute.xlu0 %4096
        %v4098 = vsel %vm3539, %v4097, %v4082
        %4099 = vrot.lane.b32.xlu0 %v4083, 4
        %v4100 = vpop.permute.xlu0 %4099
        %v4101 = vsel %vm3539, %v4100, %v4083
        %4102 = vrot.lane.b32.xlu0 %v4084, 4
        %v4103 = vpop.permute.xlu0 %4102
        %v4104 = vsel %vm3539, %v4103, %v4084
        %4105 = vrot.lane.b32.xlu0 %v4085, 4
        %v4106 = vpop.permute.xlu0 %4105
        %v4107 = vsel %vm3539, %v4106, %v4085
        %4108 = vrot.lane.b32.xlu0 %v4086, 4
        %v4109 = vpop.permute.xlu0 %4108
        %v4110 = vsel %vm3539, %v4109, %v4086
        %4111 = vrot.lane.b32.xlu0 %v4089, 4
        %v4112 = vpop.permute.xlu0 %4111
        %4113 = vrot.lane.b32.xlu0 %v4092, 4
        %v4114 = vpop.permute.xlu0 %4113
        %4115 = vrot.lane.b32.xlu0 %v4095, 4
        %v4116 = vpop.permute.xlu0 %4115
        %4117 = vrot.lane.b32.xlu0 %v4098, 4
        %v4118 = vpop.permute.xlu0 %4117
        %4119 = vrot.lane.b32.xlu0 %v4101, 4
        %v4120 = vpop.permute.xlu0 %4119
        %4121 = vrot.lane.b32.xlu0 %v4104, 4
        %v4122 = vpop.permute.xlu0 %4121
        %4123 = vrot.lane.b32.xlu0 %v4107, 4
        %v4124 = vpop.permute.xlu0 %4123
        %4125 = vrot.lane.b32.xlu0 %v4110, 4
        %v4126 = vpop.permute.xlu0 %4125
        %v4127 = vsel %vm3539, %v4112, %v4079
        %v4128 = vsel %vm3539, %v4114, %v4080
        %v4129 = vsel %vm3539, %v4116, %v4081
        %v4130 = vsel %vm3539, %v4118, %v4082
        %v4131 = vsel %vm3539, %v4120, %v4083
        %v4132 = vsel %vm3539, %v4122, %v4084
        %v4133 = vsel %vm3539, %v4124, %v4085
        %v4134 = vsel %vm3539, %v4126, %v4086
        %4143 = vrot.lane.b32.xlu0 %v4127, 125
        %v4144 = vpop.permute.xlu0 %4143
        %4145 = vrot.lane.b32.xlu0 %v4128, 125
        %v4146 = vpop.permute.xlu0 %4145
        %4147 = vrot.lane.b32.xlu0 %v4129, 125
        %v4148 = vpop.permute.xlu0 %4147
        %4149 = vrot.lane.b32.xlu0 %v4130, 125
        %v4150 = vpop.permute.xlu0 %4149
        %4151 = vrot.lane.b32.xlu0 %v4131, 125
        %v4152 = vpop.permute.xlu0 %4151
        %4153 = vrot.lane.b32.xlu0 %v4132, 125
        %v4154 = vpop.permute.xlu0 %4153
        %4155 = vrot.lane.b32.xlu0 %v4133, 125
        %v4156 = vpop.permute.xlu0 %4155
        %4157 = vrot.lane.b32.xlu0 %v4134, 125
        %v4158 = vpop.permute.xlu0 %4157
        %v4167 = vsel %vm636, 0.0, %v4144
        %v4168 = vsel %vm636, 0.0, %v4146
        %v4169 = vsel %vm636, 0.0, %v4148
        %v4170 = vsel %vm636, 0.0, %v4150
        %v4171 = vsel %vm636, 0.0, %v4152
        %v4172 = vsel %vm636, 0.0, %v4154
        %v4173 = vsel %vm636, 0.0, %v4156
        %v4174 = vsel %vm636, 0.0, %v4158
        %4175 = vrot.lane.b32.xlu0 %v4127, 127
        %v4176 = vpop.permute.xlu0 %4175
        %4177 = vrot.lane.b32.xlu0 %v4128, 127
        %v4178 = vpop.permute.xlu0 %4177
        %4179 = vrot.lane.b32.xlu0 %v4129, 127
        %v4180 = vpop.permute.xlu0 %4179
        %4181 = vrot.lane.b32.xlu0 %v4130, 127
        %v4182 = vpop.permute.xlu0 %4181
        %4183 = vrot.lane.b32.xlu0 %v4131, 127
        %v4184 = vpop.permute.xlu0 %4183
        %4185 = vrot.lane.b32.xlu0 %v4132, 127
        %v4186 = vpop.permute.xlu0 %4185
        %4187 = vrot.lane.b32.xlu0 %v4133, 127
        %v4188 = vpop.permute.xlu0 %4187
        %4189 = vrot.lane.b32.xlu0 %v4134, 127
        %v4190 = vpop.permute.xlu0 %4189
        %v4199 = vsel %vm3585, 0.0, %v4176
        %v4200 = vsel %vm3585, 0.0, %v4178
        %v4201 = vsel %vm3585, 0.0, %v4180
        %v4202 = vsel %vm3585, 0.0, %v4182
        %v4203 = vsel %vm3585, 0.0, %v4184
        %v4204 = vsel %vm3585, 0.0, %v4186
        %v4205 = vsel %vm3585, 0.0, %v4188
        %v4206 = vsel %vm3585, 0.0, %v4190
        %s4207 = scalar_lea.vmem %s10, 64
        %v4208 = vld [vmem:[%s4207] sm:$0xff]
        %v4209 = vld [vmem:[%s4207 + $0x8] sm:$0xff]
        %v4210 = vld [vmem:[%s4207 + $0x10] sm:$0xff]
        %v4211 = vld [vmem:[%s4207 + $0x18] sm:$0xff]
        %v4212 = vld [vmem:[%s4207 + $0x20] sm:$0xff]
        %v4213 = vld [vmem:[%s4207 + $0x28] sm:$0xff]
        %v4214 = vld [vmem:[%s4207 + $0x30] sm:$0xff]
        %v4215 = vld [vmem:[%s4207 + $0x38] sm:$0xff]
        %v4216 = vld [vmem:[%s10] sm:$0xff]
        %v4217 = vld [vmem:[%s10 + $0x8] sm:$0xff]
        %v4218 = vld [vmem:[%s10 + $0x10] sm:$0xff]
        %v4219 = vld [vmem:[%s10 + $0x18] sm:$0xff]
        %v4220 = vld [vmem:[%s10 + $0x20] sm:$0xff]
        %v4221 = vld [vmem:[%s10 + $0x28] sm:$0xff]
        %v4222 = vld [vmem:[%s10 + $0x30] sm:$0xff]
        %v4223 = vld [vmem:[%s10 + $0x38] sm:$0xff]
        %v4225 = vsel %vm880, %v4216, 0
        %v4228 = vsel %vm880, %v4217, 0
        %v4231 = vsel %vm880, %v4218, 0
        %v4234 = vsel %vm880, %v4219, 0
        %v4237 = vsel %vm880, %v4220, 0
        %v4240 = vsel %vm880, %v4221, 0
        %v4243 = vsel %vm880, %v4222, 0
        %v4246 = vsel %vm880, %v4223, 0
        %4248 = vmatprep.subr.mxu0 0.0
        %4249 = vmatpush1.msra.mxu0 0.0
        %4250 = vmatprep.subr.mxu0 0.0
        %4251 = vmatpush1.msra.mxu0 0.0
        %4252 = vmatprep.subr.mxu0 0.0
        %4253 = vmatpush1.msra.mxu0 0.0
        %4254 = vmatprep.subr.mxu0 0.0
        %4255 = vmatpush1.msra.mxu0 0.0
        %4256 = vmatprep.subr.mxu0 0.0
        %4257 = vmatpush1.msra.mxu0 0.0
        %4258 = vmatprep.subr.mxu0 0.0
        %4259 = vmatpush1.msra.mxu0 0.0
        %4260 = vmatprep.subr.mxu0 0.0
        %4261 = vmatpush1.msra.mxu0 0.0
        %4262 = vmatprep.subr.mxu0 0.0
        %4263 = vmatpush1.msra.mxu0 0.0
        %4264 = vmatprep.subr.mxu0 0.0
        %4265 = vmatpush1.msra.mxu0 %v4174
        %4266 = vmatprep.subr.mxu0 0.0
        %4267 = vmatpush1.msra.mxu0 %v4173
        %4268 = vmatprep.subr.mxu0 0.0
        %4269 = vmatpush1.msra.mxu0 %v4172
        %4270 = vmatprep.subr.mxu0 0.0
        %4271 = vmatpush1.msra.mxu0 %v4171
        %4272 = vmatprep.subr.mxu0 0.0
        %4273 = vmatpush1.msra.mxu0 %v4170
        %4274 = vmatprep.subr.mxu0 0.0
        %4275 = vmatpush1.msra.mxu0 %v4169
        %4276 = vmatprep.subr.mxu0 0.0
        %4277 = vmatpush1.msra.mxu0 %v4168
        %4278 = vmatprep.subr.mxu0 0.0
        %4279 = vmatpush1.msra.mxu0 %v4167
        %4280 = vmatprep.subr.mxu0 0.0
        %4281 = vmatpush2.msra.mxu0 0.0
        %4282 = vmatprep.subr.mxu0 0.0
        %4283 = vmatpush2.msra.mxu0 0.0
        %4284 = vmatprep.subr.mxu0 0.0
        %4285 = vmatpush2.msra.mxu0 0.0
        %4286 = vmatprep.subr.mxu0 0.0
        %4287 = vmatpush2.msra.mxu0 0.0
        %4288 = vmatprep.subr.mxu0 0.0
        %4289 = vmatpush2.msra.mxu0 0.0
        %4290 = vmatprep.subr.mxu0 0.0
        %4291 = vmatpush2.msra.mxu0 0.0
        %4292 = vmatprep.subr.mxu0 0.0
        %4293 = vmatpush2.msra.mxu0 0.0
        %4294 = vmatprep.subr.mxu0 0.0
        %4295 = vmatpush2.msra.mxu0 0.0
        %4296 = vmatprep.subr.mxu0 0.0
        %4297 = vmatpush2.msra.mxu0 0.0
        %4298 = vmatprep.subr.mxu0 0.0
        %4299 = vmatpush2.msra.mxu0 0.0
        %4300 = vmatprep.subr.mxu0 0.0
        %4301 = vmatpush2.msra.mxu0 0.0
        %4302 = vmatprep.subr.mxu0 0.0
        %4303 = vmatpush2.msra.mxu0 0.0
        %4304 = vmatprep.subr.mxu0 0.0
        %4305 = vmatpush2.msra.mxu0 0.0
        %4306 = vmatprep.subr.mxu0 0.0
        %4307 = vmatpush2.msra.mxu0 0.0
        %4308 = vmatprep.subr.mxu0 0.0
        %4309 = vmatpush2.msra.mxu0 0.0
        %4310 = vmatprep.subr.mxu0 0.0
        %4311 = vmatpush2.msra.mxu0 0.0
        %4312 = vmatprep.mubr.f32.mxu0 0.0
        %4313 = vmatmul.mubr.f32.gmra.mxu0 %v4225
        %v4314 = vpop.f32.mrf.mxu0
        %v4315 = vadd.f32 0.0, %v4314
        %v4316 = vpop.f32.mrf.mxu0
        %4317 = vmatprep.mubr.f32.mxu0 0.0
        %4318 = vmatmul.mubr.f32.gmra.mxu0 %v4228
        %v4319 = vpop.f32.mrf.mxu0
        %v4320 = vadd.f32 0.0, %v4319
        %v4321 = vpop.f32.mrf.mxu0
        %4322 = vmatprep.mubr.f32.mxu0 0.0
        %4323 = vmatmul.mubr.f32.gmra.mxu0 %v4231
        %v4324 = vpop.f32.mrf.mxu0
        %v4325 = vadd.f32 0.0, %v4324
        %v4326 = vpop.f32.mrf.mxu0
        %4327 = vmatprep.mubr.f32.mxu0 0.0
        %4328 = vmatmul.mubr.f32.gmra.mxu0 %v4234
        %v4329 = vpop.f32.mrf.mxu0
        %v4330 = vadd.f32 0.0, %v4329
        %v4331 = vpop.f32.mrf.mxu0
        %4332 = vmatprep.mubr.f32.mxu0 0.0
        %4333 = vmatmul.mubr.f32.gmra.mxu0 %v4237
        %v4334 = vpop.f32.mrf.mxu0
        %v4335 = vadd.f32 0.0, %v4334
        %v4336 = vpop.f32.mrf.mxu0
        %4337 = vmatprep.mubr.f32.mxu0 0.0
        %4338 = vmatmul.mubr.f32.gmra.mxu0 %v4240
        %v4339 = vpop.f32.mrf.mxu0
        %v4340 = vadd.f32 0.0, %v4339
        %v4341 = vpop.f32.mrf.mxu0
        %4342 = vmatprep.mubr.f32.mxu0 0.0
        %4343 = vmatmul.mubr.f32.gmra.mxu0 %v4243
        %v4344 = vpop.f32.mrf.mxu0
        %v4345 = vadd.f32 0.0, %v4344
        %v4346 = vpop.f32.mrf.mxu0
        %4347 = vmatprep.mubr.f32.mxu0 0.0
        %4348 = vmatmul.mubr.f32.gmra.mxu0 %v4246
        %v4349 = vpop.f32.mrf.mxu0
        %v4350 = vadd.f32 0.0, %v4349
        %v4351 = vpop.f32.mrf.mxu0
        %4352 = vdwg.mxu0
        %v4354 = vsel %vm880, %v4208, 0
        %v4357 = vsel %vm880, %v4209, 0
        %v4360 = vsel %vm880, %v4210, 0
        %v4363 = vsel %vm880, %v4211, 0
        %v4366 = vsel %vm880, %v4212, 0
        %v4369 = vsel %vm880, %v4213, 0
        %v4372 = vsel %vm880, %v4214, 0
        %v4375 = vsel %vm880, %v4215, 0
        %4377 = vmatprep.subr.mxu0 0.0
        %4378 = vmatpush1.msra.mxu0 0.0
        %4379 = vmatprep.subr.mxu0 0.0
        %4380 = vmatpush1.msra.mxu0 0.0
        %4381 = vmatprep.subr.mxu0 0.0
        %4382 = vmatpush1.msra.mxu0 0.0
        %4383 = vmatprep.subr.mxu0 0.0
        %4384 = vmatpush1.msra.mxu0 0.0
        %4385 = vmatprep.subr.mxu0 0.0
        %4386 = vmatpush1.msra.mxu0 0.0
        %4387 = vmatprep.subr.mxu0 0.0
        %4388 = vmatpush1.msra.mxu0 0.0
        %4389 = vmatprep.subr.mxu0 0.0
        %4390 = vmatpush1.msra.mxu0 0.0
        %4391 = vmatprep.subr.mxu0 0.0
        %4392 = vmatpush1.msra.mxu0 0.0
        %4393 = vmatprep.subr.mxu0 0.0
        %4394 = vmatpush1.msra.mxu0 %v4086
        %4395 = vmatprep.subr.mxu0 0.0
        %4396 = vmatpush1.msra.mxu0 %v4085
        %4397 = vmatprep.subr.mxu0 0.0
        %4398 = vmatpush1.msra.mxu0 %v4084
        %4399 = vmatprep.subr.mxu0 0.0
        %4400 = vmatpush1.msra.mxu0 %v4083
        %4401 = vmatprep.subr.mxu0 0.0
        %4402 = vmatpush1.msra.mxu0 %v4082
        %4403 = vmatprep.subr.mxu0 0.0
        %4404 = vmatpush1.msra.mxu0 %v4081
        %4405 = vmatprep.subr.mxu0 0.0
        %4406 = vmatpush1.msra.mxu0 %v4080
        %4407 = vmatprep.subr.mxu0 0.0
        %4408 = vmatpush1.msra.mxu0 %v4079
        %4409 = vmatprep.subr.mxu0 0.0
        %4410 = vmatpush2.msra.mxu0 0.0
        %4411 = vmatprep.subr.mxu0 0.0
        %4412 = vmatpush2.msra.mxu0 0.0
        %4413 = vmatprep.subr.mxu0 0.0
        %4414 = vmatpush2.msra.mxu0 0.0
        %4415 = vmatprep.subr.mxu0 0.0
        %4416 = vmatpush2.msra.mxu0 0.0
        %4417 = vmatprep.subr.mxu0 0.0
        %4418 = vmatpush2.msra.mxu0 0.0
        %4419 = vmatprep.subr.mxu0 0.0
        %4420 = vmatpush2.msra.mxu0 0.0
        %4421 = vmatprep.subr.mxu0 0.0
        %4422 = vmatpush2.msra.mxu0 0.0
        %4423 = vmatprep.subr.mxu0 0.0
        %4424 = vmatpush2.msra.mxu0 0.0
        %4425 = vmatprep.subr.mxu0 0.0
        %4426 = vmatpush2.msra.mxu0 0.0
        %4427 = vmatprep.subr.mxu0 0.0
        %4428 = vmatpush2.msra.mxu0 0.0
        %4429 = vmatprep.subr.mxu0 0.0
        %4430 = vmatpush2.msra.mxu0 0.0
        %4431 = vmatprep.subr.mxu0 0.0
        %4432 = vmatpush2.msra.mxu0 0.0
        %4433 = vmatprep.subr.mxu0 0.0
        %4434 = vmatpush2.msra.mxu0 0.0
        %4435 = vmatprep.subr.mxu0 0.0
        %4436 = vmatpush2.msra.mxu0 0.0
        %4437 = vmatprep.subr.mxu0 0.0
        %4438 = vmatpush2.msra.mxu0 0.0
        %4439 = vmatprep.subr.mxu0 0.0
        %4440 = vmatpush2.msra.mxu0 0.0
        %4441 = vmatprep.mubr.f32.mxu0 0.0
        %4442 = vmatmul.mubr.f32.gmra.mxu0 %v4354
        %v4443 = vpop.f32.mrf.mxu0
        %v4444 = vadd.f32 %v4315, %v4443
        %v4445 = vpop.f32.mrf.mxu0
        %4446 = vmatprep.mubr.f32.mxu0 0.0
        %4447 = vmatmul.mubr.f32.gmra.mxu0 %v4357
        %v4448 = vpop.f32.mrf.mxu0
        %v4449 = vadd.f32 %v4320, %v4448
        %v4450 = vpop.f32.mrf.mxu0
        %4451 = vmatprep.mubr.f32.mxu0 0.0
        %4452 = vmatmul.mubr.f32.gmra.mxu0 %v4360
        %v4453 = vpop.f32.mrf.mxu0
        %v4454 = vadd.f32 %v4325, %v4453
        %v4455 = vpop.f32.mrf.mxu0
        %4456 = vmatprep.mubr.f32.mxu0 0.0
        %4457 = vmatmul.mubr.f32.gmra.mxu0 %v4363
        %v4458 = vpop.f32.mrf.mxu0
        %v4459 = vadd.f32 %v4330, %v4458
        %v4460 = vpop.f32.mrf.mxu0
        %4461 = vmatprep.mubr.f32.mxu0 0.0
        %4462 = vmatmul.mubr.f32.gmra.mxu0 %v4366
        %v4463 = vpop.f32.mrf.mxu0
        %v4464 = vadd.f32 %v4335, %v4463
        %v4465 = vpop.f32.mrf.mxu0
        %4466 = vmatprep.mubr.f32.mxu0 0.0
        %4467 = vmatmul.mubr.f32.gmra.mxu0 %v4369
        %v4468 = vpop.f32.mrf.mxu0
        %v4469 = vadd.f32 %v4340, %v4468
        %v4470 = vpop.f32.mrf.mxu0
        %4471 = vmatprep.mubr.f32.mxu0 0.0
        %4472 = vmatmul.mubr.f32.gmra.mxu0 %v4372
        %v4473 = vpop.f32.mrf.mxu0
        %v4474 = vadd.f32 %v4345, %v4473
        %v4475 = vpop.f32.mrf.mxu0
        %4476 = vmatprep.mubr.f32.mxu0 0.0
        %4477 = vmatmul.mubr.f32.gmra.mxu0 %v4375
        %v4478 = vpop.f32.mrf.mxu0
        %v4479 = vadd.f32 %v4350, %v4478
        %v4480 = vpop.f32.mrf.mxu0
        %4481 = vdwg.mxu0
        %s4482 = scalar_lea.vmem %s10, 128
        %v4483 = vld [vmem:[%s4482] sm:$0xff]
        %v4484 = vld [vmem:[%s4482 + $0x8] sm:$0xff]
        %v4485 = vld [vmem:[%s4482 + $0x10] sm:$0xff]
        %v4486 = vld [vmem:[%s4482 + $0x18] sm:$0xff]
        %v4487 = vld [vmem:[%s4482 + $0x20] sm:$0xff]
        %v4488 = vld [vmem:[%s4482 + $0x28] sm:$0xff]
        %v4489 = vld [vmem:[%s4482 + $0x30] sm:$0xff]
        %v4490 = vld [vmem:[%s4482 + $0x38] sm:$0xff]
        %v4492 = vsel %vm880, %v4483, 0
        %v4495 = vsel %vm880, %v4484, 0
        %v4498 = vsel %vm880, %v4485, 0
        %v4501 = vsel %vm880, %v4486, 0
        %v4504 = vsel %vm880, %v4487, 0
        %v4507 = vsel %vm880, %v4488, 0
        %v4510 = vsel %vm880, %v4489, 0
        %v4513 = vsel %vm880, %v4490, 0
        %4515 = vmatprep.subr.mxu0 0.0
        %4516 = vmatpush1.msra.mxu0 0.0
        %4517 = vmatprep.subr.mxu0 0.0
        %4518 = vmatpush1.msra.mxu0 0.0
        %4519 = vmatprep.subr.mxu0 0.0
        %4520 = vmatpush1.msra.mxu0 0.0
        %4521 = vmatprep.subr.mxu0 0.0
        %4522 = vmatpush1.msra.mxu0 0.0
        %4523 = vmatprep.subr.mxu0 0.0
        %4524 = vmatpush1.msra.mxu0 0.0
        %4525 = vmatprep.subr.mxu0 0.0
        %4526 = vmatpush1.msra.mxu0 0.0
        %4527 = vmatprep.subr.mxu0 0.0
        %4528 = vmatpush1.msra.mxu0 0.0
        %4529 = vmatprep.subr.mxu0 0.0
        %4530 = vmatpush1.msra.mxu0 0.0
        %4531 = vmatprep.subr.mxu0 0.0
        %4532 = vmatpush1.msra.mxu0 %v4206
        %4533 = vmatprep.subr.mxu0 0.0
        %4534 = vmatpush1.msra.mxu0 %v4205
        %4535 = vmatprep.subr.mxu0 0.0
        %4536 = vmatpush1.msra.mxu0 %v4204
        %4537 = vmatprep.subr.mxu0 0.0
        %4538 = vmatpush1.msra.mxu0 %v4203
        %4539 = vmatprep.subr.mxu0 0.0
        %4540 = vmatpush1.msra.mxu0 %v4202
        %4541 = vmatprep.subr.mxu0 0.0
        %4542 = vmatpush1.msra.mxu0 %v4201
        %4543 = vmatprep.subr.mxu0 0.0
        %4544 = vmatpush1.msra.mxu0 %v4200
        %4545 = vmatprep.subr.mxu0 0.0
        %4546 = vmatpush1.msra.mxu0 %v4199
        %4547 = vmatprep.subr.mxu0 0.0
        %4548 = vmatpush2.msra.mxu0 0.0
        %4549 = vmatprep.subr.mxu0 0.0
        %4550 = vmatpush2.msra.mxu0 0.0
        %4551 = vmatprep.subr.mxu0 0.0
        %4552 = vmatpush2.msra.mxu0 0.0
        %4553 = vmatprep.subr.mxu0 0.0
        %4554 = vmatpush2.msra.mxu0 0.0
        %4555 = vmatprep.subr.mxu0 0.0
        %4556 = vmatpush2.msra.mxu0 0.0
        %4557 = vmatprep.subr.mxu0 0.0
        %4558 = vmatpush2.msra.mxu0 0.0
        %4559 = vmatprep.subr.mxu0 0.0
        %4560 = vmatpush2.msra.mxu0 0.0
        %4561 = vmatprep.subr.mxu0 0.0
        %4562 = vmatpush2.msra.mxu0 0.0
        %4563 = vmatprep.subr.mxu0 0.0
        %4564 = vmatpush2.msra.mxu0 0.0
        %4565 = vmatprep.subr.mxu0 0.0
        %4566 = vmatpush2.msra.mxu0 0.0
        %4567 = vmatprep.subr.mxu0 0.0
        %4568 = vmatpush2.msra.mxu0 0.0
        %4569 = vmatprep.subr.mxu0 0.0
        %4570 = vmatpush2.msra.mxu0 0.0
        %4571 = vmatprep.subr.mxu0 0.0
        %4572 = vmatpush2.msra.mxu0 0.0
        %4573 = vmatprep.subr.mxu0 0.0
        %4574 = vmatpush2.msra.mxu0 0.0
        %4575 = vmatprep.subr.mxu0 0.0
        %4576 = vmatpush2.msra.mxu0 0.0
        %4577 = vmatprep.subr.mxu0 0.0
        %4578 = vmatpush2.msra.mxu0 0.0
        %4579 = vmatprep.mubr.f32.mxu0 0.0
        %4580 = vmatmul.mubr.f32.gmra.mxu0 %v4492
        %v4581 = vpop.f32.mrf.mxu0
        %v4582 = vadd.f32 0.0, %v4581
        %v4583 = vpop.f32.mrf.mxu0
        %4584 = vmatprep.mubr.f32.mxu0 0.0
        %4585 = vmatmul.mubr.f32.gmra.mxu0 %v4495
        %v4586 = vpop.f32.mrf.mxu0
        %v4587 = vadd.f32 0.0, %v4586
        %v4588 = vpop.f32.mrf.mxu0
        %4589 = vmatprep.mubr.f32.mxu0 0.0
        %4590 = vmatmul.mubr.f32.gmra.mxu0 %v4498
        %v4591 = vpop.f32.mrf.mxu0
        %v4592 = vadd.f32 0.0, %v4591
        %v4593 = vpop.f32.mrf.mxu0
        %4594 = vmatprep.mubr.f32.mxu0 0.0
        %4595 = vmatmul.mubr.f32.gmra.mxu0 %v4501
        %v4596 = vpop.f32.mrf.mxu0
        %v4597 = vadd.f32 0.0, %v4596
        %v4598 = vpop.f32.mrf.mxu0
        %4599 = vmatprep.mubr.f32.mxu0 0.0
        %4600 = vmatmul.mubr.f32.gmra.mxu0 %v4504
        %v4601 = vpop.f32.mrf.mxu0
        %v4602 = vadd.f32 0.0, %v4601
        %v4603 = vpop.f32.mrf.mxu0
        %4604 = vmatprep.mubr.f32.mxu0 0.0
        %4605 = vmatmul.mubr.f32.gmra.mxu0 %v4507
        %v4606 = vpop.f32.mrf.mxu0
        %v4607 = vadd.f32 0.0, %v4606
        %v4608 = vpop.f32.mrf.mxu0
        %4609 = vmatprep.mubr.f32.mxu0 0.0
        %4610 = vmatmul.mubr.f32.gmra.mxu0 %v4510
        %v4611 = vpop.f32.mrf.mxu0
        %v4612 = vadd.f32 0.0, %v4611
        %v4613 = vpop.f32.mrf.mxu0
        %4614 = vmatprep.mubr.f32.mxu0 0.0
        %4615 = vmatmul.mubr.f32.gmra.mxu0 %v4513
        %v4616 = vpop.f32.mrf.mxu0
        %v4617 = vadd.f32 0.0, %v4616
        %v4618 = vpop.f32.mrf.mxu0
        %4619 = vdwg.mxu0
        %v4620 = vadd.f32 %v4444, %v4582
        %v4621 = vadd.f32 %v4449, %v4587
        %v4622 = vadd.f32 %v4454, %v4592
        %v4623 = vadd.f32 %v4459, %v4597
        %v4624 = vadd.f32 %v4464, %v4602
        %v4625 = vadd.f32 %v4469, %v4607
        %v4626 = vadd.f32 %v4474, %v4612
        %v4627 = vadd.f32 %v4479, %v4617
        %4628 = vset.pattern.permute.xlu0 9
        %4629 = vperm.xlu0 %4628, %v4023
        %v4630 = vpop.permute.xlu0 %4629
        %4632 = vset.pattern.permute.xlu0 9
        %4633 = vperm.xlu0 %4632, %v4024
        %v4634 = vpop.permute.xlu0 %4633
        %4636 = vset.pattern.permute.xlu0 9
        %4637 = vperm.xlu0 %4636, %v4025
        %v4638 = vpop.permute.xlu0 %4637
        %4640 = vset.pattern.permute.xlu0 9
        %4641 = vperm.xlu0 %4640, %v4026
        %v4642 = vpop.permute.xlu0 %4641
        %4644 = vset.pattern.permute.xlu0 9
        %4645 = vperm.xlu0 %4644, %v4027
        %v4646 = vpop.permute.xlu0 %4645
        %4648 = vset.pattern.permute.xlu0 9
        %4649 = vperm.xlu0 %4648, %v4028
        %v4650 = vpop.permute.xlu0 %4649
        %4652 = vset.pattern.permute.xlu0 9
        %4653 = vperm.xlu0 %4652, %v4029
        %v4654 = vpop.permute.xlu0 %4653
        %4656 = vset.pattern.permute.xlu0 9
        %4657 = vperm.xlu0 %4656, %v4030
        %v4658 = vpop.permute.xlu0 %4657
        %v4660 = vadd.f32 %v4620, %v4630
        %v4661 = vadd.f32 %v4621, %v4634
        %v4662 = vadd.f32 %v4622, %v4638
        %v4663 = vadd.f32 %v4623, %v4642
        %v4664 = vadd.f32 %v4624, %v4646
        %v4665 = vadd.f32 %v4625, %v4650
        %v4666 = vadd.f32 %v4626, %v4654
        %v4667 = vadd.f32 %v4627, %v4658
        %v4668 = vmax.f32 %v4660, 0.0
        %v4669 = vmax.f32 %v4661, 0.0
        %v4670 = vmax.f32 %v4662, 0.0
        %v4671 = vmax.f32 %v4663, 0.0
        %v4672 = vmax.f32 %v4664, 0.0
        %v4673 = vmax.f32 %v4665, 0.0
        %v4674 = vmax.f32 %v4666, 0.0
        %v4675 = vmax.f32 %v4667, 0.0
        %vm4676 = vcmask 31744
        %4677 = vst.msk [vmem:[%s560] sm:$0xff] %vm4676, %v4668
        %4678 = vst.msk [vmem:[%s560 + $0x8] sm:$0xff] %vm4676, %v4669
        %4679 = vst.msk [vmem:[%s560 + $0x10] sm:$0xff] %vm4676, %v4670
        %4680 = vst.msk [vmem:[%s560 + $0x18] sm:$0xff] %vm4676, %v4671
        %4681 = vst.msk [vmem:[%s560 + $0x20] sm:$0xff] %vm4676, %v4672
        %4682 = vst.msk [vmem:[%s560 + $0x28] sm:$0xff] %vm4676, %v4673
        %4683 = vst.msk [vmem:[%s560 + $0x30] sm:$0xff] %vm4676, %v4674
        %4684 = vst.msk [vmem:[%s560 + $0x38] sm:$0xff] %vm4676, %v4675
        %s4685 = sand.u32 %s299, 1
        %s4686 = scalar_lea.sflag [#allocation3], %s4685
        %s4687 = sand.u32 %s299, 1
        %s4688 = smul.addr %s4687, 8
        %s4689 = scalar_lea.vmem [#allocation2], %s4688
        %s4690 = sand.u32 %s325, 1
        %s4691 = scalar_lea.sflag [#allocation5], %s4690
        %s4692 = sand.u32 %s325, 1
        %s4693 = smul.addr %s4692, 16
        %s4694 = scalar_lea.vmem [#allocation4], %s4693
        %p4695 = scmp.lt.s32.totalorder %s34, 1
        %s4696 = scalar_select %p4695, %s34, 1
        %s4697 = smul.addr %s4696, 4
        %s4698 = smul.addr %s4697, 8
        %s4699 = scalar_lea.vmem %s14, %s4698
        %p4700 = scmp.lt.s32.totalorder %s34, 1
        %s4701 = scalar_select %p4700, %s34, 1
        %s4702 = smul.addr %s4701, 4
        %s4703 = smul.addr %s4702, 8
        %s4704 = scalar_lea.vmem %s15, %s4703
        %p4705 = scmp.lt.s32.totalorder %s34, 1
        %s4706 = scalar_select %p4705, %s34, 1
        %s4707 = smul.addr %s4706, 8
        %s4708 = smul.addr %s4707, 8
        %s4709 = scalar_lea.vmem %s16, %s4708
        // Predicated region
        $region69: #{encoder_forward.1} parent=67 // pred_check
          %p4710 = pneg %p309
        $region70: #{encoder_forward.1} parent=67 // pred_check_branch
          %4712 = sbr.rel (%p4710) target = $region72
        $region71: #{encoder_forward.1} parent=67 // pred_region
          %s4714 = ssub.s32 128, 128
          %4715 = vsyncadd %s4686, %s4714
          %s4716 = smul.addr %s34, 128
          %s4717 = scalar_lea.hbm %s12, %s4716
          %s4719 = sshll.u32 %s4689, 4
          %s4720 = int_to_ptr.vmem [resolvable:$true] %s4719
          %4722 = dma.vmem_to_hbm [thread:$0]  %s4720, 128, %s4717, %s4686
        $region72: #{encoder_forward.1} parent=67 // pred_fallthru
          _
        // Predicated region
        $region73: #{encoder_forward.1} parent=67 // pred_check
          %p4723 = pneg %p335
        $region74: #{encoder_forward.1} parent=67 // pred_check_branch
          %4725 = sbr.rel (%p4723) target = $region76
        $region75: #{encoder_forward.1} parent=67 // pred_region
          %s4727 = ssub.s32 256, 256
          %4728 = vsyncadd %s4691, %s4727
          %s4729 = smul.addr %s34, 2
          %s4730 = smul.addr %s4729, 128
          %s4731 = scalar_lea.hbm %s13, %s4730
          %s4732 = sshll.u32 %s4694, 4
          %s4733 = int_to_ptr.vmem [resolvable:$true] %s4732
          %4738 = dma.vmem_to_hbm [thread:$0]  %s4733, 256, %s4731, %s4691, 128, 128, 8
        $region76: #{encoder_forward.1} parent=67 // pred_fallthru
          _
        // Predicated region
        $region77: #{encoder_forward.1} parent=67 // pred_check
          %p4739 = pneg %p361
        $region78: #{encoder_forward.1} parent=67 // pred_check_branch
          %4741 = sbr.rel (%p4739) target = $region80
        $region79: #{encoder_forward.1} parent=67 // pred_region
          _
        $region80: #{encoder_forward.1} parent=67 // pred_fallthru
          _
        // Predicated region
        $region81: #{encoder_forward.1} parent=67 // pred_check
          %p4742 = pneg %p387
        $region82: #{encoder_forward.1} parent=67 // pred_check_branch
          %4744 = sbr.rel (%p4742) target = $region84
        $region83: #{encoder_forward.1} parent=67 // pred_region
          _
        $region84: #{encoder_forward.1} parent=67 // pred_fallthru
          _
        // Predicated region
        $region85: #{encoder_forward.1} parent=67 // pred_check
          %p4745 = pneg %p413
        $region86: #{encoder_forward.1} parent=67 // pred_check_branch
          %4747 = sbr.rel (%p4745) target = $region88
        $region87: #{encoder_forward.1} parent=67 // pred_region
          _
        $region88: #{encoder_forward.1} parent=67 // pred_fallthru
          _
      $region68: #{encoder_forward.1} parent=5 // pred_fallthru
        _
      %p4748 = scmp.le.s32.totalorder 2, %s29
      // Predicated region
      $region89: #{encoder_forward.1} parent=5 // pred_check
        %p4749 = pneg %p4748
      $region90: #{encoder_forward.1} parent=5 // pred_check_branch
        %4751 = sbr.rel (%p4749) target = $region92
      $region91: #{encoder_forward.1} parent=5 // pred_region
        %s4752 = ssub.s32 %s29, 2
        // Predicated region
        $region93: #{encoder_forward.1} parent=91 // pred_check
          %p4753 = pneg %p315
        $region94: #{encoder_forward.1} parent=91 // pred_check_branch
          %4755 = sbr.rel (%p4753) target = $region96
        $region95: #{encoder_forward.1} parent=91 // pred_region
          %s4756 = sand.u32 %s300, 1
          %s4757 = scalar_lea.sflag [#allocation3], %s4756
          %s4758 = sand.u32 %s300, 1
          %s4759 = smul.addr %s4758, 8
          %s4760 = scalar_lea.vmem [#allocation2], %s4759
          %4761 = dma.done %s4757, 128
        $region96: #{encoder_forward.1} parent=91 // pred_fallthru
          _
        // Predicated region
        $region97: #{encoder_forward.1} parent=91 // pred_check
          %p4762 = pneg %p341
        $region98: #{encoder_forward.1} parent=91 // pred_check_branch
          %4764 = sbr.rel (%p4762) target = $region100
        $region99: #{encoder_forward.1} parent=91 // pred_region
          %s4765 = sand.u32 %s326, 1
          %s4766 = scalar_lea.sflag [#allocation5], %s4765
          %s4767 = sand.u32 %s326, 1
          %s4768 = smul.addr %s4767, 16
          %s4769 = scalar_lea.vmem [#allocation4], %s4768
          %4770 = dma.done %s4766, 256
        $region100: #{encoder_forward.1} parent=91 // pred_fallthru
          _
        // Predicated region
        $region101: #{encoder_forward.1} parent=91 // pred_check
          %p4771 = pneg %p367
        $region102: #{encoder_forward.1} parent=91 // pred_check_branch
          %4773 = sbr.rel (%p4771) target = $region104
        $region103: #{encoder_forward.1} parent=91 // pred_region
          %p4774 = scmp.lt.s32.totalorder %s35, 1
          %s4775 = scalar_select %p4774, %s35, 1
          %s4776 = smul.addr %s4775, 4
          %s4777 = smul.addr %s4776, 8
          %s4778 = scalar_lea.vmem %s14, %s4777
        $region104: #{encoder_forward.1} parent=91 // pred_fallthru
          _
        // Predicated region
        $region105: #{encoder_forward.1} parent=91 // pred_check
          %p4779 = pneg %p393
        $region106: #{encoder_forward.1} parent=91 // pred_check_branch
          %4781 = sbr.rel (%p4779) target = $region108
        $region107: #{encoder_forward.1} parent=91 // pred_region
          %p4782 = scmp.lt.s32.totalorder %s35, 1
          %s4783 = scalar_select %p4782, %s35, 1
          %s4784 = smul.addr %s4783, 4
          %s4785 = smul.addr %s4784, 8
          %s4786 = scalar_lea.vmem %s15, %s4785
        $region108: #{encoder_forward.1} parent=91 // pred_fallthru
          _
        // Predicated region
        $region109: #{encoder_forward.1} parent=91 // pred_check
          %p4787 = pneg %p419
        $region110: #{encoder_forward.1} parent=91 // pred_check_branch
          %4789 = sbr.rel (%p4787) target = $region112
        $region111: #{encoder_forward.1} parent=91 // pred_region
          %p4790 = scmp.lt.s32.totalorder %s35, 1
          %s4791 = scalar_select %p4790, %s35, 1
          %s4792 = smul.addr %s4791, 8
          %s4793 = smul.addr %s4792, 8
          %s4794 = scalar_lea.vmem %s16, %s4793
        $region112: #{encoder_forward.1} parent=91 // pred_fallthru
          _
      $region92: #{encoder_forward.1} parent=5 // pred_fallthru
        _
    $region6: #{encoder_forward.1} parent=1 // loop_footer
      %s33 = sadd.s32 1, %s29
    $region7: #{encoder_forward.1} parent=1 // loop_footer_branch
      %28 = sbr.rel target = $region3
    $region8: #{encoder_forward.1} parent=1 // loop_exit
      _
    %4795 = vsyncpa [#allocation3], 1
    %s4796 = scalar_lea.sflag [#allocation3], 1
    %4797 = vsyncpa %s4796, 1
    %4798 = vsyncpa [#allocation5], 1
    %s4799 = scalar_lea.sflag [#allocation5], 1
    %4800 = vsyncpa %s4799, 1

</llo_original>
